<compile_context>
chip_gen: v7x
topology: tpu7x:2x2x1
jax: 0.10.0
libtpu: 0.0.40
codegen_flags: <defaults>
</compile_context>

<pallas_src>
import functools

import jax
import jax.numpy as jnp
from jax import lax
from jax.experimental import pallas as pl
from jax.experimental.pallas import tpu as pltpu

_PAD = 8  # sublane padding on each end of the flat h1 scratch (absorbs dx=+-1 shifts)


def _bottleneck_kernel(x_ref, xt_ref, xb_ref,
                       w1_ref, s1_ref, b1_ref,
                       w2_ref, s2_ref, b2_ref,
                       w3_ref, s3_ref, b3_ref,
                       o_ref, h1_ref, *, W, tile_h):
    """One (batch, row-tile) per grid step.  All convs + BN + ReLU + residual fused."""
    planes = w1_ref.shape[1]
    cout = w3_ref.shape[1]
    C = x_ref.shape[-1]
    hw = tile_h * W
    cdt = w1_ref.dtype  # MXU operand dtype (bf16 in perf mode, f32 for strict check)

    i = pl.program_id(1)
    n_tiles = pl.num_programs(1)

    def conv1(x2d):  # (rows, C) f32 -> (rows, planes) f32   (1x1 conv + bn1 + relu)
        h = jnp.dot(x2d.astype(cdt), w1_ref[...], preferred_element_type=jnp.float32)
        return jnp.maximum(h * s1_ref[...] + b1_ref[...], 0.0)

    # ---- conv1 + bn1 + relu on the main tile and the two halo rows -------------
    x_main = x_ref[0].astype(jnp.float32).reshape(hw, C)          # (hw, C)
    h1_main = conv1(x_main)                                       # (hw, planes)

    x_top = xt_ref[0, 0].astype(jnp.float32)                      # (W, C)
    x_bot = xb_ref[0, 0].astype(jnp.float32)
    # conv2's zero padding applies to its *input* h1, so out-of-image halo rows are 0.
    h1_top = jnp.where(i > 0, conv1(x_top), 0.0)                  # (W, planes)
    h1_bot = jnp.where(i < n_tiles - 1, conv1(x_bot), 0.0)

    # Stage h1 (+1-row halo on each side) in a flat VMEM scratch:
    #   scratch[_PAD + er*W + c] = h1 at extended row er (0=top halo .. tile_h+1=bottom halo)
    h1_ref[_PAD:_PAD + W, :] = h1_top
    h1_ref[_PAD + W:_PAD + W + hw, :] = h1_main
    h1_ref[_PAD + (tile_h + 1) * W:_PAD + (tile_h + 2) * W, :] = h1_bot

    # ---- conv2 (3x3, stride=1, pad=1) as 9 shifted matmuls + bn2 + relu ---------
    # Channel-invariant column masks, only needed for dx = +-1.
    col = lax.broadcasted_iota(jnp.int32, (hw, 1), 0) % W
    mask_l = col >= 1            # dx == -1: column c-1 valid
    mask_r = col <= (W - 2)      # dx == +1: column c+1 valid

    acc = jnp.zeros((hw, planes), jnp.float32)
    for dy in (-1, 0, 1):
        for dx in (-1, 0, 1):
            start = _PAD + (1 + dy) * W + dx          # static slice start
            patch = h1_ref[start:start + hw, :]       # (hw, planes) f32
            if dx == -1:
                patch = jnp.where(mask_l, patch, 0.0)
            elif dx == 1:
                patch = jnp.where(mask_r, patch, 0.0)
            acc = acc + jnp.dot(patch.astype(cdt), w2_ref[dy + 1, dx + 1],
                                preferred_element_type=jnp.float32)
    h2 = jnp.maximum(acc * s2_ref[...] + b2_ref[...], 0.0)        # (hw, planes)

    # ---- conv3 (1x1) + bn3, identity residual, relu -----------------------------
    h3 = jnp.dot(h2.astype(cdt), w3_ref[...], preferred_element_type=jnp.float32)
    h3 = h3 * s3_ref[...] + b3_ref[...]                           # (hw, cout)
    out = jnp.maximum(h3 + x_main, 0.0)                           # C == cout (asserted)
    o_ref[0] = out.reshape(tile_h, W, cout).astype(o_ref.dtype)


def _choose_tile_h(H, W, C, cout, planes, budget_bytes=8 * 1024 * 1024):
    """Largest row-tile that divides H and keeps the f32 working set under budget."""
    best = 1
    for th in range(1, H + 1):
        if H % th:
            continue
        hw = th * W
        est = 4 * (2 * hw * C                    # x block (double-buffered)
                   + 2 * hw * cout               # out block (double-buffered)
                   + (hw + 2 * W + 2 * _PAD) * planes   # h1 scratch
                   + hw * (3 * planes + cout))   # acc / patch / h2 / h3 temporaries
        if est <= budget_bytes:
            best = th
    return best


def bottleneck_forward_nhwc(x_nhwc, w1, s1, b1, w2, s2, b2, w3, s3, b3,
                            *, tile_h=None, compute_dtype=jnp.bfloat16,
                            vmem_limit_bytes=48 * 1024 * 1024):
    N, H, W, C = x_nhwc.shape
    planes = w1.shape[1]
    cout = w3.shape[1]
    assert C == cout, "identity residual requires inplanes == planes * 4"
    if tile_h is None:
        tile_h = _choose_tile_h(H, W, C, cout, planes)
    assert H % tile_h == 0, "tile_h must divide H"
    n_tiles = H // tile_h

    # MXU operands in compute_dtype (bf16 on v5e/v6e/v7x halves weight DMA/VMEM and
    # doubles MXU throughput); BN scale/bias stay f32.
    w1c = w1.astype(compute_dtype)
    w2c = w2.astype(compute_dtype)
    w3c = w3.astype(compute_dtype)

    kernel = functools.partial(_bottleneck_kernel, W=W, tile_h=tile_h)

    def _rows_main(n, i):
        return (n, i, 0, 0)

    def _rows_top(n, i):   # row above the tile, clamped (zeroed in-kernel when i == 0)
        return (n, jnp.maximum(i * tile_h - 1, 0), 0, 0)

    def _rows_bot(n, i):   # row below the tile, clamped (zeroed in-kernel when last)
        return (n, jnp.minimum((i + 1) * tile_h, H - 1), 0, 0)

    def _w2d(n, i):
        return (0, 0)

    def _w4d(n, i):
        return (0, 0, 0, 0)

    out = pl.pallas_call(
        kernel,
        out_shape=jax.ShapeDtypeStruct((N, H, W, cout), x_nhwc.dtype),
        grid_spec=pltpu.PrefetchScalarGridSpec(
            num_scalar_prefetch=0,
            grid=(N, n_tiles),
            in_specs=[
                pl.BlockSpec((1, tile_h, W, C), _rows_main),   # main x tile
                pl.BlockSpec((1, 1, W, C), _rows_top),         # top halo row
                pl.BlockSpec((1, 1, W, C), _rows_bot),         # bottom halo row
                pl.BlockSpec(w1c.shape, _w2d),
                pl.BlockSpec(s1.shape, _w2d),
                pl.BlockSpec(b1.shape, _w2d),
                pl.BlockSpec(w2c.shape, _w4d),
                pl.BlockSpec(s2.shape, _w2d),
                pl.BlockSpec(b2.shape, _w2d),
                pl.BlockSpec(w3c.shape, _w2d),
                pl.BlockSpec(s3.shape, _w2d),
                pl.BlockSpec(b3.shape, _w2d),
            ],
            out_specs=pl.BlockSpec((1, tile_h, W, cout), _rows_main),
            scratch_shapes=[
                pltpu.VMEM(((tile_h + 2) * W + 2 * _PAD, planes), jnp.float32),
            ],
        ),
        compiler_params=pltpu.CompilerParams(
            dimension_semantics=("parallel", "parallel"),
            vmem_limit_bytes=vmem_limit_bytes,
        ),
    )(x_nhwc, x_nhwc, x_nhwc, w1c, s1, b1, w2c, s2, b2, w3c, s3, b3)
    return out


def bottleneck_forward(x_nchw, *params, **kwargs):
    """PyTorch-layout wrapper (NCHW).  If the surrounding graph is already NHWC,
    call bottleneck_forward_nhwc directly and skip these two HBM transpose passes."""
    x = jnp.transpose(x_nchw, (0, 2, 3, 1))
    out = bottleneck_forward_nhwc(x, *params, **kwargs)
    return jnp.transpose(out, (0, 3, 1, 2))


def make_params(key, inplanes, planes):
    """Deterministic synthetic params. BN folded into (scale, bias)."""
    expansion = 4
    keys = jax.random.split(key, 15)
    w1 = 0.1 * jax.random.normal(keys[0], (inplanes, planes), jnp.float32)
    w2 = 0.1 * jax.random.normal(keys[1], (3, 3, planes, planes), jnp.float32)  # HWIO
    w3 = 0.1 * jax.random.normal(keys[2], (planes, planes * expansion), jnp.float32)

    def fold_bn(kg, kb, km, kv, c):
        gamma = 1.0 + 0.1 * jax.random.normal(kg, (c,), jnp.float32)
        beta = 0.1 * jax.random.normal(kb, (c,), jnp.float32)
        running_mean = 0.05 * jax.random.normal(km, (c,), jnp.float32)
        running_var = 1.0 + 0.1 * jax.random.uniform(kv, (c,), jnp.float32)
        eps = 1e-5
        scale = gamma / jnp.sqrt(running_var + eps)
        bias = beta - running_mean * scale
        return scale.reshape(1, c), bias.reshape(1, c)

    s1, b1 = fold_bn(keys[3], keys[4], keys[5], keys[6], planes)
    s2, b2 = fold_bn(keys[7], keys[8], keys[9], keys[10], planes)
    s3, b3 = fold_bn(keys[11], keys[12], keys[13], keys[14], planes * expansion)
    return w1, s1, b1, w2, s2, b2, w3, s3, b3


def reference(x_nchw, w1, s1, b1, w2, s2, b2, w3, s3, b3):
    """Pure-JAX f32 reference (same semantics) for correctness check."""
    x = jnp.transpose(x_nchw, (0, 2, 3, 1))
    h = jnp.einsum('nhwc,cp->nhwp', x, w1)
    h = jnp.maximum(h * s1[0] + b1[0], 0.0)
    h = lax.conv_general_dilated(h, w2, window_strides=(1, 1), padding='SAME',
                                 dimension_numbers=('NHWC', 'HWIO', 'NHWC'))
    h = jnp.maximum(h * s2[0] + b2[0], 0.0)
    h = jnp.einsum('nhwp,pq->nhwq', h, w3)
    h = h * s3[0] + b3[0]
    out = jnp.maximum(h + x, 0.0)
    return jnp.transpose(out, (0, 3, 1, 2))


if __name__ == "__main__":
    key = jax.random.PRNGKey(0)
    k_x, k_p = jax.random.split(key)

    planes = 4
    inplanes = planes * 4          # required for identity residual (downsample=None)
    N, H, W = 2, 16, 16

    x = jax.random.normal(k_x, (N, inplanes, H, W), jnp.float32)   # NCHW like PyTorch
    params = make_params(k_p, inplanes, planes)
    ref = reference(x, *params)

    # Strict check: f32 MXU operands, tile_h=8 -> 2 row-tiles per image, exercising
    # the halo-row exchange path.
    out_f32 = jax.block_until_ready(
        bottleneck_forward(x, *params, tile_h=8, compute_dtype=jnp.float32))
    assert out_f32.shape == (N, inplanes, H, W)
    assert jnp.allclose(out_f32, ref, atol=1e-4, rtol=1e-4), "f32 mismatch vs reference"

    # Perf mode: bf16 MXU operands with f32 accumulation (loose tolerance from bf16
    # rounding of activations/weights).
    out_bf16 = jax.block_until_ready(
        bottleneck_forward(x, *params, tile_h=8, compute_dtype=jnp.bfloat16))
    assert jnp.allclose(out_bf16, ref, atol=1e-1, rtol=1e-1), "bf16 mismatch vs reference"

    print("KERNEL_OK")
</pallas_src>

<mosaic_0001>
module attributes {stable_mosaic.version = 11 : i64} {
  func.func @_bottleneck_kernel(%arg0: i32, %arg1: i32, %arg2: memref<1x8x16x16xf32, #tpu.memory_space<vmem>>, %arg3: memref<1x1x16x16xf32, #tpu.memory_space<vmem>>, %arg4: memref<1x1x16x16xf32, #tpu.memory_space<vmem>>, %arg5: memref<16x4xf32, #tpu.memory_space<vmem>>, %arg6: memref<1x4xf32, #tpu.memory_space<vmem>>, %arg7: memref<1x4xf32, #tpu.memory_space<vmem>>, %arg8: memref<3x3x4x4xf32, #tpu.memory_space<vmem>>, %arg9: memref<1x4xf32, #tpu.memory_space<vmem>>, %arg10: memref<1x4xf32, #tpu.memory_space<vmem>>, %arg11: memref<4x16xf32, #tpu.memory_space<vmem>>, %arg12: memref<1x16xf32, #tpu.memory_space<vmem>>, %arg13: memref<1x16xf32, #tpu.memory_space<vmem>>, %arg14: memref<1x8x16x16xf32, #tpu.memory_space<vmem>>, %arg15: memref<176x4xf32, #tpu.memory_space<vmem>>) attributes {dimension_semantics = [#tpu.dimension_semantics<parallel>, #tpu.dimension_semantics<parallel>], iteration_bounds = array<i64: 2, 2>, scalar_prefetch = 0 : i64, scratch_operands = 1 : i64, tpu.core_type = #tpu.core_type<tc>, window_params = [{transform_indices = @transform_0, window_bounds = array<i64: 1, 8, 16, 16>}, {transform_indices = @transform_1, window_bounds = array<i64: 1, 1, 16, 16>}, {transform_indices = @transform_2, window_bounds = array<i64: 1, 1, 16, 16>}, {pipeline_mode = #tpu.pipeline_mode<synchronous>, transform_indices = @transform_3, window_bounds = array<i64: 16, 4>}, {pipeline_mode = #tpu.pipeline_mode<synchronous>, transform_indices = @transform_4, window_bounds = array<i64: 1, 4>}, {pipeline_mode = #tpu.pipeline_mode<synchronous>, transform_indices = @transform_5, window_bounds = array<i64: 1, 4>}, {pipeline_mode = #tpu.pipeline_mode<synchronous>, transform_indices = @transform_6, window_bounds = array<i64: 3, 3, 4, 4>}, {pipeline_mode = #tpu.pipeline_mode<synchronous>, transform_indices = @transform_7, window_bounds = array<i64: 1, 4>}, {pipeline_mode = #tpu.pipeline_mode<synchronous>, transform_indices = @transform_8, window_bounds = array<i64: 1, 4>}, {pipeline_mode = #tpu.pipeline_mode<synchronous>, transform_indices = @transform_9, window_bounds = array<i64: 4, 16>}, {pipeline_mode = #tpu.pipeline_mode<synchronous>, transform_indices = @transform_10, window_bounds = array<i64: 1, 16>}, {pipeline_mode = #tpu.pipeline_mode<synchronous>, transform_indices = @transform_11, window_bounds = array<i64: 1, 16>}, {transform_indices = @transform_12, window_bounds = array<i64: 1, 8, 16, 16>}]} {
    %c0 = arith.constant 0 : index
    %c0_0 = arith.constant 0 : index
    %c0_1 = arith.constant 0 : index
    %c0_2 = arith.constant 0 : index
    %0 = vector.load %arg2[%c0, %c0_0, %c0_1, %c0_2] : memref<1x8x16x16xf32, #tpu.memory_space<vmem>>, vector<1x8x16x16xf32>
    %1 = vector.shape_cast %0 : vector<1x8x16x16xf32> to vector<8x16x16xf32>
    %2 = vector.shape_cast %1 : vector<8x16x16xf32> to vector<128x16xf32>
    %c0_3 = arith.constant 0 : index
    %c0_4 = arith.constant 0 : index
    %3 = vector.load %arg5[%c0_3, %c0_4] : memref<16x4xf32, #tpu.memory_space<vmem>>, vector<16x4xf32>
    %cst = arith.constant dense<0.000000e+00> : vector<128x4xf32>
    %4 = tpu.matmul %2, %3, %cst {dimension_numbers = #tpu.dot_dimension_numbers<[1], [0], [0], [1], [0, 0, 1, 1], [], []>} : vector<128x16xf32>, vector<16x4xf32>, vector<128x4xf32> -> vector<128x4xf32>
    %c0_5 = arith.constant 0 : index
    %c0_6 = arith.constant 0 : index
    %5 = vector.load %arg6[%c0_5, %c0_6] : memref<1x4xf32, #tpu.memory_space<vmem>>, vector<1x4xf32>
    %6 = vector.broadcast %5 : vector<1x4xf32> to vector<128x4xf32>
    %7 = arith.mulf %4, %6 : vector<128x4xf32>
    %c0_7 = arith.constant 0 : index
    %c0_8 = arith.constant 0 : index
    %8 = vector.load %arg7[%c0_7, %c0_8] : memref<1x4xf32, #tpu.memory_space<vmem>>, vector<1x4xf32>
    %9 = vector.broadcast %8 : vector<1x4xf32> to vector<128x4xf32>
    %10 = arith.addf %7, %9 : vector<128x4xf32>
    %cst_9 = arith.constant 0.000000e+00 : f32
    %11 = vector.broadcast %cst_9 : f32 to vector<128x4xf32>
    %12 = arith.maximumf %10, %11 : vector<128x4xf32>
    %c0_10 = arith.constant 0 : index
    %c0_11 = arith.constant 0 : index
    %c0_12 = arith.constant 0 : index
    %c0_13 = arith.constant 0 : index
    %13 = vector.load %arg3[%c0_10, %c0_11, %c0_12, %c0_13] : memref<1x1x16x16xf32, #tpu.memory_space<vmem>>, vector<1x1x16x16xf32>
    %14 = vector.shape_cast %13 : vector<1x1x16x16xf32> to vector<16x16xf32>
    %c0_14 = arith.constant 0 : index
    %c0_15 = arith.constant 0 : index
    %c0_16 = arith.constant 0 : index
    %c0_17 = arith.constant 0 : index
    %15 = vector.load %arg4[%c0_14, %c0_15, %c0_16, %c0_17] : memref<1x1x16x16xf32, #tpu.memory_space<vmem>>, vector<1x1x16x16xf32>
    %16 = vector.shape_cast %15 : vector<1x1x16x16xf32> to vector<16x16xf32>
    %c0_i32 = arith.constant 0 : i32
    %17 = arith.cmpi sgt, %arg1, %c0_i32 : i32
    %c0_18 = arith.constant 0 : index
    %c0_19 = arith.constant 0 : index
    %18 = vector.load %arg5[%c0_18, %c0_19] : memref<16x4xf32, #tpu.memory_space<vmem>>, vector<16x4xf32>
    %cst_20 = arith.constant dense<0.000000e+00> : vector<16x4xf32>
    %19 = tpu.matmul %14, %18, %cst_20 {dimension_numbers = #tpu.dot_dimension_numbers<[1], [0], [0], [1], [0, 0, 1, 1], [], []>} : vector<16x16xf32>, vector<16x4xf32>, vector<16x4xf32> -> vector<16x4xf32>
    %c0_21 = arith.constant 0 : index
    %c0_22 = arith.constant 0 : index
    %20 = vector.load %arg6[%c0_21, %c0_22] : memref<1x4xf32, #tpu.memory_space<vmem>>, vector<1x4xf32>
    %21 = vector.broadcast %20 : vector<1x4xf32> to vector<16x4xf32>
    %22 = arith.mulf %19, %21 : vector<16x4xf32>
    %c0_23 = arith.constant 0 : index
    %c0_24 = arith.constant 0 : index
    %23 = vector.load %arg7[%c0_23, %c0_24] : memref<1x4xf32, #tpu.memory_space<vmem>>, vector<1x4xf32>
    %24 = vector.broadcast %23 : vector<1x4xf32> to vector<16x4xf32>
    %25 = arith.addf %22, %24 : vector<16x4xf32>
    %cst_25 = arith.constant 0.000000e+00 : f32
    %26 = vector.broadcast %cst_25 : f32 to vector<16x4xf32>
    %27 = arith.maximumf %25, %26 : vector<16x4xf32>
    %cst_26 = arith.constant 0.000000e+00 : f32
    %28 = vector.broadcast %cst_26 : f32 to vector<16x4xf32>
    %29 = arith.select %17, %27, %28 : vector<16x4xf32>
    %c1_i32 = arith.constant 1 : i32
    %30 = arith.cmpi slt, %arg1, %c1_i32 : i32
    %c0_27 = arith.constant 0 : index
    %c0_28 = arith.constant 0 : index
    %31 = vector.load %arg5[%c0_27, %c0_28] : memref<16x4xf32, #tpu.memory_space<vmem>>, vector<16x4xf32>
    %cst_29 = arith.constant dense<0.000000e+00> : vector<16x4xf32>
    %32 = tpu.matmul %16, %31, %cst_29 {dimension_numbers = #tpu.dot_dimension_numbers<[1], [0], [0], [1], [0, 0, 1, 1], [], []>} : vector<16x16xf32>, vector<16x4xf32>, vector<16x4xf32> -> vector<16x4xf32>
    %c0_30 = arith.constant 0 : index
    %c0_31 = arith.constant 0 : index
    %33 = vector.load %arg6[%c0_30, %c0_31] : memref<1x4xf32, #tpu.memory_space<vmem>>, vector<1x4xf32>
    %34 = vector.broadcast %33 : vector<1x4xf32> to vector<16x4xf32>
    %35 = arith.mulf %32, %34 : vector<16x4xf32>
    %c0_32 = arith.constant 0 : index
    %c0_33 = arith.constant 0 : index
    %36 = vector.load %arg7[%c0_32, %c0_33] : memref<1x4xf32, #tpu.memory_space<vmem>>, vector<1x4xf32>
    %37 = vector.broadcast %36 : vector<1x4xf32> to vector<16x4xf32>
    %38 = arith.addf %35, %37 : vector<16x4xf32>
    %cst_34 = arith.constant 0.000000e+00 : f32
    %39 = vector.broadcast %cst_34 : f32 to vector<16x4xf32>
    %40 = arith.maximumf %38, %39 : vector<16x4xf32>
    %cst_35 = arith.constant 0.000000e+00 : f32
    %41 = vector.broadcast %cst_35 : f32 to vector<16x4xf32>
    %42 = arith.select %30, %40, %41 : vector<16x4xf32>
    %c8 = arith.constant 8 : index
    %c0_36 = arith.constant 0 : index
    %43 = vector.load %arg15[%c8, %c0_36] : memref<176x4xf32, #tpu.memory_space<vmem>>, vector<16x4xf32>
    tpu.vector_store %arg15[%c8, %c0_36], %29 {strides = array<i32>} : memref<176x4xf32, #tpu.memory_space<vmem>>, vector<16x4xf32>,
    %c24 = arith.constant 24 : index
    %c0_37 = arith.constant 0 : index
    %44 = vector.load %arg15[%c24, %c0_37] : memref<176x4xf32, #tpu.memory_space<vmem>>, vector<128x4xf32>
    tpu.vector_store %arg15[%c24, %c0_37], %12 {strides = array<i32>} : memref<176x4xf32, #tpu.memory_space<vmem>>, vector<128x4xf32>,
    %c152 = arith.constant 152 : index
    %c0_38 = arith.constant 0 : index
    %45 = vector.load %arg15[%c152, %c0_38] : memref<176x4xf32, #tpu.memory_space<vmem>>, vector<16x4xf32>
    tpu.vector_store %arg15[%c152, %c0_38], %42 {strides = array<i32>} : memref<176x4xf32, #tpu.memory_space<vmem>>, vector<16x4xf32>,
    %46 = tpu.iota {dimensions = array<i32: 0>} : vector<128x1xi32>
    %c16_i32 = arith.constant 16 : i32
    %c0_i32_39 = arith.constant 0 : i32
    %47 = arith.cmpi eq, %c16_i32, %c0_i32_39 : i32
    %c1_i32_40 = arith.constant 1 : i32
    %48 = arith.select %47, %c1_i32_40, %c16_i32 : i32
    %49 = vector.broadcast %48 : i32 to vector<128x1xi32>
    %50 = arith.remsi %46, %49 : vector<128x1xi32>
    %c0_i32_41 = arith.constant 0 : i32
    %51 = vector.broadcast %c0_i32_41 : i32 to vector<128x1xi32>
    %52 = arith.cmpi ne, %50, %51 : vector<128x1xi32>
    %c0_i32_42 = arith.constant 0 : i32
    %53 = vector.broadcast %c0_i32_42 : i32 to vector<128x1xi32>
    %54 = arith.cmpi slt, %50, %53 : vector<128x1xi32>
    %c0_i32_43 = arith.constant 0 : i32
    %55 = arith.cmpi slt, %48, %c0_i32_43 : i32
    %56 = vector.broadcast %55 : i1 to vector<128x1xi1>
    %57 = vector.broadcast %56 : vector<128x1xi1> to vector<128x1xi1>
    %58 = arith.xori %54, %57 : vector<128x1xi1>
    %59 = arith.andi %58, %52 : vector<128x1xi1>
    %60 = vector.broadcast %48 : i32 to vector<128x1xi32>
    %61 = arith.addi %50, %60 : vector<128x1xi32>
    %62 = arith.select %59, %61, %50 : vector<128x1xi1>, vector<128x1xi32>
    %c1_i32_44 = arith.constant 1 : i32
    %63 = vector.broadcast %c1_i32_44 : i32 to vector<128x1xi32>
    %64 = arith.cmpi sge, %62, %63 : vector<128x1xi32>
    %c14_i32 = arith.constant 14 : i32
    %65 = vector.broadcast %c14_i32 : i32 to vector<128x1xi32>
    %66 = arith.cmpi sle, %62, %65 : vector<128x1xi32>
    %cst_45 = arith.constant 0.000000e+00 : f32
    %67 = vector.broadcast %cst_45 : f32 to vector<128x4xf32>
    %c7 = arith.constant 7 : index
    %c0_46 = arith.constant 0 : index
    %68 = vector.load %arg15[%c7, %c0_46] : memref<176x4xf32, #tpu.memory_space<vmem>>, vector<128x4xf32>
    %cst_47 = arith.constant 0.000000e+00 : f32
    %69 = vector.shape_cast %64 : vector<128x1xi1> to vector<128x1xi1>
    %70 = vector.broadcast %69 : vector<128x1xi1> to vector<128x4xi1>
    %71 = vector.broadcast %cst_47 : f32 to vector<128x4xf32>
    %72 = arith.select %70, %68, %71 : vector<128x4xi1>, vector<128x4xf32>
    %c0_48 = arith.constant 0 : index
    %c0_49 = arith.constant 0 : index
    %c0_50 = arith.constant 0 : index
    %c0_51 = arith.constant 0 : index
    %73 = vector.load %arg8[%c0_48, %c0_49, %c0_50, %c0_51] : memref<3x3x4x4xf32, #tpu.memory_space<vmem>>, vector<1x1x4x4xf32>
    %74 = vector.shape_cast %73 : vector<1x1x4x4xf32> to vector<4x4xf32>
    %cst_52 = arith.constant dense<0.000000e+00> : vector<128x4xf32>
    %75 = tpu.matmul %72, %74, %cst_52 {dimension_numbers = #tpu.dot_dimension_numbers<[1], [0], [0], [1], [0, 0, 1, 1], [], []>} : vector<128x4xf32>, vector<4x4xf32>, vector<128x4xf32> -> vector<128x4xf32>
    %76 = arith.addf %67, %75 : vector<128x4xf32>
    %c8_53 = arith.constant 8 : index
    %c0_54 = arith.constant 0 : index
    %77 = vector.load %arg15[%c8_53, %c0_54] : memref<176x4xf32, #tpu.memory_space<vmem>>, vector<128x4xf32>
    %c0_55 = arith.constant 0 : index
    %c1 = arith.constant 1 : index
    %c0_56 = arith.constant 0 : index
    %c0_57 = arith.constant 0 : index
    %78 = vector.load %arg8[%c0_55, %c1, %c0_56, %c0_57] : memref<3x3x4x4xf32, #tpu.memory_space<vmem>>, vector<1x1x4x4xf32>
    %79 = vector.shape_cast %78 : vector<1x1x4x4xf32> to vector<4x4xf32>
    %cst_58 = arith.constant dense<0.000000e+00> : vector<128x4xf32>
    %80 = tpu.matmul %77, %79, %cst_58 {dimension_numbers = #tpu.dot_dimension_numbers<[1], [0], [0], [1], [0, 0, 1, 1], [], []>} : vector<128x4xf32>, vector<4x4xf32>, vector<128x4xf32> -> vector<128x4xf32>
    %81 = arith.addf %76, %80 : vector<128x4xf32>
    %c9 = arith.constant 9 : index
    %c0_59 = arith.constant 0 : index
    %82 = vector.load %arg15[%c9, %c0_59] : memref<176x4xf32, #tpu.memory_space<vmem>>, vector<128x4xf32>
    %cst_60 = arith.constant 0.000000e+00 : f32
    %83 = vector.shape_cast %66 : vector<128x1xi1> to vector<128x1xi1>
    %84 = vector.broadcast %83 : vector<128x1xi1> to vector<128x4xi1>
    %85 = vector.broadcast %cst_60 : f32 to vector<128x4xf32>
    %86 = arith.select %84, %82, %85 : vector<128x4xi1>, vector<128x4xf32>
    %c0_61 = arith.constant 0 : index
    %c2 = arith.constant 2 : index
    %c0_62 = arith.constant 0 : index
    %c0_63 = arith.constant 0 : index
    %87 = vector.load %arg8[%c0_61, %c2, %c0_62, %c0_63] : memref<3x3x4x4xf32, #tpu.memory_space<vmem>>, vector<1x1x4x4xf32>
    %88 = vector.shape_cast %87 : vector<1x1x4x4xf32> to vector<4x4xf32>
    %cst_64 = arith.constant dense<0.000000e+00> : vector<128x4xf32>
    %89 = tpu.matmul %86, %88, %cst_64 {dimension_numbers = #tpu.dot_dimension_numbers<[1], [0], [0], [1], [0, 0, 1, 1], [], []>} : vector<128x4xf32>, vector<4x4xf32>, vector<128x4xf32> -> vector<128x4xf32>
    %90 = arith.addf %81, %89 : vector<128x4xf32>
    %c23 = arith.constant 23 : index
    %c0_65 = arith.constant 0 : index
    %91 = vector.load %arg15[%c23, %c0_65] : memref<176x4xf32, #tpu.memory_space<vmem>>, vector<128x4xf32>
    %cst_66 = arith.constant 0.000000e+00 : f32
    %92 = vector.shape_cast %64 : vector<128x1xi1> to vector<128x1xi1>
    %93 = vector.broadcast %92 : vector<128x1xi1> to vector<128x4xi1>
    %94 = vector.broadcast %cst_66 : f32 to vector<128x4xf32>
    %95 = arith.select %93, %91, %94 : vector<128x4xi1>, vector<128x4xf32>
    %c1_67 = arith.constant 1 : index
    %c0_68 = arith.constant 0 : index
    %c0_69 = arith.constant 0 : index
    %c0_70 = arith.constant 0 : index
    %96 = vector.load %arg8[%c1_67, %c0_68, %c0_69, %c0_70] : memref<3x3x4x4xf32, #tpu.memory_space<vmem>>, vector<1x1x4x4xf32>
    %97 = vector.shape_cast %96 : vector<1x1x4x4xf32> to vector<4x4xf32>
    %cst_71 = arith.constant dense<0.000000e+00> : vector<128x4xf32>
    %98 = tpu.matmul %95, %97, %cst_71 {dimension_numbers = #tpu.dot_dimension_numbers<[1], [0], [0], [1], [0, 0, 1, 1], [], []>} : vector<128x4xf32>, vector<4x4xf32>, vector<128x4xf32> -> vector<128x4xf32>
    %99 = arith.addf %90, %98 : vector<128x4xf32>
    %c24_72 = arith.constant 24 : index
    %c0_73 = arith.constant 0 : index
    %100 = vector.load %arg15[%c24_72, %c0_73] : memref<176x4xf32, #tpu.memory_space<vmem>>, vector<128x4xf32>
    %c1_74 = arith.constant 1 : index
    %c1_75 = arith.constant 1 : index
    %c0_76 = arith.constant 0 : index
    %c0_77 = arith.constant 0 : index
    %101 = vector.load %arg8[%c1_74, %c1_75, %c0_76, %c0_77] : memref<3x3x4x4xf32, #tpu.memory_space<vmem>>, vector<1x1x4x4xf32>
    %102 = vector.shape_cast %101 : vector<1x1x4x4xf32> to vector<4x4xf32>
    %cst_78 = arith.constant dense<0.000000e+00> : vector<128x4xf32>
    %103 = tpu.matmul %100, %102, %cst_78 {dimension_numbers = #tpu.dot_dimension_numbers<[1], [0], [0], [1], [0, 0, 1, 1], [], []>} : vector<128x4xf32>, vector<4x4xf32>, vector<128x4xf32> -> vector<128x4xf32>
    %104 = arith.addf %99, %103 : vector<128x4xf32>
    %c25 = arith.constant 25 : index
    %c0_79 = arith.constant 0 : index
    %105 = vector.load %arg15[%c25, %c0_79] : memref<176x4xf32, #tpu.memory_space<vmem>>, vector<128x4xf32>
    %cst_80 = arith.constant 0.000000e+00 : f32
    %106 = vector.shape_cast %66 : vector<128x1xi1> to vector<128x1xi1>
    %107 = vector.broadcast %106 : vector<128x1xi1> to vector<128x4xi1>
    %108 = vector.broadcast %cst_80 : f32 to vector<128x4xf32>
    %109 = arith.select %107, %105, %108 : vector<128x4xi1>, vector<128x4xf32>
    %c1_81 = arith.constant 1 : index
    %c2_82 = arith.constant 2 : index
    %c0_83 = arith.constant 0 : index
    %c0_84 = arith.constant 0 : index
    %110 = vector.load %arg8[%c1_81, %c2_82, %c0_83, %c0_84] : memref<3x3x4x4xf32, #tpu.memory_space<vmem>>, vector<1x1x4x4xf32>
    %111 = vector.shape_cast %110 : vector<1x1x4x4xf32> to vector<4x4xf32>
    %cst_85 = arith.constant dense<0.000000e+00> : vector<128x4xf32>
    %112 = tpu.matmul %109, %111, %cst_85 {dimension_numbers = #tpu.dot_dimension_numbers<[1], [0], [0], [1], [0, 0, 1, 1], [], []>} : vector<128x4xf32>, vector<4x4xf32>, vector<128x4xf32> -> vector<128x4xf32>
    %113 = arith.addf %104, %112 : vector<128x4xf32>
    %c39 = arith.constant 39 : index
    %c0_86 = arith.constant 0 : index
    %114 = vector.load %arg15[%c39, %c0_86] : memref<176x4xf32, #tpu.memory_space<vmem>>, vector<128x4xf32>
    %cst_87 = arith.constant 0.000000e+00 : f32
    %115 = vector.shape_cast %64 : vector<128x1xi1> to vector<128x1xi1>
    %116 = vector.broadcast %115 : vector<128x1xi1> to vector<128x4xi1>
    %117 = vector.broadcast %cst_87 : f32 to vector<128x4xf32>
    %118 = arith.select %116, %114, %117 : vector<128x4xi1>, vector<128x4xf32>
    %c2_88 = arith.constant 2 : index
    %c0_89 = arith.constant 0 : index
    %c0_90 = arith.constant 0 : index
    %c0_91 = arith.constant 0 : index
    %119 = vector.load %arg8[%c2_88, %c0_89, %c0_90, %c0_91] : memref<3x3x4x4xf32, #tpu.memory_space<vmem>>, vector<1x1x4x4xf32>
    %120 = vector.shape_cast %119 : vector<1x1x4x4xf32> to vector<4x4xf32>
    %cst_92 = arith.constant dense<0.000000e+00> : vector<128x4xf32>
    %121 = tpu.matmul %118, %120, %cst_92 {dimension_numbers = #tpu.dot_dimension_numbers<[1], [0], [0], [1], [0, 0, 1, 1], [], []>} : vector<128x4xf32>, vector<4x4xf32>, vector<128x4xf32> -> vector<128x4xf32>
    %122 = arith.addf %113, %121 : vector<128x4xf32>
    %c40 = arith.constant 40 : index
    %c0_93 = arith.constant 0 : index
    %123 = vector.load %arg15[%c40, %c0_93] : memref<176x4xf32, #tpu.memory_space<vmem>>, vector<128x4xf32>
    %c2_94 = arith.constant 2 : index
    %c1_95 = arith.constant 1 : index
    %c0_96 = arith.constant 0 : index
    %c0_97 = arith.constant 0 : index
    %124 = vector.load %arg8[%c2_94, %c1_95, %c0_96, %c0_97] : memref<3x3x4x4xf32, #tpu.memory_space<vmem>>, vector<1x1x4x4xf32>
    %125 = vector.shape_cast %124 : vector<1x1x4x4xf32> to vector<4x4xf32>
    %cst_98 = arith.constant dense<0.000000e+00> : vector<128x4xf32>
    %126 = tpu.matmul %123, %125, %cst_98 {dimension_numbers = #tpu.dot_dimension_numbers<[1], [0], [0], [1], [0, 0, 1, 1], [], []>} : vector<128x4xf32>, vector<4x4xf32>, vector<128x4xf32> -> vector<128x4xf32>
    %127 = arith.addf %122, %126 : vector<128x4xf32>
    %c41 = arith.constant 41 : index
    %c0_99 = arith.constant 0 : index
    %128 = vector.load %arg15[%c41, %c0_99] : memref<176x4xf32, #tpu.memory_space<vmem>>, vector<128x4xf32>
    %cst_100 = arith.constant 0.000000e+00 : f32
    %129 = vector.shape_cast %66 : vector<128x1xi1> to vector<128x1xi1>
    %130 = vector.broadcast %129 : vector<128x1xi1> to vector<128x4xi1>
    %131 = vector.broadcast %cst_100 : f32 to vector<128x4xf32>
    %132 = arith.select %130, %128, %131 : vector<128x4xi1>, vector<128x4xf32>
    %c2_101 = arith.constant 2 : index
    %c2_102 = arith.constant 2 : index
    %c0_103 = arith.constant 0 : index
    %c0_104 = arith.constant 0 : index
    %133 = vector.load %arg8[%c2_101, %c2_102, %c0_103, %c0_104] : memref<3x3x4x4xf32, #tpu.memory_space<vmem>>, vector<1x1x4x4xf32>
    %134 = vector.shape_cast %133 : vector<1x1x4x4xf32> to vector<4x4xf32>
    %cst_105 = arith.constant dense<0.000000e+00> : vector<128x4xf32>
    %135 = tpu.matmul %132, %134, %cst_105 {dimension_numbers = #tpu.dot_dimension_numbers<[1], [0], [0], [1], [0, 0, 1, 1], [], []>} : vector<128x4xf32>, vector<4x4xf32>, vector<128x4xf32> -> vector<128x4xf32>
    %136 = arith.addf %127, %135 : vector<128x4xf32>
    %c0_106 = arith.constant 0 : index
    %c0_107 = arith.constant 0 : index
    %137 = vector.load %arg9[%c0_106, %c0_107] : memref<1x4xf32, #tpu.memory_space<vmem>>, vector<1x4xf32>
    %138 = vector.broadcast %137 : vector<1x4xf32> to vector<128x4xf32>
    %139 = arith.mulf %136, %138 : vector<128x4xf32>
    %c0_108 = arith.constant 0 : index
    %c0_109 = arith.constant 0 : index
    %140 = vector.load %arg10[%c0_108, %c0_109] : memref<1x4xf32, #tpu.memory_space<vmem>>, vector<1x4xf32>
    %141 = vector.broadcast %140 : vector<1x4xf32> to vector<128x4xf32>
    %142 = arith.addf %139, %141 : vector<128x4xf32>
    %cst_110 = arith.constant 0.000000e+00 : f32
    %143 = vector.broadcast %cst_110 : f32 to vector<128x4xf32>
    %144 = arith.maximumf %142, %143 : vector<128x4xf32>
    %c0_111 = arith.constant 0 : index
    %c0_112 = arith.constant 0 : index
    %145 = vector.load %arg11[%c0_111, %c0_112] : memref<4x16xf32, #tpu.memory_space<vmem>>, vector<4x16xf32>
    %cst_113 = arith.constant dense<0.000000e+00> : vector<128x16xf32>
    %146 = tpu.matmul %144, %145, %cst_113 {dimension_numbers = #tpu.dot_dimension_numbers<[1], [0], [0], [1], [0, 0, 1, 1], [], []>} : vector<128x4xf32>, vector<4x16xf32>, vector<128x16xf32> -> vector<128x16xf32>
    %c0_114 = arith.constant 0 : index
    %c0_115 = arith.constant 0 : index
    %147 = vector.load %arg12[%c0_114, %c0_115] : memref<1x16xf32, #tpu.memory_space<vmem>>, vector<1x16xf32>
    %148 = vector.broadcast %147 : vector<1x16xf32> to vector<128x16xf32>
    %149 = arith.mulf %146, %148 : vector<128x16xf32>
    %c0_116 = arith.constant 0 : index
    %c0_117 = arith.constant 0 : index
    %150 = vector.load %arg13[%c0_116, %c0_117] : memref<1x16xf32, #tpu.memory_space<vmem>>, vector<1x16xf32>
    %151 = vector.broadcast %150 : vector<1x16xf32> to vector<128x16xf32>
    %152 = arith.addf %149, %151 : vector<128x16xf32>
    %153 = arith.addf %152, %2 : vector<128x16xf32>
    %cst_118 = arith.constant 0.000000e+00 : f32
    %154 = vector.broadcast %cst_118 : f32 to vector<128x16xf32>
    %155 = arith.maximumf %153, %154 : vector<128x16xf32>
    %156 = vector.shape_cast %155 : vector<128x16xf32> to vector<8x16x16xf32>
    %c0_119 = arith.constant 0 : index
    %c0_120 = arith.constant 0 : index
    %c0_121 = arith.constant 0 : index
    %c0_122 = arith.constant 0 : index
    %157 = vector.load %arg14[%c0_119, %c0_120, %c0_121, %c0_122] : memref<1x8x16x16xf32, #tpu.memory_space<vmem>>, vector<1x8x16x16xf32>
    %158 = vector.shape_cast %157 : vector<1x8x16x16xf32> to vector<8x16x16xf32>
    %159 = vector.shape_cast %156 : vector<8x16x16xf32> to vector<1x8x16x16xf32>
    tpu.vector_store %arg14[%c0_119, %c0_120, %c0_121, %c0_122], %159 {strides = array<i32>} : memref<1x8x16x16xf32, #tpu.memory_space<vmem>>, vector<1x8x16x16xf32>,
    return
  }
  func.func @transform_0(%arg0: i32, %arg1: i32) -> (i32, i32, i32, i32) {
    %c0_i32 = arith.constant 0 : i32
    %c0_i32_0 = arith.constant 0 : i32
    %c0_i32_1 = arith.constant 0 : i32
    return %arg0, %arg1, %c0_i32, %c0_i32_0 : i32, i32, i32, i32
  }
  func.func @transform_1(%arg0: i32, %arg1: i32) -> (i32, i32, i32, i32) {
    %c8_i32 = arith.constant 8 : i32
    %0 = arith.muli %arg1, %c8_i32 : i32
    %c1_i32 = arith.constant 1 : i32
    %1 = arith.subi %0, %c1_i32 : i32
    %c0_i32 = arith.constant 0 : i32
    %2 = arith.maxsi %1, %c0_i32 : i32
    %c0_i32_0 = arith.constant 0 : i32
    %c0_i32_1 = arith.constant 0 : i32
    %c0_i32_2 = arith.constant 0 : i32
    return %arg0, %2, %c0_i32_0, %c0_i32_1 : i32, i32, i32, i32
  }
  func.func @transform_2(%arg0: i32, %arg1: i32) -> (i32, i32, i32, i32) {
    %c1_i32 = arith.constant 1 : i32
    %0 = arith.addi %arg1, %c1_i32 : i32
    %c8_i32 = arith.constant 8 : i32
    %1 = arith.muli %0, %c8_i32 : i32
    %c15_i32 = arith.constant 15 : i32
    %2 = arith.minsi %1, %c15_i32 : i32
    %c0_i32 = arith.constant 0 : i32
    %c0_i32_0 = arith.constant 0 : i32
    %c0_i32_1 = arith.constant 0 : i32
    return %arg0, %2, %c0_i32, %c0_i32_0 : i32, i32, i32, i32
  }
  func.func @transform_3(%arg0: i32, %arg1: i32) -> (i32, i32) {
    %c0_i32 = arith.constant 0 : i32
    %c0_i32_0 = arith.constant 0 : i32
    %c0_i32_1 = arith.constant 0 : i32
    return %c0_i32, %c0_i32_0 : i32, i32
  }
  func.func @transform_4(%arg0: i32, %arg1: i32) -> (i32, i32) {
    %c0_i32 = arith.constant 0 : i32
    %c0_i32_0 = arith.constant 0 : i32
    %c0_i32_1 = arith.constant 0 : i32
    return %c0_i32, %c0_i32_0 : i32, i32
  }
  func.func @transform_5(%arg0: i32, %arg1: i32) -> (i32, i32) {
    %c0_i32 = arith.constant 0 : i32
    %c0_i32_0 = arith.constant 0 : i32
    %c0_i32_1 = arith.constant 0 : i32
    return %c0_i32, %c0_i32_0 : i32, i32
  }
  func.func @transform_6(%arg0: i32, %arg1: i32) -> (i32, i32, i32, i32) {
    %c0_i32 = arith.constant 0 : i32
    %c0_i32_0 = arith.constant 0 : i32
    %c0_i32_1 = arith.constant 0 : i32
    %c0_i32_2 = arith.constant 0 : i32
    %c0_i32_3 = arith.constant 0 : i32
    return %c0_i32, %c0_i32_0, %c0_i32_1, %c0_i32_2 : i32, i32, i32, i32
  }
  func.func @transform_7(%arg0: i32, %arg1: i32) -> (i32, i32) {
    %c0_i32 = arith.constant 0 : i32
    %c0_i32_0 = arith.constant 0 : i32
    %c0_i32_1 = arith.constant 0 : i32
    return %c0_i32, %c0_i32_0 : i32, i32
  }
  func.func @transform_8(%arg0: i32, %arg1: i32) -> (i32, i32) {
    %c0_i32 = arith.constant 0 : i32
    %c0_i32_0 = arith.constant 0 : i32
    %c0_i32_1 = arith.constant 0 : i32
    return %c0_i32, %c0_i32_0 : i32, i32
  }
  func.func @transform_9(%arg0: i32, %arg1: i32) -> (i32, i32) {
    %c0_i32 = arith.constant 0 : i32
    %c0_i32_0 = arith.constant 0 : i32
    %c0_i32_1 = arith.constant 0 : i32
    return %c0_i32, %c0_i32_0 : i32, i32
  }
  func.func @transform_10(%arg0: i32, %arg1: i32) -> (i32, i32) {
    %c0_i32 = arith.constant 0 : i32
    %c0_i32_0 = arith.constant 0 : i32
    %c0_i32_1 = arith.constant 0 : i32
    return %c0_i32, %c0_i32_0 : i32, i32
  }
  func.func @transform_11(%arg0: i32, %arg1: i32) -> (i32, i32) {
    %c0_i32 = arith.constant 0 : i32
    %c0_i32_0 = arith.constant 0 : i32
    %c0_i32_1 = arith.constant 0 : i32
    return %c0_i32, %c0_i32_0 : i32, i32
  }
  func.func @transform_12(%arg0: i32, %arg1: i32) -> (i32, i32, i32, i32) {
    %c0_i32 = arith.constant 0 : i32
    %c0_i32_0 = arith.constant 0 : i32
    %c0_i32_1 = arith.constant 0 : i32
    return %arg0, %arg1, %c0_i32, %c0_i32_0 : i32, i32, i32, i32
  }
}

</mosaic_0001>

<llo_original>
// kernel: tpu_custom_call.1
$region0: #{tpu_custom_call.1}
  #allocation0 [shape = 'u32[]', space=smem, size = 0x4, offset = 0x4, fixed_abs, tag = 'smem constant byte address 0x4 - core index']
  #allocation1 [shape = 'u32[144,128]{1,0:T(1,128)}', space=vmem, size = 0x12000, scoped, tag = 'internal scratch']
  #allocation2 [shape = 'f32[176,4]{1,0:T(8,128)}', space=vmem, size = 0x16000, scoped, tag = 'scratch operand']
  %s0 = inlined_call_operand.hbm [shape: f32[2,16,16,16], index: 0, kind: input, shape index: {}]
  %s1 = inlined_call_operand.hbm [shape: f32[2,16,16,16], index: 1, kind: input, shape index: {}]
  %s2 = inlined_call_operand.hbm [shape: f32[2,16,16,16], index: 2, kind: input, shape index: {}]
  %s3 = inlined_call_operand.vmem [shape: f32[16,4], index: 3, kind: input, shape index: {}]
  %s4 = inlined_call_operand.vmem [shape: f32[1,4], index: 4, kind: input, shape index: {}]
  %s5 = inlined_call_operand.vmem [shape: f32[1,4], index: 5, kind: input, shape index: {}]
  %s6 = inlined_call_operand.vmem [shape: f32[3,3,4,4], index: 6, kind: input, shape index: {}]
  %s7 = inlined_call_operand.vmem [shape: f32[1,4], index: 7, kind: input, shape index: {}]
  %s8 = inlined_call_operand.vmem [shape: f32[1,4], index: 8, kind: input, shape index: {}]
  %s9 = inlined_call_operand.vmem [shape: f32[4,16], index: 9, kind: input, shape index: {}]
  %s10 = inlined_call_operand.vmem [shape: f32[1,16], index: 10, kind: input, shape index: {}]
  %s11 = inlined_call_operand.vmem [shape: f32[1,16], index: 11, kind: input, shape index: {}]
  %s12 = inlined_call_operand.hbm [shape: f32[2,16,16,16], index: 12, kind: output, shape index: {}]
  %s13 = sld [smem:[#allocation0]]
  $region93: #{tpu_custom_call.1} parent=0
    _
  %s15 = ssub.s32 1, %s13
  %s16 = scalar_select 0, %s15, %s13
  $region1: #{tpu_custom_call.1} parent=0
    #allocation3 [shape = 'u8[131072]{0}', space=vmem, size = 0x20000, scoped, tag = 'input window, operand 0']
    #allocation4 [shape = 's32[2]{0}', space=sflag, size = 0x8, scoped, tag = 'scoped memory for tpu_custom_call.1']
    #allocation5 [shape = 's32[2]{0}', space=sflag, size = 0x8, scoped, tag = 'scoped memory for tpu_custom_call.1']
    #allocation6 [shape = 'u8[16384]{0}', space=vmem, size = 0x4000, scoped, tag = 'input window, operand 1']
    #allocation7 [shape = 's32[2]{0}', space=sflag, size = 0x8, scoped, tag = 'scoped memory for tpu_custom_call.1']
    #allocation8 [shape = 'u8[16384]{0}', space=vmem, size = 0x4000, scoped, tag = 'input window, operand 2']
    #allocation9 [shape = 'u8[131072]{0}', space=vmem, size = 0x20000, scoped, tag = 'output window, operand 0']
    %17 = vsyncpa [#allocation4], 0
    %s18 = scalar_lea.sflag [#allocation4], 1
    %19 = vsyncpa %s18, 0
    %20 = vsyncpa [#allocation7], 0
    %s21 = scalar_lea.sflag [#allocation7], 1
    %22 = vsyncpa %s21, 0
    %23 = vsyncpa [#allocation5], 0
    %s24 = scalar_lea.sflag [#allocation5], 1
    %25 = vsyncpa %s24, 0
    loop: start=0, step=1, limit=6
    $region2: #{tpu_custom_call.1} parent=1 // loop_pre_header
      _
    $region3: #{tpu_custom_call.1} parent=1 // loop_header
      %s27 = sphi 0, %s31
      %p28 = scmp.ge.s32.totalorder %s27, 6
      %s34 = sphi 0, %s46
      %s35 = sphi 0, %s42
      %s36 = sphi 0, %s34
      %s37 = sphi 0, %s35
      %s38 = sphi 0, %s36
      %s39 = sphi 0, %s37
      %s51 = sphi 0, %s53
      %s54 = sphi 0, %s51
      %s55 = sphi 0, %s54
      %s71 = sphi 0, %s55
      %s87 = sphi 0, %s89
      %s90 = sphi 0, %s87
      %s91 = sphi 0, %s90
      %s107 = sphi 0, %s91
      %s123 = sphi 0, %s125
      %s126 = sphi 0, %s123
      %s127 = sphi 0, %s126
      %s143 = sphi 0, %s127
      %s147 = sphi 0, %s147
      %s149 = sphi 0, %s147
      %s150 = sphi 0, %s149
      %s164 = sphi 0, %s150
      %s168 = sphi 0, %s168
      %s170 = sphi 0, %s168
      %s171 = sphi 0, %s170
      %s185 = sphi 0, %s171
      %s189 = sphi 0, %s189
      %s191 = sphi 0, %s189
      %s192 = sphi 0, %s191
      %s206 = sphi 0, %s192
      %s210 = sphi 0, %s210
      %s212 = sphi 0, %s210
      %s213 = sphi 0, %s212
      %s227 = sphi 0, %s213
      %s231 = sphi 0, %s231
      %s233 = sphi 0, %s231
      %s234 = sphi 0, %s233
      %s248 = sphi 0, %s234
      %s252 = sphi 0, %s252
      %s254 = sphi 0, %s252
      %s255 = sphi 0, %s254
      %s269 = sphi 0, %s255
      %s273 = sphi 0, %s273
      %s275 = sphi 0, %s273
      %s276 = sphi 0, %s275
      %s290 = sphi 0, %s276
      %s294 = sphi 0, %s294
      %s296 = sphi 0, %s294
      %s297 = sphi 0, %s296
      %s311 = sphi 0, %s297
      %s315 = sphi 0, %s315
      %s317 = sphi 0, %s315
      %s318 = sphi 0, %s317
      %s332 = sphi 0, %s318
      %s340 = sphi 0, %s342
      %s343 = sphi 0, %s340
      %s344 = sphi 0, %s343
      %s360 = sphi 0, %s344
    $region4: #{tpu_custom_call.1} parent=1 // loop_header_branch
      %30 = sbr.rel (%p28) target = $region8
    $region5: #{tpu_custom_call.1} parent=1 // loop_body
      %s32 = ssub.s32 %s27, 1
      %s33 = ssub.s32 %s27, 2
      %s40 = sadd.s32 1, %s35
      %p41 = scmp.ge.s32.totalorder %s40, 2
      %s42 = scalar_select %p41, 0, %s40
      %s43 = sadd.s32 1, %s34
      %s44 = scalar_select %p41, %s43, %s34
      %p45 = scmp.ge.s32.totalorder %s44, 2
      %s46 = scalar_select %p45, 0, %s44
      %s47 = ssub.s32 %s34, %s46
      %s48 = ssub.s32 %s35, %s42
      %s49 = sor.u32 %s47, %s48
      %p50 = scmp.eq.s32.totalorder %s49, 0
      %s52 = sadd.s32 %s51, 1
      %s53 = scalar_select %p50, %s51, %s52
      %p56 = pneg %p50
      %p57 = scmp.eq.s32.totalorder %s27, 3
      %p58 = por %p56, %p57
      %p59 = scmp.ne.s32.totalorder %s51, %s54
      %p60 = scmp.eq.s32.totalorder %s27, 0
      %p61 = por %p59, %p60
      %p62 = scmp.ne.s32.totalorder %s51, %s54
      %p63 = scmp.eq.s32.totalorder %s32, 3
      %p64 = por %p62, %p63
      %p65 = scmp.ne.s32.totalorder %s54, %s55
      %p66 = scmp.eq.s32.totalorder %s32, 0
      %p67 = por %p65, %p66
      %p68 = scmp.ne.s32.totalorder %s54, %s55
      %p69 = scmp.eq.s32.totalorder %s33, 3
      %p70 = por %p68, %p69
      %p72 = scmp.ne.s32.totalorder %s55, %s71
      %p73 = scmp.eq.s32.totalorder %s33, 0
      %p74 = por %p72, %p73
      %s75 = smul.u32 %s35, 8
      %s76 = ssub.s32 %s75, 1
      %p77 = scmp.gt.s32.totalorder %s76, 0
      %s78 = scalar_select %p77, %s76, 0
      %s79 = smul.u32 %s42, 8
      %s80 = ssub.s32 %s79, 1
      %p81 = scmp.gt.s32.totalorder %s80, 0
      %s82 = scalar_select %p81, %s80, 0
      %s83 = ssub.s32 %s34, %s46
      %s84 = ssub.s32 %s78, %s82
      %s85 = sor.u32 %s83, %s84
      %p86 = scmp.eq.s32.totalorder %s85, 0
      %s88 = sadd.s32 %s87, 1
      %s89 = scalar_select %p86, %s87, %s88
      %p92 = pneg %p86
      %p93 = scmp.eq.s32.totalorder %s27, 3
      %p94 = por %p92, %p93
      %p95 = scmp.ne.s32.totalorder %s87, %s90
      %p96 = scmp.eq.s32.totalorder %s27, 0
      %p97 = por %p95, %p96
      %p98 = scmp.ne.s32.totalorder %s87, %s90
      %p99 = scmp.eq.s32.totalorder %s32, 3
      %p100 = por %p98, %p99
      %p101 = scmp.ne.s32.totalorder %s90, %s91
      %p102 = scmp.eq.s32.totalorder %s32, 0
      %p103 = por %p101, %p102
      %p104 = scmp.ne.s32.totalorder %s90, %s91
      %p105 = scmp.eq.s32.totalorder %s33, 3
      %p106 = por %p104, %p105
      %p108 = scmp.ne.s32.totalorder %s91, %s107
      %p109 = scmp.eq.s32.totalorder %s33, 0
      %p110 = por %p108, %p109
      %s111 = sadd.s32 %s35, 1
      %s112 = smul.u32 %s111, 8
      %p113 = scmp.lt.s32.totalorder %s112, 15
      %s114 = scalar_select %p113, %s112, 15
      %s115 = sadd.s32 %s42, 1
      %s116 = smul.u32 %s115, 8
      %p117 = scmp.lt.s32.totalorder %s116, 15
      %s118 = scalar_select %p117, %s116, 15
      %s119 = ssub.s32 %s34, %s46
      %s120 = ssub.s32 %s114, %s118
      %s121 = sor.u32 %s119, %s120
      %p122 = scmp.eq.s32.totalorder %s121, 0
      %s124 = sadd.s32 %s123, 1
      %s125 = scalar_select %p122, %s123, %s124
      %p128 = pneg %p122
      %p129 = scmp.eq.s32.totalorder %s27, 3
      %p130 = por %p128, %p129
      %p131 = scmp.ne.s32.totalorder %s123, %s126
      %p132 = scmp.eq.s32.totalorder %s27, 0
      %p133 = por %p131, %p132
      %p134 = scmp.ne.s32.totalorder %s123, %s126
      %p135 = scmp.eq.s32.totalorder %s32, 3
      %p136 = por %p134, %p135
      %p137 = scmp.ne.s32.totalorder %s126, %s127
      %p138 = scmp.eq.s32.totalorder %s32, 0
      %p139 = por %p137, %p138
      %p140 = scmp.ne.s32.totalorder %s126, %s127
      %p141 = scmp.eq.s32.totalorder %s33, 3
      %p142 = por %p140, %p141
      %p144 = scmp.ne.s32.totalorder %s127, %s143
      %p145 = scmp.eq.s32.totalorder %s33, 0
      %p146 = por %p144, %p145
      %s148 = sadd.s32 %s147, 1
      %p151 = scmp.eq.s32.totalorder %s27, 3
      %p152 = scmp.ne.s32.totalorder %s147, %s149
      %p153 = scmp.eq.s32.totalorder %s27, 0
      %p154 = por %p152, %p153
      %p155 = scmp.ne.s32.totalorder %s147, %s149
      %p156 = scmp.eq.s32.totalorder %s32, 3
      %p157 = por %p155, %p156
      %p158 = scmp.ne.s32.totalorder %s149, %s150
      %p159 = scmp.eq.s32.totalorder %s32, 0
      %p160 = por %p158, %p159
      %p161 = scmp.ne.s32.totalorder %s149, %s150
      %p162 = scmp.eq.s32.totalorder %s33, 3
      %p163 = por %p161, %p162
      %p165 = scmp.ne.s32.totalorder %s150, %s164
      %p166 = scmp.eq.s32.totalorder %s33, 0
      %p167 = por %p165, %p166
      %s169 = sadd.s32 %s168, 1
      %p172 = scmp.eq.s32.totalorder %s27, 3
      %p173 = scmp.ne.s32.totalorder %s168, %s170
      %p174 = scmp.eq.s32.totalorder %s27, 0
      %p175 = por %p173, %p174
      %p176 = scmp.ne.s32.totalorder %s168, %s170
      %p177 = scmp.eq.s32.totalorder %s32, 3
      %p178 = por %p176, %p177
      %p179 = scmp.ne.s32.totalorder %s170, %s171
      %p180 = scmp.eq.s32.totalorder %s32, 0
      %p181 = por %p179, %p180
      %p182 = scmp.ne.s32.totalorder %s170, %s171
      %p183 = scmp.eq.s32.totalorder %s33, 3
      %p184 = por %p182, %p183
      %p186 = scmp.ne.s32.totalorder %s171, %s185
      %p187 = scmp.eq.s32.totalorder %s33, 0
      %p188 = por %p186, %p187
      %s190 = sadd.s32 %s189, 1
      %p193 = scmp.eq.s32.totalorder %s27, 3
      %p194 = scmp.ne.s32.totalorder %s189, %s191
      %p195 = scmp.eq.s32.totalorder %s27, 0
      %p196 = por %p194, %p195
      %p197 = scmp.ne.s32.totalorder %s189, %s191
      %p198 = scmp.eq.s32.totalorder %s32, 3
      %p199 = por %p197, %p198
      %p200 = scmp.ne.s32.totalorder %s191, %s192
      %p201 = scmp.eq.s32.totalorder %s32, 0
      %p202 = por %p200, %p201
      %p203 = scmp.ne.s32.totalorder %s191, %s192
      %p204 = scmp.eq.s32.totalorder %s33, 3
      %p205 = por %p203, %p204
      %p207 = scmp.ne.s32.totalorder %s192, %s206
      %p208 = scmp.eq.s32.totalorder %s33, 0
      %p209 = por %p207, %p208
      %s211 = sadd.s32 %s210, 1
      %p214 = scmp.eq.s32.totalorder %s27, 3
      %p215 = scmp.ne.s32.totalorder %s210, %s212
      %p216 = scmp.eq.s32.totalorder %s27, 0
      %p217 = por %p215, %p216
      %p218 = scmp.ne.s32.totalorder %s210, %s212
      %p219 = scmp.eq.s32.totalorder %s32, 3
      %p220 = por %p218, %p219
      %p221 = scmp.ne.s32.totalorder %s212, %s213
      %p222 = scmp.eq.s32.totalorder %s32, 0
      %p223 = por %p221, %p222
      %p224 = scmp.ne.s32.totalorder %s212, %s213
      %p225 = scmp.eq.s32.totalorder %s33, 3
      %p226 = por %p224, %p225
      %p228 = scmp.ne.s32.totalorder %s213, %s227
      %p229 = scmp.eq.s32.totalorder %s33, 0
      %p230 = por %p228, %p229
      %s232 = sadd.s32 %s231, 1
      %p235 = scmp.eq.s32.totalorder %s27, 3
      %p236 = scmp.ne.s32.totalorder %s231, %s233
      %p237 = scmp.eq.s32.totalorder %s27, 0
      %p238 = por %p236, %p237
      %p239 = scmp.ne.s32.totalorder %s231, %s233
      %p240 = scmp.eq.s32.totalorder %s32, 3
      %p241 = por %p239, %p240
      %p242 = scmp.ne.s32.totalorder %s233, %s234
      %p243 = scmp.eq.s32.totalorder %s32, 0
      %p244 = por %p242, %p243
      %p245 = scmp.ne.s32.totalorder %s233, %s234
      %p246 = scmp.eq.s32.totalorder %s33, 3
      %p247 = por %p245, %p246
      %p249 = scmp.ne.s32.totalorder %s234, %s248
      %p250 = scmp.eq.s32.totalorder %s33, 0
      %p251 = por %p249, %p250
      %s253 = sadd.s32 %s252, 1
      %p256 = scmp.eq.s32.totalorder %s27, 3
      %p257 = scmp.ne.s32.totalorder %s252, %s254
      %p258 = scmp.eq.s32.totalorder %s27, 0
      %p259 = por %p257, %p258
      %p260 = scmp.ne.s32.totalorder %s252, %s254
      %p261 = scmp.eq.s32.totalorder %s32, 3
      %p262 = por %p260, %p261
      %p263 = scmp.ne.s32.totalorder %s254, %s255
      %p264 = scmp.eq.s32.totalorder %s32, 0
      %p265 = por %p263, %p264
      %p266 = scmp.ne.s32.totalorder %s254, %s255
      %p267 = scmp.eq.s32.totalorder %s33, 3
      %p268 = por %p266, %p267
      %p270 = scmp.ne.s32.totalorder %s255, %s269
      %p271 = scmp.eq.s32.totalorder %s33, 0
      %p272 = por %p270, %p271
      %s274 = sadd.s32 %s273, 1
      %p277 = scmp.eq.s32.totalorder %s27, 3
      %p278 = scmp.ne.s32.totalorder %s273, %s275
      %p279 = scmp.eq.s32.totalorder %s27, 0
      %p280 = por %p278, %p279
      %p281 = scmp.ne.s32.totalorder %s273, %s275
      %p282 = scmp.eq.s32.totalorder %s32, 3
      %p283 = por %p281, %p282
      %p284 = scmp.ne.s32.totalorder %s275, %s276
      %p285 = scmp.eq.s32.totalorder %s32, 0
      %p286 = por %p284, %p285
      %p287 = scmp.ne.s32.totalorder %s275, %s276
      %p288 = scmp.eq.s32.totalorder %s33, 3
      %p289 = por %p287, %p288
      %p291 = scmp.ne.s32.totalorder %s276, %s290
      %p292 = scmp.eq.s32.totalorder %s33, 0
      %p293 = por %p291, %p292
      %s295 = sadd.s32 %s294, 1
      %p298 = scmp.eq.s32.totalorder %s27, 3
      %p299 = scmp.ne.s32.totalorder %s294, %s296
      %p300 = scmp.eq.s32.totalorder %s27, 0
      %p301 = por %p299, %p300
      %p302 = scmp.ne.s32.totalorder %s294, %s296
      %p303 = scmp.eq.s32.totalorder %s32, 3
      %p304 = por %p302, %p303
      %p305 = scmp.ne.s32.totalorder %s296, %s297
      %p306 = scmp.eq.s32.totalorder %s32, 0
      %p307 = por %p305, %p306
      %p308 = scmp.ne.s32.totalorder %s296, %s297
      %p309 = scmp.eq.s32.totalorder %s33, 3
      %p310 = por %p308, %p309
      %p312 = scmp.ne.s32.totalorder %s297, %s311
      %p313 = scmp.eq.s32.totalorder %s33, 0
      %p314 = por %p312, %p313
      %s316 = sadd.s32 %s315, 1
      %p319 = scmp.eq.s32.totalorder %s27, 3
      %p320 = scmp.ne.s32.totalorder %s315, %s317
      %p321 = scmp.eq.s32.totalorder %s27, 0
      %p322 = por %p320, %p321
      %p323 = scmp.ne.s32.totalorder %s315, %s317
      %p324 = scmp.eq.s32.totalorder %s32, 3
      %p325 = por %p323, %p324
      %p326 = scmp.ne.s32.totalorder %s317, %s318
      %p327 = scmp.eq.s32.totalorder %s32, 0
      %p328 = por %p326, %p327
      %p329 = scmp.ne.s32.totalorder %s317, %s318
      %p330 = scmp.eq.s32.totalorder %s33, 3
      %p331 = por %p329, %p330
      %p333 = scmp.ne.s32.totalorder %s318, %s332
      %p334 = scmp.eq.s32.totalorder %s33, 0
      %p335 = por %p333, %p334
      %s336 = ssub.s32 %s34, %s46
      %s337 = ssub.s32 %s35, %s42
      %s338 = sor.u32 %s336, %s337
      %p339 = scmp.eq.s32.totalorder %s338, 0
      %s341 = sadd.s32 %s340, 1
      %s342 = scalar_select %p339, %s340, %s341
      %p345 = pneg %p339
      %p346 = scmp.eq.s32.totalorder %s27, 3
      %p347 = por %p345, %p346
      %p348 = scmp.ne.s32.totalorder %s340, %s343
      %p349 = scmp.eq.s32.totalorder %s27, 0
      %p350 = por %p348, %p349
      %p351 = scmp.ne.s32.totalorder %s340, %s343
      %p352 = scmp.eq.s32.totalorder %s32, 3
      %p353 = por %p351, %p352
      %p354 = scmp.ne.s32.totalorder %s343, %s344
      %p355 = scmp.eq.s32.totalorder %s32, 0
      %p356 = por %p354, %p355
      %p357 = scmp.ne.s32.totalorder %s343, %s344
      %p358 = scmp.eq.s32.totalorder %s33, 3
      %p359 = por %p357, %p358
      %p361 = scmp.ne.s32.totalorder %s344, %s360
      %p362 = scmp.eq.s32.totalorder %s33, 0
      %p363 = por %p361, %p362
      %p364 = scmp.le.s32.totalorder 1, %s27
      %p365 = scmp.lt.s32.totalorder %s27, 5
      %p366 = pnand %p364, %p365
      %p367 = pneg %p366
      // Predicated region
      $region9: #{tpu_custom_call.1} parent=5 // pred_check
        _
      $region10: #{tpu_custom_call.1} parent=5 // pred_check_branch
        %369 = sbr.rel (%p366) target = $region12
      $region11: #{tpu_custom_call.1} parent=5 // pred_region
        %s370 = ssub.s32 %s27, 1
        // Predicated region
        $region13: #{tpu_custom_call.1} parent=11 // pred_check
          %p371 = pneg %p160
        $region14: #{tpu_custom_call.1} parent=11 // pred_check_branch
          %373 = sbr.rel (%p371) target = $region16
        $region15: #{tpu_custom_call.1} parent=11 // pred_region
          _
        $region16: #{tpu_custom_call.1} parent=11 // pred_fallthru
          _
        // Predicated region
        $region17: #{tpu_custom_call.1} parent=11 // pred_check
          %p374 = pneg %p181
        $region18: #{tpu_custom_call.1} parent=11 // pred_check_branch
          %376 = sbr.rel (%p374) target = $region20
        $region19: #{tpu_custom_call.1} parent=11 // pred_region
          _
        $region20: #{tpu_custom_call.1} parent=11 // pred_fallthru
          _
        // Predicated region
        $region21: #{tpu_custom_call.1} parent=11 // pred_check
          %p377 = pneg %p202
        $region22: #{tpu_custom_call.1} parent=11 // pred_check_branch
          %379 = sbr.rel (%p377) target = $region24
        $region23: #{tpu_custom_call.1} parent=11 // pred_region
          _
        $region24: #{tpu_custom_call.1} parent=11 // pred_fallthru
          _
        // Predicated region
        $region25: #{tpu_custom_call.1} parent=11 // pred_check
          %p380 = pneg %p223
        $region26: #{tpu_custom_call.1} parent=11 // pred_check_branch
          %382 = sbr.rel (%p380) target = $region28
        $region27: #{tpu_custom_call.1} parent=11 // pred_region
          _
        $region28: #{tpu_custom_call.1} parent=11 // pred_fallthru
          _
        // Predicated region
        $region29: #{tpu_custom_call.1} parent=11 // pred_check
          %p383 = pneg %p244
        $region30: #{tpu_custom_call.1} parent=11 // pred_check_branch
          %385 = sbr.rel (%p383) target = $region32
        $region31: #{tpu_custom_call.1} parent=11 // pred_region
          _
        $region32: #{tpu_custom_call.1} parent=11 // pred_fallthru
          _
        // Predicated region
        $region33: #{tpu_custom_call.1} parent=11 // pred_check
          %p386 = pneg %p265
        $region34: #{tpu_custom_call.1} parent=11 // pred_check_branch
          %388 = sbr.rel (%p386) target = $region36
        $region35: #{tpu_custom_call.1} parent=11 // pred_region
          _
        $region36: #{tpu_custom_call.1} parent=11 // pred_fallthru
          _
        // Predicated region
        $region37: #{tpu_custom_call.1} parent=11 // pred_check
          %p389 = pneg %p286
        $region38: #{tpu_custom_call.1} parent=11 // pred_check_branch
          %391 = sbr.rel (%p389) target = $region40
        $region39: #{tpu_custom_call.1} parent=11 // pred_region
          _
        $region40: #{tpu_custom_call.1} parent=11 // pred_fallthru
          _
        // Predicated region
        $region41: #{tpu_custom_call.1} parent=11 // pred_check
          %p392 = pneg %p307
        $region42: #{tpu_custom_call.1} parent=11 // pred_check_branch
          %394 = sbr.rel (%p392) target = $region44
        $region43: #{tpu_custom_call.1} parent=11 // pred_region
          _
        $region44: #{tpu_custom_call.1} parent=11 // pred_fallthru
          _
        // Predicated region
        $region45: #{tpu_custom_call.1} parent=11 // pred_check
          %p395 = pneg %p328
        $region46: #{tpu_custom_call.1} parent=11 // pred_check_branch
          %397 = sbr.rel (%p395) target = $region48
        $region47: #{tpu_custom_call.1} parent=11 // pred_region
          _
        $region48: #{tpu_custom_call.1} parent=11 // pred_fallthru
          _
      $region12: #{tpu_custom_call.1} parent=5 // pred_fallthru
        _
      %p398 = scmp.lt.s32.totalorder %s27, 4
      // Predicated region
      $region49: #{tpu_custom_call.1} parent=5 // pred_check
        %p399 = pneg %p398
      $region50: #{tpu_custom_call.1} parent=5 // pred_check_branch
        %401 = sbr.rel (%p399) target = $region52
      $region51: #{tpu_custom_call.1} parent=5 // pred_region
        // Predicated region
        $region53: #{tpu_custom_call.1} parent=51 // pred_check
          %p402 = pneg %p61
        $region54: #{tpu_custom_call.1} parent=51 // pred_check_branch
          %404 = sbr.rel (%p402) target = $region56
        $region55: #{tpu_custom_call.1} parent=51 // pred_region
          %s405 = sand.u32 %s51, 1
          %s406 = scalar_lea.sflag [#allocation4], %s405
          %s407 = sand.u32 %s51, 1
          %s408 = smul.addr %s407, 128
          %s409 = scalar_lea.vmem [#allocation3], %s408
          %s410 = smul.u32 8, %s35
          %s412 = ssub.s32 2048, 2048
          %413 = vsyncadd %s406, %s412
          %s414 = smul.addr %s410, 2
          %s415 = smul.addr %s34, 32
          %s416 = sadd.s32 %s414, %s415
          %s417 = smul.addr %s416, 128
          %s418 = scalar_lea.hbm %s0, %s417
          %s419 = sshll.u32 %s409, 4
          %s420 = int_to_ptr.vmem [resolvable:$true] %s419
          %425 = dma.hbm_to_vmem [thread:$0]  %s418, 2048, %s420, %s406, 128, 128, 8
        $region56: #{tpu_custom_call.1} parent=51 // pred_fallthru
          _
        // Predicated region
        $region57: #{tpu_custom_call.1} parent=51 // pred_check
          %p426 = pneg %p97
        $region58: #{tpu_custom_call.1} parent=51 // pred_check_branch
          %428 = sbr.rel (%p426) target = $region60
        $region59: #{tpu_custom_call.1} parent=51 // pred_region
          %s429 = sand.u32 %s27, 1
          %s430 = scalar_lea.sflag [#allocation7], %s429
          %s431 = sand.u32 %s87, 1
          %s432 = smul.addr %s431, 16
          %s433 = scalar_lea.vmem [#allocation6], %s432
          %s434 = smul.u32 %s35, 8
          %s435 = ssub.s32 %s434, 1
          %p436 = scmp.gt.s32.totalorder %s435, 0
          %s437 = scalar_select %p436, %s435, 0
          %s439 = ssub.s32 256, 256
          %440 = vsyncadd %s430, %s439
          %s441 = smul.addr %s437, 2
          %s442 = smul.addr %s34, 32
          %s443 = sadd.s32 %s441, %s442
          %s444 = smul.addr %s443, 128
          %s445 = scalar_lea.hbm %s1, %s444
          %s446 = sshll.u32 %s433, 4
          %s447 = int_to_ptr.vmem [resolvable:$true] %s446
          %452 = dma.hbm_to_vmem [thread:$0]  %s445, 256, %s447, %s430, 128, 128, 8
        $region60: #{tpu_custom_call.1} parent=51 // pred_fallthru
          _
        // Predicated region
        $region61: #{tpu_custom_call.1} parent=51 // pred_check
          %p453 = pneg %p133
        $region62: #{tpu_custom_call.1} parent=51 // pred_check_branch
          %455 = sbr.rel (%p453) target = $region64
        $region63: #{tpu_custom_call.1} parent=51 // pred_region
          %s456 = sand.u32 %s27, 1
          %s457 = scalar_lea.sflag [#allocation7], %s456
          %s458 = sand.u32 %s123, 1
          %s459 = smul.addr %s458, 16
          %s460 = scalar_lea.vmem [#allocation8], %s459
          %s461 = sadd.s32 %s35, 1
          %s462 = smul.u32 %s461, 8
          %p463 = scmp.lt.s32.totalorder %s462, 15
          %s464 = scalar_select %p463, %s462, 15
          %s466 = ssub.s32 256, 256
          %467 = vsyncadd %s457, %s466
          %s468 = smul.addr %s464, 2
          %s469 = smul.addr %s34, 32
          %s470 = sadd.s32 %s468, %s469
          %s471 = smul.addr %s470, 128
          %s472 = scalar_lea.hbm %s2, %s471
          %s473 = sshll.u32 %s460, 4
          %s474 = int_to_ptr.vmem [resolvable:$true] %s473
          %479 = dma.hbm_to_vmem [thread:$0]  %s472, 256, %s474, %s457, 128, 128, 8
        $region64: #{tpu_custom_call.1} parent=51 // pred_fallthru
          _
      $region52: #{tpu_custom_call.1} parent=5 // pred_fallthru
        _
      %p480 = scmp.le.s32.totalorder 1, %s27
      %p481 = scmp.lt.s32.totalorder %s27, 5
      %p482 = pnand %p480, %p481
      %p483 = pneg %p482
      // Predicated region
      $region65: #{tpu_custom_call.1} parent=5 // pred_check
        _
      $region66: #{tpu_custom_call.1} parent=5 // pred_check_branch
        %485 = sbr.rel (%p482) target = $region68
      $region67: #{tpu_custom_call.1} parent=5 // pred_region
        %s486 = ssub.s32 %s27, 1
        %s487 = sand.u32 %s54, 1
        %s488 = scalar_lea.sflag [#allocation4], %s487
        %s489 = sand.u32 %s54, 1
        %s490 = smul.addr %s489, 128
        %s491 = scalar_lea.vmem [#allocation3], %s490
        // Predicated region
        $region69: #{tpu_custom_call.1} parent=67 // pred_check
          %p492 = pneg %p67
        $region70: #{tpu_custom_call.1} parent=67 // pred_check_branch
          %494 = sbr.rel (%p492) target = $region72
        $region71: #{tpu_custom_call.1} parent=67 // pred_region
          %495 = dma.done %s488, 2048
        $region72: #{tpu_custom_call.1} parent=67 // pred_fallthru
          _
        %s496 = sand.u32 %s32, 1
        %s497 = scalar_lea.sflag [#allocation7], %s496
        %s498 = sand.u32 %s90, 1
        %s499 = smul.addr %s498, 16
        %s500 = scalar_lea.vmem [#allocation6], %s499
        // Predicated region
        $region73: #{tpu_custom_call.1} parent=67 // pred_check
          %p501 = pneg %p103
        $region74: #{tpu_custom_call.1} parent=67 // pred_check_branch
          %503 = sbr.rel (%p501) target = $region76
        $region75: #{tpu_custom_call.1} parent=67 // pred_region
          %504 = dma.done %s497, 256
        $region76: #{tpu_custom_call.1} parent=67 // pred_fallthru
          _
        %s505 = sand.u32 %s32, 1
        %s506 = scalar_lea.sflag [#allocation7], %s505
        %s507 = sand.u32 %s126, 1
        %s508 = smul.addr %s507, 16
        %s509 = scalar_lea.vmem [#allocation8], %s508
        // Predicated region
        $region77: #{tpu_custom_call.1} parent=67 // pred_check
          %p510 = pneg %p139
        $region78: #{tpu_custom_call.1} parent=67 // pred_check_branch
          %512 = sbr.rel (%p510) target = $region80
        $region79: #{tpu_custom_call.1} parent=67 // pred_region
          %513 = dma.done %s506, 256
        $region80: #{tpu_custom_call.1} parent=67 // pred_fallthru
          _
        %s514 = sand.u32 %s54, 1
        %s515 = scalar_lea.sflag [#allocation4], %s514
        %s516 = sand.u32 %s54, 1
        %s517 = smul.addr %s516, 128
        %s518 = scalar_lea.vmem [#allocation3], %s517
        %p519 = pneg %p67
        %p520 = pneg %p64
        %s521 = sand.u32 %s32, 1
        %s522 = scalar_lea.sflag [#allocation7], %s521
        %s523 = sand.u32 %s90, 1
        %s524 = smul.addr %s523, 16
        %s525 = scalar_lea.vmem [#allocation6], %s524
        %p526 = pneg %p103
        %p527 = pneg %p100
        %s528 = sand.u32 %s32, 1
        %s529 = scalar_lea.sflag [#allocation7], %s528
        %s530 = sand.u32 %s126, 1
        %s531 = smul.addr %s530, 16
        %s532 = scalar_lea.vmem [#allocation8], %s531
        %p533 = pneg %p139
        %p534 = pneg %p136
        %p535 = pneg %p160
        %p536 = pneg %p157
        %p537 = pneg %p181
        %p538 = pneg %p178
        %p539 = pneg %p202
        %p540 = pneg %p199
        %p541 = pneg %p223
        %p542 = pneg %p220
        %p543 = pneg %p244
        %p544 = pneg %p241
        %p545 = pneg %p265
        %p546 = pneg %p262
        %p547 = pneg %p286
        %p548 = pneg %p283
        %p549 = pneg %p307
        %p550 = pneg %p304
        %p551 = pneg %p328
        %p552 = pneg %p325
        %p553 = pneg %p356
        %p554 = pneg %p353
        %s555 = sand.u32 %s343, 1
        %s556 = scalar_lea.sflag [#allocation5], %s555
        %s557 = sand.u32 %s343, 1
        %s558 = smul.addr %s557, 128
        %s559 = scalar_lea.vmem [#allocation9], %s558
        %s560 = smul.u32 8, %s37
        %s561 = smul.u32 %s37, 8
        %s562 = ssub.s32 %s561, 1
        %p563 = scmp.gt.s32.totalorder %s562, 0
        %s564 = scalar_select %p563, %s562, 0
        %s565 = sadd.s32 %s37, 1
        %s566 = smul.u32 %s565, 8
        %p567 = scmp.lt.s32.totalorder %s566, 15
        %s568 = scalar_select %p567, %s566, 15
        %s569 = smul.u32 8, %s37
        %v570 = vld [vmem:[%s491] sm:$0xff]
        %v571 = vld [vmem:[%s491 + $0x8] sm:$0xff]
        %v572 = vld [vmem:[%s491 + $0x10] sm:$0xff]
        %v573 = vld [vmem:[%s491 + $0x18] sm:$0xff]
        %v574 = vld [vmem:[%s491 + $0x20] sm:$0xff]
        %v575 = vld [vmem:[%s491 + $0x28] sm:$0xff]
        %v576 = vld [vmem:[%s491 + $0x30] sm:$0xff]
        %v577 = vld [vmem:[%s491 + $0x38] sm:$0xff]
        %v578 = vld [vmem:[%s491 + $0x40] sm:$0xff]
        %v579 = vld [vmem:[%s491 + $0x48] sm:$0xff]
        %v580 = vld [vmem:[%s491 + $0x50] sm:$0xff]
        %v581 = vld [vmem:[%s491 + $0x58] sm:$0xff]
        %v582 = vld [vmem:[%s491 + $0x60] sm:$0xff]
        %v583 = vld [vmem:[%s491 + $0x68] sm:$0xff]
        %v584 = vld [vmem:[%s491 + $0x70] sm:$0xff]
        %v585 = vld [vmem:[%s491 + $0x78] sm:$0xff]
        %v586 = vld [vmem:[%s3] sm:$0xff]
        %v587 = vld [vmem:[%s3 + $0x8] sm:$0xff]
        %vm588 = vcmask 130048
        %v590 = vsel %vm588, %v570, 0
        %v593 = vsel %vm588, %v571, 0
        %v596 = vsel %vm588, %v572, 0
        %v599 = vsel %vm588, %v573, 0
        %v602 = vsel %vm588, %v574, 0
        %v605 = vsel %vm588, %v575, 0
        %v608 = vsel %vm588, %v576, 0
        %v611 = vsel %vm588, %v577, 0
        %v614 = vsel %vm588, %v578, 0
        %v617 = vsel %vm588, %v579, 0
        %v620 = vsel %vm588, %v580, 0
        %v623 = vsel %vm588, %v581, 0
        %v626 = vsel %vm588, %v582, 0
        %v629 = vsel %vm588, %v583, 0
        %v632 = vsel %vm588, %v584, 0
        %v635 = vsel %vm588, %v585, 0
        %637 = vmatprep.subr.mxu0 0.0
        %638 = vmatpush1.msra.mxu0 %v586
        %639 = vmatprep.subr.mxu0 0.0
        %640 = vmatpush1.msra.mxu0 %v587
        %641 = vmatprep.subr.mxu0 0.0
        %642 = vmatpush1.msra.mxu0 0.0
        %643 = vmatprep.subr.mxu0 0.0
        %644 = vmatpush1.msra.mxu0 0.0
        %645 = vmatprep.subr.mxu0 0.0
        %646 = vmatpush1.msra.mxu0 0.0
        %647 = vmatprep.subr.mxu0 0.0
        %648 = vmatpush1.msra.mxu0 0.0
        %649 = vmatprep.subr.mxu0 0.0
        %650 = vmatpush1.msra.mxu0 0.0
        %651 = vmatprep.subr.mxu0 0.0
        %652 = vmatpush1.msra.mxu0 0.0
        %653 = vmatprep.subr.mxu0 0.0
        %654 = vmatpush1.msra.mxu0 0.0
        %655 = vmatprep.subr.mxu0 0.0
        %656 = vmatpush1.msra.mxu0 0.0
        %657 = vmatprep.subr.mxu0 0.0
        %658 = vmatpush1.msra.mxu0 0.0
        %659 = vmatprep.subr.mxu0 0.0
        %660 = vmatpush1.msra.mxu0 0.0
        %661 = vmatprep.subr.mxu0 0.0
        %662 = vmatpush1.msra.mxu0 0.0
        %663 = vmatprep.subr.mxu0 0.0
        %664 = vmatpush1.msra.mxu0 0.0
        %665 = vmatprep.subr.mxu0 0.0
        %666 = vmatpush1.msra.mxu0 0.0
        %667 = vmatprep.subr.mxu0 0.0
        %668 = vmatpush1.msra.mxu0 0.0
        %669 = vmatprep.subr.mxu0 0.0
        %670 = vmatpush1.msra.mxu0 0.0
        %671 = vmatprep.subr.mxu0 0.0
        %672 = vmatpush1.msra.mxu0 0.0
        %673 = vmatprep.subr.mxu0 0.0
        %674 = vmatpush1.msra.mxu0 0.0
        %675 = vmatprep.subr.mxu0 0.0
        %676 = vmatpush1.msra.mxu0 0.0
        %677 = vmatprep.subr.mxu0 0.0
        %678 = vmatpush1.msra.mxu0 0.0
        %679 = vmatprep.subr.mxu0 0.0
        %680 = vmatpush1.msra.mxu0 0.0
        %681 = vmatprep.subr.mxu0 0.0
        %682 = vmatpush1.msra.mxu0 0.0
        %683 = vmatprep.subr.mxu0 0.0
        %684 = vmatpush1.msra.mxu0 0.0
        %685 = vmatprep.subr.mxu0 0.0
        %686 = vmatpush1.msra.mxu0 0.0
        %687 = vmatprep.subr.mxu0 0.0
        %688 = vmatpush1.msra.mxu0 0.0
        %689 = vmatprep.subr.mxu0 0.0
        %690 = vmatpush1.msra.mxu0 0.0
        %691 = vmatprep.subr.mxu0 0.0
        %692 = vmatpush1.msra.mxu0 0.0
        %693 = vmatprep.subr.mxu0 0.0
        %694 = vmatpush1.msra.mxu0 0.0
        %695 = vmatprep.subr.mxu0 0.0
        %696 = vmatpush1.msra.mxu0 0.0
        %697 = vmatprep.subr.mxu0 0.0
        %698 = vmatpush1.msra.mxu0 0.0
        %699 = vmatprep.subr.mxu0 0.0
        %700 = vmatpush1.msra.mxu0 0.0
        %701 = vmatprep.mubr.f32.mxu0 0.0
        %702 = vmatmul.mubr.f32.gmra.mrb[0].mxu0 %v590
        %v703 = vpop.f32.mrb[0].mxu0
        %v704 = vadd.f32 0.0, %v703
        %v705 = vpop.f32.mrb[0].mxu0
        %706 = vmatprep.mubr.f32.mxu0 0.0
        %707 = vmatmul.mubr.f32.gmra.mrb[0].mxu0 %v593
        %v708 = vpop.f32.mrb[0].mxu0
        %v709 = vadd.f32 0.0, %v708
        %v710 = vpop.f32.mrb[0].mxu0
        %711 = vmatprep.mubr.f32.mxu0 0.0
        %712 = vmatmul.mubr.f32.gmra.mrb[0].mxu0 %v596
        %v713 = vpop.f32.mrb[0].mxu0
        %v714 = vadd.f32 0.0, %v713
        %v715 = vpop.f32.mrb[0].mxu0
        %716 = vmatprep.mubr.f32.mxu0 0.0
        %717 = vmatmul.mubr.f32.gmra.mrb[0].mxu0 %v599
        %v718 = vpop.f32.mrb[0].mxu0
        %v719 = vadd.f32 0.0, %v718
        %v720 = vpop.f32.mrb[0].mxu0
        %721 = vmatprep.mubr.f32.mxu0 0.0
        %722 = vmatmul.mubr.f32.gmra.mrb[0].mxu0 %v602
        %v723 = vpop.f32.mrb[0].mxu0
        %v724 = vadd.f32 0.0, %v723
        %v725 = vpop.f32.mrb[0].mxu0
        %726 = vmatprep.mubr.f32.mxu0 0.0
        %727 = vmatmul.mubr.f32.gmra.mrb[0].mxu0 %v605
        %v728 = vpop.f32.mrb[0].mxu0
        %v729 = vadd.f32 0.0, %v728
        %v730 = vpop.f32.mrb[0].mxu0
        %731 = vmatprep.mubr.f32.mxu0 0.0
        %732 = vmatmul.mubr.f32.gmra.mrb[0].mxu0 %v608
        %v733 = vpop.f32.mrb[0].mxu0
        %v734 = vadd.f32 0.0, %v733
        %v735 = vpop.f32.mrb[0].mxu0
        %736 = vmatprep.mubr.f32.mxu0 0.0
        %737 = vmatmul.mubr.f32.gmra.mrb[0].mxu0 %v611
        %v738 = vpop.f32.mrb[0].mxu0
        %v739 = vadd.f32 0.0, %v738
        %v740 = vpop.f32.mrb[0].mxu0
        %741 = vmatprep.mubr.f32.mxu0 0.0
        %742 = vmatmul.mubr.f32.gmra.mrb[0].mxu0 %v614
        %v743 = vpop.f32.mrb[0].mxu0
        %v744 = vadd.f32 0.0, %v743
        %v745 = vpop.f32.mrb[0].mxu0
        %746 = vmatprep.mubr.f32.mxu0 0.0
        %747 = vmatmul.mubr.f32.gmra.mrb[0].mxu0 %v617
        %v748 = vpop.f32.mrb[0].mxu0
        %v749 = vadd.f32 0.0, %v748
        %v750 = vpop.f32.mrb[0].mxu0
        %751 = vmatprep.mubr.f32.mxu0 0.0
        %752 = vmatmul.mubr.f32.gmra.mrb[0].mxu0 %v620
        %v753 = vpop.f32.mrb[0].mxu0
        %v754 = vadd.f32 0.0, %v753
        %v755 = vpop.f32.mrb[0].mxu0
        %756 = vmatprep.mubr.f32.mxu0 0.0
        %757 = vmatmul.mubr.f32.gmra.mrb[0].mxu0 %v623
        %v758 = vpop.f32.mrb[0].mxu0
        %v759 = vadd.f32 0.0, %v758
        %v760 = vpop.f32.mrb[0].mxu0
        %761 = vmatprep.mubr.f32.mxu0 0.0
        %762 = vmatmul.mubr.f32.gmra.mrb[0].mxu0 %v626
        %v763 = vpop.f32.mrb[0].mxu0
        %v764 = vadd.f32 0.0, %v763
        %v765 = vpop.f32.mrb[0].mxu0
        %766 = vmatprep.mubr.f32.mxu0 0.0
        %767 = vmatmul.mubr.f32.gmra.mrb[0].mxu0 %v629
        %v768 = vpop.f32.mrb[0].mxu0
        %v769 = vadd.f32 0.0, %v768
        %v770 = vpop.f32.mrb[0].mxu0
        %771 = vmatprep.mubr.f32.mxu0 0.0
        %772 = vmatmul.mubr.f32.gmra.mrb[0].mxu0 %v632
        %v773 = vpop.f32.mrb[0].mxu0
        %v774 = vadd.f32 0.0, %v773
        %v775 = vpop.f32.mrb[0].mxu0
        %776 = vmatprep.mubr.f32.mxu0 0.0
        %777 = vmatmul.mubr.f32.gmra.mrb[0].mxu0 %v635
        %v778 = vpop.f32.mrb[0].mxu0
        %v779 = vadd.f32 0.0, %v778
        %v780 = vpop.f32.mrb[0].mxu0
        %781 = vdwg.mxu0
        %v782 = vld [vmem:[%s4] sm:$0x1]
        %v784 = vlaneseq
        %v785 = vshrl.u32 %v784, 7
        %v786 = vsub.s32 0, %v785
        %v787 = vrot.slane %v782, %v786
        %v789 = vmul.f32 %v704, %v787
        %v790 = vmul.f32 %v709, %v787
        %v791 = vmul.f32 %v714, %v787
        %v792 = vmul.f32 %v719, %v787
        %v793 = vmul.f32 %v724, %v787
        %v794 = vmul.f32 %v729, %v787
        %v795 = vmul.f32 %v734, %v787
        %v796 = vmul.f32 %v739, %v787
        %v797 = vmul.f32 %v744, %v787
        %v798 = vmul.f32 %v749, %v787
        %v799 = vmul.f32 %v754, %v787
        %v800 = vmul.f32 %v759, %v787
        %v801 = vmul.f32 %v764, %v787
        %v802 = vmul.f32 %v769, %v787
        %v803 = vmul.f32 %v774, %v787
        %v804 = vmul.f32 %v779, %v787
        %v805 = vld [vmem:[%s5] sm:$0x1]
        %v807 = vlaneseq
        %v808 = vshrl.u32 %v807, 7
        %v809 = vsub.s32 0, %v808
        %v810 = vrot.slane %v805, %v809
        %v812 = vadd.f32 %v789, %v810
        %v813 = vadd.f32 %v790, %v810
        %v814 = vadd.f32 %v791, %v810
        %v815 = vadd.f32 %v792, %v810
        %v816 = vadd.f32 %v793, %v810
        %v817 = vadd.f32 %v794, %v810
        %v818 = vadd.f32 %v795, %v810
        %v819 = vadd.f32 %v796, %v810
        %v820 = vadd.f32 %v797, %v810
        %v821 = vadd.f32 %v798, %v810
        %v822 = vadd.f32 %v799, %v810
        %v823 = vadd.f32 %v800, %v810
        %v824 = vadd.f32 %v801, %v810
        %v825 = vadd.f32 %v802, %v810
        %v826 = vadd.f32 %v803, %v810
        %v827 = vadd.f32 %v804, %v810
        %v828 = vmax.f32 %v812, 0.0
        %v829 = vmax.f32 %v813, 0.0
        %v830 = vmax.f32 %v814, 0.0
        %v831 = vmax.f32 %v815, 0.0
        %v832 = vmax.f32 %v816, 0.0
        %v833 = vmax.f32 %v817, 0.0
        %v834 = vmax.f32 %v818, 0.0
        %v835 = vmax.f32 %v819, 0.0
        %v836 = vmax.f32 %v820, 0.0
        %v837 = vmax.f32 %v821, 0.0
        %v838 = vmax.f32 %v822, 0.0
        %v839 = vmax.f32 %v823, 0.0
        %v840 = vmax.f32 %v824, 0.0
        %v841 = vmax.f32 %v825, 0.0
        %v842 = vmax.f32 %v826, 0.0
        %v843 = vmax.f32 %v827, 0.0
        %v844 = vld [vmem:[%s500] sm:$0xff]
        %v845 = vld [vmem:[%s500 + $0x8] sm:$0xff]
        %v846 = vld [vmem:[%s509] sm:$0xff]
        %v847 = vld [vmem:[%s509 + $0x8] sm:$0xff]
        %p848 = scmp.gt.s32.totalorder %s37, 0
        %v850 = vsel %vm588, %v844, 0
        %v853 = vsel %vm588, %v845, 0
        %855 = vmatprep.subr.mxu0 0.0
        %856 = vmatpush1.msra.mxu0 %v586
        %857 = vmatprep.subr.mxu0 0.0
        %858 = vmatpush1.msra.mxu0 %v587
        %859 = vmatprep.subr.mxu0 0.0
        %860 = vmatpush1.msra.mxu0 0.0
        %861 = vmatprep.subr.mxu0 0.0
        %862 = vmatpush1.msra.mxu0 0.0
        %863 = vmatprep.subr.mxu0 0.0
        %864 = vmatpush1.msra.mxu0 0.0
        %865 = vmatprep.subr.mxu0 0.0
        %866 = vmatpush1.msra.mxu0 0.0
        %867 = vmatprep.subr.mxu0 0.0
        %868 = vmatpush1.msra.mxu0 0.0
        %869 = vmatprep.subr.mxu0 0.0
        %870 = vmatpush1.msra.mxu0 0.0
        %871 = vmatprep.subr.mxu0 0.0
        %872 = vmatpush1.msra.mxu0 0.0
        %873 = vmatprep.subr.mxu0 0.0
        %874 = vmatpush1.msra.mxu0 0.0
        %875 = vmatprep.subr.mxu0 0.0
        %876 = vmatpush1.msra.mxu0 0.0
        %877 = vmatprep.subr.mxu0 0.0
        %878 = vmatpush1.msra.mxu0 0.0
        %879 = vmatprep.subr.mxu0 0.0
        %880 = vmatpush1.msra.mxu0 0.0
        %881 = vmatprep.subr.mxu0 0.0
        %882 = vmatpush1.msra.mxu0 0.0
        %883 = vmatprep.subr.mxu0 0.0
        %884 = vmatpush1.msra.mxu0 0.0
        %885 = vmatprep.subr.mxu0 0.0
        %886 = vmatpush1.msra.mxu0 0.0
        %887 = vmatprep.subr.mxu0 0.0
        %888 = vmatpush1.msra.mxu0 0.0
        %889 = vmatprep.subr.mxu0 0.0
        %890 = vmatpush1.msra.mxu0 0.0
        %891 = vmatprep.subr.mxu0 0.0
        %892 = vmatpush1.msra.mxu0 0.0
        %893 = vmatprep.subr.mxu0 0.0
        %894 = vmatpush1.msra.mxu0 0.0
        %895 = vmatprep.subr.mxu0 0.0
        %896 = vmatpush1.msra.mxu0 0.0
        %897 = vmatprep.subr.mxu0 0.0
        %898 = vmatpush1.msra.mxu0 0.0
        %899 = vmatprep.subr.mxu0 0.0
        %900 = vmatpush1.msra.mxu0 0.0
        %901 = vmatprep.subr.mxu0 0.0
        %902 = vmatpush1.msra.mxu0 0.0
        %903 = vmatprep.subr.mxu0 0.0
        %904 = vmatpush1.msra.mxu0 0.0
        %905 = vmatprep.subr.mxu0 0.0
        %906 = vmatpush1.msra.mxu0 0.0
        %907 = vmatprep.subr.mxu0 0.0
        %908 = vmatpush1.msra.mxu0 0.0
        %909 = vmatprep.subr.mxu0 0.0
        %910 = vmatpush1.msra.mxu0 0.0
        %911 = vmatprep.subr.mxu0 0.0
        %912 = vmatpush1.msra.mxu0 0.0
        %913 = vmatprep.subr.mxu0 0.0
        %914 = vmatpush1.msra.mxu0 0.0
        %915 = vmatprep.subr.mxu0 0.0
        %916 = vmatpush1.msra.mxu0 0.0
        %917 = vmatprep.subr.mxu0 0.0
        %918 = vmatpush1.msra.mxu0 0.0
        %919 = vmatprep.mubr.f32.mxu0 0.0
        %920 = vmatmul.mubr.f32.gmra.mrb[0].mxu0 %v850
        %v921 = vpop.f32.mrb[0].mxu0
        %v922 = vadd.f32 0.0, %v921
        %v923 = vpop.f32.mrb[0].mxu0
        %924 = vmatprep.mubr.f32.mxu0 0.0
        %925 = vmatmul.mubr.f32.gmra.mrb[0].mxu0 %v853
        %v926 = vpop.f32.mrb[0].mxu0
        %v927 = vadd.f32 0.0, %v926
        %v928 = vpop.f32.mrb[0].mxu0
        %929 = vdwg.mxu0
        %v930 = vmul.f32 %v922, %v787
        %v931 = vmul.f32 %v927, %v787
        %v932 = vadd.f32 %v930, %v810
        %v933 = vadd.f32 %v931, %v810
        %v934 = vmax.f32 %v932, 0.0
        %v935 = vmax.f32 %v933, 0.0
        %s936 = scalar_select %p848, 1, 0
        %v937 = vstv %s936
        %vm938 = vcmp.eq.s32.totalorder %v937, 1
        %v939 = vsel %vm938, %v934, 0.0
        %v940 = vsel %vm938, %v935, 0.0
        %p941 = scmp.lt.s32.totalorder %s37, 1
        %v943 = vsel %vm588, %v846, 0
        %v946 = vsel %vm588, %v847, 0
        %948 = vmatprep.subr.mxu0 0.0
        %949 = vmatpush1.msra.mxu0 %v586
        %950 = vmatprep.subr.mxu0 0.0
        %951 = vmatpush1.msra.mxu0 %v587
        %952 = vmatprep.subr.mxu0 0.0
        %953 = vmatpush1.msra.mxu0 0.0
        %954 = vmatprep.subr.mxu0 0.0
        %955 = vmatpush1.msra.mxu0 0.0
        %956 = vmatprep.subr.mxu0 0.0
        %957 = vmatpush1.msra.mxu0 0.0
        %958 = vmatprep.subr.mxu0 0.0
        %959 = vmatpush1.msra.mxu0 0.0
        %960 = vmatprep.subr.mxu0 0.0
        %961 = vmatpush1.msra.mxu0 0.0
        %962 = vmatprep.subr.mxu0 0.0
        %963 = vmatpush1.msra.mxu0 0.0
        %964 = vmatprep.subr.mxu0 0.0
        %965 = vmatpush1.msra.mxu0 0.0
        %966 = vmatprep.subr.mxu0 0.0
        %967 = vmatpush1.msra.mxu0 0.0
        %968 = vmatprep.subr.mxu0 0.0
        %969 = vmatpush1.msra.mxu0 0.0
        %970 = vmatprep.subr.mxu0 0.0
        %971 = vmatpush1.msra.mxu0 0.0
        %972 = vmatprep.subr.mxu0 0.0
        %973 = vmatpush1.msra.mxu0 0.0
        %974 = vmatprep.subr.mxu0 0.0
        %975 = vmatpush1.msra.mxu0 0.0
        %976 = vmatprep.subr.mxu0 0.0
        %977 = vmatpush1.msra.mxu0 0.0
        %978 = vmatprep.subr.mxu0 0.0
        %979 = vmatpush1.msra.mxu0 0.0
        %980 = vmatprep.subr.mxu0 0.0
        %981 = vmatpush1.msra.mxu0 0.0
        %982 = vmatprep.subr.mxu0 0.0
        %983 = vmatpush1.msra.mxu0 0.0
        %984 = vmatprep.subr.mxu0 0.0
        %985 = vmatpush1.msra.mxu0 0.0
        %986 = vmatprep.subr.mxu0 0.0
        %987 = vmatpush1.msra.mxu0 0.0
        %988 = vmatprep.subr.mxu0 0.0
        %989 = vmatpush1.msra.mxu0 0.0
        %990 = vmatprep.subr.mxu0 0.0
        %991 = vmatpush1.msra.mxu0 0.0
        %992 = vmatprep.subr.mxu0 0.0
        %993 = vmatpush1.msra.mxu0 0.0
        %994 = vmatprep.subr.mxu0 0.0
        %995 = vmatpush1.msra.mxu0 0.0
        %996 = vmatprep.subr.mxu0 0.0
        %997 = vmatpush1.msra.mxu0 0.0
        %998 = vmatprep.subr.mxu0 0.0
        %999 = vmatpush1.msra.mxu0 0.0
        %1000 = vmatprep.subr.mxu0 0.0
        %1001 = vmatpush1.msra.mxu0 0.0
        %1002 = vmatprep.subr.mxu0 0.0
        %1003 = vmatpush1.msra.mxu0 0.0
        %1004 = vmatprep.subr.mxu0 0.0
        %1005 = vmatpush1.msra.mxu0 0.0
        %1006 = vmatprep.subr.mxu0 0.0
        %1007 = vmatpush1.msra.mxu0 0.0
        %1008 = vmatprep.subr.mxu0 0.0
        %1009 = vmatpush1.msra.mxu0 0.0
        %1010 = vmatprep.subr.mxu0 0.0
        %1011 = vmatpush1.msra.mxu0 0.0
        %1012 = vmatprep.mubr.f32.mxu0 0.0
        %1013 = vmatmul.mubr.f32.gmra.mrb[0].mxu0 %v943
        %v1014 = vpop.f32.mrb[0].mxu0
        %v1015 = vadd.f32 0.0, %v1014
        %v1016 = vpop.f32.mrb[0].mxu0
        %1017 = vmatprep.mubr.f32.mxu0 0.0
        %1018 = vmatmul.mubr.f32.gmra.mrb[0].mxu0 %v946
        %v1019 = vpop.f32.mrb[0].mxu0
        %v1020 = vadd.f32 0.0, %v1019
        %v1021 = vpop.f32.mrb[0].mxu0
        %1022 = vdwg.mxu0
        %v1023 = vmul.f32 %v1015, %v787
        %v1024 = vmul.f32 %v1020, %v787
        %v1025 = vadd.f32 %v1023, %v810
        %v1026 = vadd.f32 %v1024, %v810
        %v1027 = vmax.f32 %v1025, 0.0
        %v1028 = vmax.f32 %v1026, 0.0
        %s1029 = scalar_select %p941, 1, 0
        %v1030 = vstv %s1029
        %vm1031 = vcmp.eq.s32.totalorder %v1030, 1
        %v1032 = vsel %vm1031, %v1027, 0.0
        %v1033 = vsel %vm1031, %v1028, 0.0
        %vm1034 = vcmask 31744
        %1035 = vst.msk [vmem:[#allocation2 + $0x8] sm:$0xff] %vm1034, %v939
        %1036 = vst.msk [vmem:[#allocation2 + $0x10] sm:$0xff] %vm1034, %v940
        %1037 = vst.msk [vmem:[#allocation2 + $0x18] sm:$0xff] %vm1034, %v828
        %1038 = vst.msk [vmem:[#allocation2 + $0x20] sm:$0xff] %vm1034, %v829
        %1039 = vst.msk [vmem:[#allocation2 + $0x28] sm:$0xff] %vm1034, %v830
        %1040 = vst.msk [vmem:[#allocation2 + $0x30] sm:$0xff] %vm1034, %v831
        %1041 = vst.msk [vmem:[#allocation2 + $0x38] sm:$0xff] %vm1034, %v832
        %1042 = vst.msk [vmem:[#allocation2 + $0x40] sm:$0xff] %vm1034, %v833
        %1043 = vst.msk [vmem:[#allocation2 + $0x48] sm:$0xff] %vm1034, %v834
        %1044 = vst.msk [vmem:[#allocation2 + $0x50] sm:$0xff] %vm1034, %v835
        %1045 = vst.msk [vmem:[#allocation2 + $0x58] sm:$0xff] %vm1034, %v836
        %1046 = vst.msk [vmem:[#allocation2 + $0x60] sm:$0xff] %vm1034, %v837
        %1047 = vst.msk [vmem:[#allocation2 + $0x68] sm:$0xff] %vm1034, %v838
        %1048 = vst.msk [vmem:[#allocation2 + $0x70] sm:$0xff] %vm1034, %v839
        %1049 = vst.msk [vmem:[#allocation2 + $0x78] sm:$0xff] %vm1034, %v840
        %1050 = vst.msk [vmem:[#allocation2 + $0x80] sm:$0xff] %vm1034, %v841
        %1051 = vst.msk [vmem:[#allocation2 + $0x88] sm:$0xff] %vm1034, %v842
        %1052 = vst.msk [vmem:[#allocation2 + $0x90] sm:$0xff] %vm1034, %v843
        %1053 = vst.msk [vmem:[#allocation2 + $0x98] sm:$0xff] %vm1034, %v1032
        %1054 = vst.msk [vmem:[#allocation2 + $0xa0] sm:$0xff] %vm1034, %v1033
        %v1055 = vlaneseq
        %v1056 = vshrl.u32 %v1055, 7
        %v1057 = vadd.s32 %v1056, 8
        %v1058 = vadd.s32 %v1056, 16
        %v1059 = vadd.s32 %v1056, 24
        %v1060 = vadd.s32 %v1056, 32
        %v1061 = vadd.s32 %v1056, 40
        %v1062 = vadd.s32 %v1056, 48
        %v1063 = vadd.s32 %v1056, 56
        %v1064 = vadd.s32 %v1056, 64
        %v1065 = vadd.s32 %v1056, 72
        %v1066 = vadd.s32 %v1056, 80
        %v1067 = vadd.s32 %v1056, 88
        %v1068 = vadd.s32 %v1056, 96
        %v1069 = vadd.s32 %v1056, 104
        %v1070 = vadd.s32 %v1056, 112
        %v1071 = vadd.s32 %v1056, 120
        %vm1072 = vcmp.lt.s32.totalorder %v1056, 0
        %v1073 = vsub.s32 0, %v1056
        %v1074 = vsel %vm1072, %v1073, %v1056
        %v1075 = vshrl.u32 %v1074, 4
        %v1076 = vand.u32 %v1074, 15
        %v1077 = vsub.s32 0, %v1076
        %v1078 = vsel %vm1072, %v1077, %v1076
        %vm1079 = vcmp.lt.s32.totalorder %v1057, 0
        %v1080 = vsub.s32 0, %v1057
        %v1081 = vsel %vm1079, %v1080, %v1057
        %v1082 = vshrl.u32 %v1081, 4
        %v1083 = vand.u32 %v1081, 15
        %v1084 = vsub.s32 0, %v1083
        %v1085 = vsel %vm1079, %v1084, %v1083
        %vm1086 = vcmp.lt.s32.totalorder %v1058, 0
        %v1087 = vsub.s32 0, %v1058
        %v1088 = vsel %vm1086, %v1087, %v1058
        %v1089 = vshrl.u32 %v1088, 4
        %v1090 = vand.u32 %v1088, 15
        %v1091 = vsub.s32 0, %v1090
        %v1092 = vsel %vm1086, %v1091, %v1090
        %vm1093 = vcmp.lt.s32.totalorder %v1059, 0
        %v1094 = vsub.s32 0, %v1059
        %v1095 = vsel %vm1093, %v1094, %v1059
        %v1096 = vshrl.u32 %v1095, 4
        %v1097 = vand.u32 %v1095, 15
        %v1098 = vsub.s32 0, %v1097
        %v1099 = vsel %vm1093, %v1098, %v1097
        %vm1100 = vcmp.lt.s32.totalorder %v1060, 0
        %v1101 = vsub.s32 0, %v1060
        %v1102 = vsel %vm1100, %v1101, %v1060
        %v1103 = vshrl.u32 %v1102, 4
        %v1104 = vand.u32 %v1102, 15
        %v1105 = vsub.s32 0, %v1104
        %v1106 = vsel %vm1100, %v1105, %v1104
        %vm1107 = vcmp.lt.s32.totalorder %v1061, 0
        %v1108 = vsub.s32 0, %v1061
        %v1109 = vsel %vm1107, %v1108, %v1061
        %v1110 = vshrl.u32 %v1109, 4
        %v1111 = vand.u32 %v1109, 15
        %v1112 = vsub.s32 0, %v1111
        %v1113 = vsel %vm1107, %v1112, %v1111
        %vm1114 = vcmp.lt.s32.totalorder %v1062, 0
        %v1115 = vsub.s32 0, %v1062
        %v1116 = vsel %vm1114, %v1115, %v1062
        %v1117 = vshrl.u32 %v1116, 4
        %v1118 = vand.u32 %v1116, 15
        %v1119 = vsub.s32 0, %v1118
        %v1120 = vsel %vm1114, %v1119, %v1118
        %vm1121 = vcmp.lt.s32.totalorder %v1063, 0
        %v1122 = vsub.s32 0, %v1063
        %v1123 = vsel %vm1121, %v1122, %v1063
        %v1124 = vshrl.u32 %v1123, 4
        %v1125 = vand.u32 %v1123, 15
        %v1126 = vsub.s32 0, %v1125
        %v1127 = vsel %vm1121, %v1126, %v1125
        %vm1128 = vcmp.lt.s32.totalorder %v1064, 0
        %v1129 = vsub.s32 0, %v1064
        %v1130 = vsel %vm1128, %v1129, %v1064
        %v1131 = vshrl.u32 %v1130, 4
        %v1132 = vand.u32 %v1130, 15
        %v1133 = vsub.s32 0, %v1132
        %v1134 = vsel %vm1128, %v1133, %v1132
        %vm1135 = vcmp.lt.s32.totalorder %v1065, 0
        %v1136 = vsub.s32 0, %v1065
        %v1137 = vsel %vm1135, %v1136, %v1065
        %v1138 = vshrl.u32 %v1137, 4
        %v1139 = vand.u32 %v1137, 15
        %v1140 = vsub.s32 0, %v1139
        %v1141 = vsel %vm1135, %v1140, %v1139
        %vm1142 = vcmp.lt.s32.totalorder %v1066, 0
        %v1143 = vsub.s32 0, %v1066
        %v1144 = vsel %vm1142, %v1143, %v1066
        %v1145 = vshrl.u32 %v1144, 4
        %v1146 = vand.u32 %v1144, 15
        %v1147 = vsub.s32 0, %v1146
        %v1148 = vsel %vm1142, %v1147, %v1146
        %vm1149 = vcmp.lt.s32.totalorder %v1067, 0
        %v1150 = vsub.s32 0, %v1067
        %v1151 = vsel %vm1149, %v1150, %v1067
        %v1152 = vshrl.u32 %v1151, 4
        %v1153 = vand.u32 %v1151, 15
        %v1154 = vsub.s32 0, %v1153
        %v1155 = vsel %vm1149, %v1154, %v1153
        %vm1156 = vcmp.lt.s32.totalorder %v1068, 0
        %v1157 = vsub.s32 0, %v1068
        %v1158 = vsel %vm1156, %v1157, %v1068
        %v1159 = vshrl.u32 %v1158, 4
        %v1160 = vand.u32 %v1158, 15
        %v1161 = vsub.s32 0, %v1160
        %v1162 = vsel %vm1156, %v1161, %v1160
        %vm1163 = vcmp.lt.s32.totalorder %v1069, 0
        %v1164 = vsub.s32 0, %v1069
        %v1165 = vsel %vm1163, %v1164, %v1069
        %v1166 = vshrl.u32 %v1165, 4
        %v1167 = vand.u32 %v1165, 15
        %v1168 = vsub.s32 0, %v1167
        %v1169 = vsel %vm1163, %v1168, %v1167
        %vm1170 = vcmp.lt.s32.totalorder %v1070, 0
        %v1171 = vsub.s32 0, %v1070
        %v1172 = vsel %vm1170, %v1171, %v1070
        %v1173 = vshrl.u32 %v1172, 4
        %v1174 = vand.u32 %v1172, 15
        %v1175 = vsub.s32 0, %v1174
        %v1176 = vsel %vm1170, %v1175, %v1174
        %vm1177 = vcmp.lt.s32.totalorder %v1071, 0
        %v1178 = vsub.s32 0, %v1071
        %v1179 = vsel %vm1177, %v1178, %v1071
        %v1180 = vshrl.u32 %v1179, 4
        %v1181 = vand.u32 %v1179, 15
        %v1182 = vsub.s32 0, %v1181
        %v1183 = vsel %vm1177, %v1182, %v1181
        %vm1184 = vcmp.ne.s32.totalorder %v1078, 0
        %vm1185 = vcmp.ne.s32.totalorder %v1085, 0
        %vm1186 = vcmp.ne.s32.totalorder %v1092, 0
        %vm1187 = vcmp.ne.s32.totalorder %v1099, 0
        %vm1188 = vcmp.ne.s32.totalorder %v1106, 0
        %vm1189 = vcmp.ne.s32.totalorder %v1113, 0
        %vm1190 = vcmp.ne.s32.totalorder %v1120, 0
        %vm1191 = vcmp.ne.s32.totalorder %v1127, 0
        %vm1192 = vcmp.ne.s32.totalorder %v1134, 0
        %vm1193 = vcmp.ne.s32.totalorder %v1141, 0
        %vm1194 = vcmp.ne.s32.totalorder %v1148, 0
        %vm1195 = vcmp.ne.s32.totalorder %v1155, 0
        %vm1196 = vcmp.ne.s32.totalorder %v1162, 0
        %vm1197 = vcmp.ne.s32.totalorder %v1169, 0
        %vm1198 = vcmp.ne.s32.totalorder %v1176, 0
        %vm1199 = vcmp.ne.s32.totalorder %v1183, 0
        %vm1200 = vcmp.lt.s32.totalorder %v1078, 0
        %vm1201 = vcmp.lt.s32.totalorder %v1085, 0
        %vm1202 = vcmp.lt.s32.totalorder %v1092, 0
        %vm1203 = vcmp.lt.s32.totalorder %v1099, 0
        %vm1204 = vcmp.lt.s32.totalorder %v1106, 0
        %vm1205 = vcmp.lt.s32.totalorder %v1113, 0
        %vm1206 = vcmp.lt.s32.totalorder %v1120, 0
        %vm1207 = vcmp.lt.s32.totalorder %v1127, 0
        %vm1208 = vcmp.lt.s32.totalorder %v1134, 0
        %vm1209 = vcmp.lt.s32.totalorder %v1141, 0
        %vm1210 = vcmp.lt.s32.totalorder %v1148, 0
        %vm1211 = vcmp.lt.s32.totalorder %v1155, 0
        %vm1212 = vcmp.lt.s32.totalorder %v1162, 0
        %vm1213 = vcmp.lt.s32.totalorder %v1169, 0
        %vm1214 = vcmp.lt.s32.totalorder %v1176, 0
        %vm1215 = vcmp.lt.s32.totalorder %v1183, 0
        %vm1216 = vmand %vm1200, %vm1184
        %vm1217 = vmand %vm1201, %vm1185
        %vm1218 = vmand %vm1202, %vm1186
        %vm1219 = vmand %vm1203, %vm1187
        %vm1220 = vmand %vm1204, %vm1188
        %vm1221 = vmand %vm1205, %vm1189
        %vm1222 = vmand %vm1206, %vm1190
        %vm1223 = vmand %vm1207, %vm1191
        %vm1224 = vmand %vm1208, %vm1192
        %vm1225 = vmand %vm1209, %vm1193
        %vm1226 = vmand %vm1210, %vm1194
        %vm1227 = vmand %vm1211, %vm1195
        %vm1228 = vmand %vm1212, %vm1196
        %vm1229 = vmand %vm1213, %vm1197
        %vm1230 = vmand %vm1214, %vm1198
        %vm1231 = vmand %vm1215, %vm1199
        %v1232 = vadd.s32 %v1078, 16
        %v1233 = vadd.s32 %v1085, 16
        %v1234 = vadd.s32 %v1092, 16
        %v1235 = vadd.s32 %v1099, 16
        %v1236 = vadd.s32 %v1106, 16
        %v1237 = vadd.s32 %v1113, 16
        %v1238 = vadd.s32 %v1120, 16
        %v1239 = vadd.s32 %v1127, 16
        %v1240 = vadd.s32 %v1134, 16
        %v1241 = vadd.s32 %v1141, 16
        %v1242 = vadd.s32 %v1148, 16
        %v1243 = vadd.s32 %v1155, 16
        %v1244 = vadd.s32 %v1162, 16
        %v1245 = vadd.s32 %v1169, 16
        %v1246 = vadd.s32 %v1176, 16
        %v1247 = vadd.s32 %v1183, 16
        %v1248 = vsel %vm1216, %v1232, %v1078
        %v1249 = vsel %vm1217, %v1233, %v1085
        %v1250 = vsel %vm1218, %v1234, %v1092
        %v1251 = vsel %vm1219, %v1235, %v1099
        %v1252 = vsel %vm1220, %v1236, %v1106
        %v1253 = vsel %vm1221, %v1237, %v1113
        %v1254 = vsel %vm1222, %v1238, %v1120
        %v1255 = vsel %vm1223, %v1239, %v1127
        %v1256 = vsel %vm1224, %v1240, %v1134
        %v1257 = vsel %vm1225, %v1241, %v1141
        %v1258 = vsel %vm1226, %v1242, %v1148
        %v1259 = vsel %vm1227, %v1243, %v1155
        %v1260 = vsel %vm1228, %v1244, %v1162
        %v1261 = vsel %vm1229, %v1245, %v1169
        %v1262 = vsel %vm1230, %v1246, %v1176
        %v1263 = vsel %vm1231, %v1247, %v1183
        %vm1264 = vcmp.ge.s32.totalorder %v1248, 1
        %vm1265 = vcmp.ge.s32.totalorder %v1249, 1
        %vm1266 = vcmp.ge.s32.totalorder %v1250, 1
        %vm1267 = vcmp.ge.s32.totalorder %v1251, 1
        %vm1268 = vcmp.ge.s32.totalorder %v1252, 1
        %vm1269 = vcmp.ge.s32.totalorder %v1253, 1
        %vm1270 = vcmp.ge.s32.totalorder %v1254, 1
        %vm1271 = vcmp.ge.s32.totalorder %v1255, 1
        %vm1272 = vcmp.ge.s32.totalorder %v1256, 1
        %vm1273 = vcmp.ge.s32.totalorder %v1257, 1
        %vm1274 = vcmp.ge.s32.totalorder %v1258, 1
        %vm1275 = vcmp.ge.s32.totalorder %v1259, 1
        %vm1276 = vcmp.ge.s32.totalorder %v1260, 1
        %vm1277 = vcmp.ge.s32.totalorder %v1261, 1
        %vm1278 = vcmp.ge.s32.totalorder %v1262, 1
        %vm1279 = vcmp.ge.s32.totalorder %v1263, 1
        %vm1280 = vcmp.le.s32.totalorder %v1248, 14
        %vm1281 = vcmp.le.s32.totalorder %v1249, 14
        %vm1282 = vcmp.le.s32.totalorder %v1250, 14
        %vm1283 = vcmp.le.s32.totalorder %v1251, 14
        %vm1284 = vcmp.le.s32.totalorder %v1252, 14
        %vm1285 = vcmp.le.s32.totalorder %v1253, 14
        %vm1286 = vcmp.le.s32.totalorder %v1254, 14
        %vm1287 = vcmp.le.s32.totalorder %v1255, 14
        %vm1288 = vcmp.le.s32.totalorder %v1256, 14
        %vm1289 = vcmp.le.s32.totalorder %v1257, 14
        %vm1290 = vcmp.le.s32.totalorder %v1258, 14
        %vm1291 = vcmp.le.s32.totalorder %v1259, 14
        %vm1292 = vcmp.le.s32.totalorder %v1260, 14
        %vm1293 = vcmp.le.s32.totalorder %v1261, 14
        %vm1294 = vcmp.le.s32.totalorder %v1262, 14
        %vm1295 = vcmp.le.s32.totalorder %v1263, 14
        %v1296 = vld [vmem:[#allocation2 + $0x7] sm:$0xff]
        %v1297 = vld [vmem:[#allocation2 + $0xf] sm:$0xff]
        %v1298 = vld [vmem:[#allocation2 + $0x17] sm:$0xff]
        %v1299 = vld [vmem:[#allocation2 + $0x1f] sm:$0xff]
        %v1300 = vld [vmem:[#allocation2 + $0x27] sm:$0xff]
        %v1301 = vld [vmem:[#allocation2 + $0x2f] sm:$0xff]
        %v1302 = vld [vmem:[#allocation2 + $0x37] sm:$0xff]
        %v1303 = vld [vmem:[#allocation2 + $0x3f] sm:$0xff]
        %v1304 = vld [vmem:[#allocation2 + $0x47] sm:$0xff]
        %v1305 = vld [vmem:[#allocation2 + $0x4f] sm:$0xff]
        %v1306 = vld [vmem:[#allocation2 + $0x57] sm:$0xff]
        %v1307 = vld [vmem:[#allocation2 + $0x5f] sm:$0xff]
        %v1308 = vld [vmem:[#allocation2 + $0x67] sm:$0xff]
        %v1309 = vld [vmem:[#allocation2 + $0x6f] sm:$0xff]
        %v1310 = vld [vmem:[#allocation2 + $0x77] sm:$0xff]
        %v1311 = vld [vmem:[#allocation2 + $0x7f] sm:$0xff]
        %v1312 = vsel %vm1264, 1, 0
        %v1313 = vsel %vm1265, 1, 0
        %v1314 = vsel %vm1266, 1, 0
        %v1315 = vsel %vm1267, 1, 0
        %v1316 = vsel %vm1268, 1, 0
        %v1317 = vsel %vm1269, 1, 0
        %v1318 = vsel %vm1270, 1, 0
        %v1319 = vsel %vm1271, 1, 0
        %v1320 = vsel %vm1272, 1, 0
        %v1321 = vsel %vm1273, 1, 0
        %v1322 = vsel %vm1274, 1, 0
        %v1323 = vsel %vm1275, 1, 0
        %v1324 = vsel %vm1276, 1, 0
        %v1325 = vsel %vm1277, 1, 0
        %v1326 = vsel %vm1278, 1, 0
        %v1327 = vsel %vm1279, 1, 0
        %vm1328 = vcmp.eq.s32.totalorder %v1312, 1
        %vm1329 = vcmp.eq.s32.totalorder %v1313, 1
        %vm1330 = vcmp.eq.s32.totalorder %v1314, 1
        %vm1331 = vcmp.eq.s32.totalorder %v1315, 1
        %vm1332 = vcmp.eq.s32.totalorder %v1316, 1
        %vm1333 = vcmp.eq.s32.totalorder %v1317, 1
        %vm1334 = vcmp.eq.s32.totalorder %v1318, 1
        %vm1335 = vcmp.eq.s32.totalorder %v1319, 1
        %vm1336 = vcmp.eq.s32.totalorder %v1320, 1
        %vm1337 = vcmp.eq.s32.totalorder %v1321, 1
        %vm1338 = vcmp.eq.s32.totalorder %v1322, 1
        %vm1339 = vcmp.eq.s32.totalorder %v1323, 1
        %vm1340 = vcmp.eq.s32.totalorder %v1324, 1
        %vm1341 = vcmp.eq.s32.totalorder %v1325, 1
        %vm1342 = vcmp.eq.s32.totalorder %v1326, 1
        %vm1343 = vcmp.eq.s32.totalorder %v1327, 1
        %v1344 = vsel %vm1328, %v1296, 0.0
        %v1345 = vsel %vm1329, %v1297, 0.0
        %v1346 = vsel %vm1330, %v1298, 0.0
        %v1347 = vsel %vm1331, %v1299, 0.0
        %v1348 = vsel %vm1332, %v1300, 0.0
        %v1349 = vsel %vm1333, %v1301, 0.0
        %v1350 = vsel %vm1334, %v1302, 0.0
        %v1351 = vsel %vm1335, %v1303, 0.0
        %v1352 = vsel %vm1336, %v1304, 0.0
        %v1353 = vsel %vm1337, %v1305, 0.0
        %v1354 = vsel %vm1338, %v1306, 0.0
        %v1355 = vsel %vm1339, %v1307, 0.0
        %v1356 = vsel %vm1340, %v1308, 0.0
        %v1357 = vsel %vm1341, %v1309, 0.0
        %v1358 = vsel %vm1342, %v1310, 0.0
        %v1359 = vsel %vm1343, %v1311, 0.0
        %v1360 = vld [vmem:[%s6] sm:$0xf]
        %v1361 = vld [vmem:[#allocation2 + $0x8] sm:$0xff]
        %v1362 = vld [vmem:[#allocation2 + $0x10] sm:$0xff]
        %v1363 = vld [vmem:[#allocation2 + $0x18] sm:$0xff]
        %v1364 = vld [vmem:[#allocation2 + $0x20] sm:$0xff]
        %v1365 = vld [vmem:[#allocation2 + $0x28] sm:$0xff]
        %v1366 = vld [vmem:[#allocation2 + $0x30] sm:$0xff]
        %v1367 = vld [vmem:[#allocation2 + $0x38] sm:$0xff]
        %v1368 = vld [vmem:[#allocation2 + $0x40] sm:$0xff]
        %v1369 = vld [vmem:[#allocation2 + $0x48] sm:$0xff]
        %v1370 = vld [vmem:[#allocation2 + $0x50] sm:$0xff]
        %v1371 = vld [vmem:[#allocation2 + $0x58] sm:$0xff]
        %v1372 = vld [vmem:[#allocation2 + $0x60] sm:$0xff]
        %v1373 = vld [vmem:[#allocation2 + $0x68] sm:$0xff]
        %v1374 = vld [vmem:[#allocation2 + $0x70] sm:$0xff]
        %v1375 = vld [vmem:[#allocation2 + $0x78] sm:$0xff]
        %v1376 = vld [vmem:[#allocation2 + $0x80] sm:$0xff]
        %s1377 = scalar_lea.vmem %s6, 4
        %v1378 = vld [vmem:[%s1377] sm:$0xf]
        %v1380 = vsel %vm1034, %v1361, 0
        %v1383 = vsel %vm1034, %v1362, 0
        %v1386 = vsel %vm1034, %v1363, 0
        %v1389 = vsel %vm1034, %v1364, 0
        %v1392 = vsel %vm1034, %v1365, 0
        %v1395 = vsel %vm1034, %v1366, 0
        %v1398 = vsel %vm1034, %v1367, 0
        %v1401 = vsel %vm1034, %v1368, 0
        %v1404 = vsel %vm1034, %v1369, 0
        %v1407 = vsel %vm1034, %v1370, 0
        %v1410 = vsel %vm1034, %v1371, 0
        %v1413 = vsel %vm1034, %v1372, 0
        %v1416 = vsel %vm1034, %v1373, 0
        %v1419 = vsel %vm1034, %v1374, 0
        %v1422 = vsel %vm1034, %v1375, 0
        %v1425 = vsel %vm1034, %v1376, 0
        %vm1427 = vcmask 1043456
        %v1429 = vsel %vm1427, %v1378, 0
        %1431 = vmatprep.subr.mxu0 0.0
        %1432 = vmatpush1.msra.mxu0 %v1429
        %1433 = vmatprep.subr.mxu0 0.0
        %1434 = vmatpush1.msra.mxu0 0.0
        %1435 = vmatprep.subr.mxu0 0.0
        %1436 = vmatpush1.msra.mxu0 0.0
        %1437 = vmatprep.subr.mxu0 0.0
        %1438 = vmatpush1.msra.mxu0 0.0
        %1439 = vmatprep.subr.mxu0 0.0
        %1440 = vmatpush1.msra.mxu0 0.0
        %1441 = vmatprep.subr.mxu0 0.0
        %1442 = vmatpush1.msra.mxu0 0.0
        %1443 = vmatprep.subr.mxu0 0.0
        %1444 = vmatpush1.msra.mxu0 0.0
        %1445 = vmatprep.subr.mxu0 0.0
        %1446 = vmatpush1.msra.mxu0 0.0
        %1447 = vmatprep.subr.mxu0 0.0
        %1448 = vmatpush1.msra.mxu0 0.0
        %1449 = vmatprep.subr.mxu0 0.0
        %1450 = vmatpush1.msra.mxu0 0.0
        %1451 = vmatprep.subr.mxu0 0.0
        %1452 = vmatpush1.msra.mxu0 0.0
        %1453 = vmatprep.subr.mxu0 0.0
        %1454 = vmatpush1.msra.mxu0 0.0
        %1455 = vmatprep.subr.mxu0 0.0
        %1456 = vmatpush1.msra.mxu0 0.0
        %1457 = vmatprep.subr.mxu0 0.0
        %1458 = vmatpush1.msra.mxu0 0.0
        %1459 = vmatprep.subr.mxu0 0.0
        %1460 = vmatpush1.msra.mxu0 0.0
        %1461 = vmatprep.subr.mxu0 0.0
        %1462 = vmatpush1.msra.mxu0 0.0
        %1463 = vmatprep.subr.mxu0 0.0
        %1464 = vmatpush1.msra.mxu0 0.0
        %1465 = vmatprep.subr.mxu0 0.0
        %1466 = vmatpush1.msra.mxu0 0.0
        %1467 = vmatprep.subr.mxu0 0.0
        %1468 = vmatpush1.msra.mxu0 0.0
        %1469 = vmatprep.subr.mxu0 0.0
        %1470 = vmatpush1.msra.mxu0 0.0
        %1471 = vmatprep.subr.mxu0 0.0
        %1472 = vmatpush1.msra.mxu0 0.0
        %1473 = vmatprep.subr.mxu0 0.0
        %1474 = vmatpush1.msra.mxu0 0.0
        %1475 = vmatprep.subr.mxu0 0.0
        %1476 = vmatpush1.msra.mxu0 0.0
        %1477 = vmatprep.subr.mxu0 0.0
        %1478 = vmatpush1.msra.mxu0 0.0
        %1479 = vmatprep.subr.mxu0 0.0
        %1480 = vmatpush1.msra.mxu0 0.0
        %1481 = vmatprep.subr.mxu0 0.0
        %1482 = vmatpush1.msra.mxu0 0.0
        %1483 = vmatprep.subr.mxu0 0.0
        %1484 = vmatpush1.msra.mxu0 0.0
        %1485 = vmatprep.subr.mxu0 0.0
        %1486 = vmatpush1.msra.mxu0 0.0
        %1487 = vmatprep.subr.mxu0 0.0
        %1488 = vmatpush1.msra.mxu0 0.0
        %1489 = vmatprep.subr.mxu0 0.0
        %1490 = vmatpush1.msra.mxu0 0.0
        %1491 = vmatprep.subr.mxu0 0.0
        %1492 = vmatpush1.msra.mxu0 0.0
        %1493 = vmatprep.subr.mxu0 0.0
        %1494 = vmatpush1.msra.mxu0 0.0
        %1495 = vmatprep.mubr.f32.mxu0 0.0
        %1496 = vmatmul.mubr.f32.gmra.mrb[0].mxu0 %v1380
        %v1497 = vpop.f32.mrb[0].mxu0
        %v1498 = vadd.f32 0.0, %v1497
        %v1499 = vpop.f32.mrb[0].mxu0
        %1500 = vmatprep.mubr.f32.mxu0 0.0
        %1501 = vmatmul.mubr.f32.gmra.mrb[0].mxu0 %v1383
        %v1502 = vpop.f32.mrb[0].mxu0
        %v1503 = vadd.f32 0.0, %v1502
        %v1504 = vpop.f32.mrb[0].mxu0
        %1505 = vmatprep.mubr.f32.mxu0 0.0
        %1506 = vmatmul.mubr.f32.gmra.mrb[0].mxu0 %v1386
        %v1507 = vpop.f32.mrb[0].mxu0
        %v1508 = vadd.f32 0.0, %v1507
        %v1509 = vpop.f32.mrb[0].mxu0
        %1510 = vmatprep.mubr.f32.mxu0 0.0
        %1511 = vmatmul.mubr.f32.gmra.mrb[0].mxu0 %v1389
        %v1512 = vpop.f32.mrb[0].mxu0
        %v1513 = vadd.f32 0.0, %v1512
        %v1514 = vpop.f32.mrb[0].mxu0
        %1515 = vmatprep.mubr.f32.mxu0 0.0
        %1516 = vmatmul.mubr.f32.gmra.mrb[0].mxu0 %v1392
        %v1517 = vpop.f32.mrb[0].mxu0
        %v1518 = vadd.f32 0.0, %v1517
        %v1519 = vpop.f32.mrb[0].mxu0
        %1520 = vmatprep.mubr.f32.mxu0 0.0
        %1521 = vmatmul.mubr.f32.gmra.mrb[0].mxu0 %v1395
        %v1522 = vpop.f32.mrb[0].mxu0
        %v1523 = vadd.f32 0.0, %v1522
        %v1524 = vpop.f32.mrb[0].mxu0
        %1525 = vmatprep.mubr.f32.mxu0 0.0
        %1526 = vmatmul.mubr.f32.gmra.mrb[0].mxu0 %v1398
        %v1527 = vpop.f32.mrb[0].mxu0
        %v1528 = vadd.f32 0.0, %v1527
        %v1529 = vpop.f32.mrb[0].mxu0
        %1530 = vmatprep.mubr.f32.mxu0 0.0
        %1531 = vmatmul.mubr.f32.gmra.mrb[0].mxu0 %v1401
        %v1532 = vpop.f32.mrb[0].mxu0
        %v1533 = vadd.f32 0.0, %v1532
        %v1534 = vpop.f32.mrb[0].mxu0
        %1535 = vmatprep.mubr.f32.mxu0 0.0
        %1536 = vmatmul.mubr.f32.gmra.mrb[0].mxu0 %v1404
        %v1537 = vpop.f32.mrb[0].mxu0
        %v1538 = vadd.f32 0.0, %v1537
        %v1539 = vpop.f32.mrb[0].mxu0
        %1540 = vmatprep.mubr.f32.mxu0 0.0
        %1541 = vmatmul.mubr.f32.gmra.mrb[0].mxu0 %v1407
        %v1542 = vpop.f32.mrb[0].mxu0
        %v1543 = vadd.f32 0.0, %v1542
        %v1544 = vpop.f32.mrb[0].mxu0
        %1545 = vmatprep.mubr.f32.mxu0 0.0
        %1546 = vmatmul.mubr.f32.gmra.mrb[0].mxu0 %v1410
        %v1547 = vpop.f32.mrb[0].mxu0
        %v1548 = vadd.f32 0.0, %v1547
        %v1549 = vpop.f32.mrb[0].mxu0
        %1550 = vmatprep.mubr.f32.mxu0 0.0
        %1551 = vmatmul.mubr.f32.gmra.mrb[0].mxu0 %v1413
        %v1552 = vpop.f32.mrb[0].mxu0
        %v1553 = vadd.f32 0.0, %v1552
        %v1554 = vpop.f32.mrb[0].mxu0
        %1555 = vmatprep.mubr.f32.mxu0 0.0
        %1556 = vmatmul.mubr.f32.gmra.mrb[0].mxu0 %v1416
        %v1557 = vpop.f32.mrb[0].mxu0
        %v1558 = vadd.f32 0.0, %v1557
        %v1559 = vpop.f32.mrb[0].mxu0
        %1560 = vmatprep.mubr.f32.mxu0 0.0
        %1561 = vmatmul.mubr.f32.gmra.mrb[0].mxu0 %v1419
        %v1562 = vpop.f32.mrb[0].mxu0
        %v1563 = vadd.f32 0.0, %v1562
        %v1564 = vpop.f32.mrb[0].mxu0
        %1565 = vmatprep.mubr.f32.mxu0 0.0
        %1566 = vmatmul.mubr.f32.gmra.mrb[0].mxu0 %v1422
        %v1567 = vpop.f32.mrb[0].mxu0
        %v1568 = vadd.f32 0.0, %v1567
        %v1569 = vpop.f32.mrb[0].mxu0
        %1570 = vmatprep.mubr.f32.mxu0 0.0
        %1571 = vmatmul.mubr.f32.gmra.mrb[0].mxu0 %v1425
        %v1572 = vpop.f32.mrb[0].mxu0
        %v1573 = vadd.f32 0.0, %v1572
        %v1574 = vpop.f32.mrb[0].mxu0
        %1575 = vdwg.mxu0
        %v1577 = vsel %vm1034, %v1344, 0
        %v1580 = vsel %vm1034, %v1345, 0
        %v1583 = vsel %vm1034, %v1346, 0
        %v1586 = vsel %vm1034, %v1347, 0
        %v1589 = vsel %vm1034, %v1348, 0
        %v1592 = vsel %vm1034, %v1349, 0
        %v1595 = vsel %vm1034, %v1350, 0
        %v1598 = vsel %vm1034, %v1351, 0
        %v1601 = vsel %vm1034, %v1352, 0
        %v1604 = vsel %vm1034, %v1353, 0
        %v1607 = vsel %vm1034, %v1354, 0
        %v1610 = vsel %vm1034, %v1355, 0
        %v1613 = vsel %vm1034, %v1356, 0
        %v1616 = vsel %vm1034, %v1357, 0
        %v1619 = vsel %vm1034, %v1358, 0
        %v1622 = vsel %vm1034, %v1359, 0
        %v1625 = vsel %vm1427, %v1360, 0
        %1627 = vmatprep.subr.mxu0 0.0
        %1628 = vmatpush1.msra.mxu0 %v1625
        %1629 = vmatprep.subr.mxu0 0.0
        %1630 = vmatpush1.msra.mxu0 0.0
        %1631 = vmatprep.subr.mxu0 0.0
        %1632 = vmatpush1.msra.mxu0 0.0
        %1633 = vmatprep.subr.mxu0 0.0
        %1634 = vmatpush1.msra.mxu0 0.0
        %1635 = vmatprep.subr.mxu0 0.0
        %1636 = vmatpush1.msra.mxu0 0.0
        %1637 = vmatprep.subr.mxu0 0.0
        %1638 = vmatpush1.msra.mxu0 0.0
        %1639 = vmatprep.subr.mxu0 0.0
        %1640 = vmatpush1.msra.mxu0 0.0
        %1641 = vmatprep.subr.mxu0 0.0
        %1642 = vmatpush1.msra.mxu0 0.0
        %1643 = vmatprep.subr.mxu0 0.0
        %1644 = vmatpush1.msra.mxu0 0.0
        %1645 = vmatprep.subr.mxu0 0.0
        %1646 = vmatpush1.msra.mxu0 0.0
        %1647 = vmatprep.subr.mxu0 0.0
        %1648 = vmatpush1.msra.mxu0 0.0
        %1649 = vmatprep.subr.mxu0 0.0
        %1650 = vmatpush1.msra.mxu0 0.0
        %1651 = vmatprep.subr.mxu0 0.0
        %1652 = vmatpush1.msra.mxu0 0.0
        %1653 = vmatprep.subr.mxu0 0.0
        %1654 = vmatpush1.msra.mxu0 0.0
        %1655 = vmatprep.subr.mxu0 0.0
        %1656 = vmatpush1.msra.mxu0 0.0
        %1657 = vmatprep.subr.mxu0 0.0
        %1658 = vmatpush1.msra.mxu0 0.0
        %1659 = vmatprep.subr.mxu0 0.0
        %1660 = vmatpush1.msra.mxu0 0.0
        %1661 = vmatprep.subr.mxu0 0.0
        %1662 = vmatpush1.msra.mxu0 0.0
        %1663 = vmatprep.subr.mxu0 0.0
        %1664 = vmatpush1.msra.mxu0 0.0
        %1665 = vmatprep.subr.mxu0 0.0
        %1666 = vmatpush1.msra.mxu0 0.0
        %1667 = vmatprep.subr.mxu0 0.0
        %1668 = vmatpush1.msra.mxu0 0.0
        %1669 = vmatprep.subr.mxu0 0.0
        %1670 = vmatpush1.msra.mxu0 0.0
        %1671 = vmatprep.subr.mxu0 0.0
        %1672 = vmatpush1.msra.mxu0 0.0
        %1673 = vmatprep.subr.mxu0 0.0
        %1674 = vmatpush1.msra.mxu0 0.0
        %1675 = vmatprep.subr.mxu0 0.0
        %1676 = vmatpush1.msra.mxu0 0.0
        %1677 = vmatprep.subr.mxu0 0.0
        %1678 = vmatpush1.msra.mxu0 0.0
        %1679 = vmatprep.subr.mxu0 0.0
        %1680 = vmatpush1.msra.mxu0 0.0
        %1681 = vmatprep.subr.mxu0 0.0
        %1682 = vmatpush1.msra.mxu0 0.0
        %1683 = vmatprep.subr.mxu0 0.0
        %1684 = vmatpush1.msra.mxu0 0.0
        %1685 = vmatprep.subr.mxu0 0.0
        %1686 = vmatpush1.msra.mxu0 0.0
        %1687 = vmatprep.subr.mxu0 0.0
        %1688 = vmatpush1.msra.mxu0 0.0
        %1689 = vmatprep.subr.mxu0 0.0
        %1690 = vmatpush1.msra.mxu0 0.0
        %1691 = vmatprep.mubr.f32.mxu0 0.0
        %1692 = vmatmul.mubr.f32.gmra.mrb[0].mxu0 %v1577
        %v1693 = vpop.f32.mrb[0].mxu0
        %v1694 = vadd.f32 %v1498, %v1693
        %v1695 = vpop.f32.mrb[0].mxu0
        %1696 = vmatprep.mubr.f32.mxu0 0.0
        %1697 = vmatmul.mubr.f32.gmra.mrb[0].mxu0 %v1580
        %v1698 = vpop.f32.mrb[0].mxu0
        %v1699 = vadd.f32 %v1503, %v1698
        %v1700 = vpop.f32.mrb[0].mxu0
        %1701 = vmatprep.mubr.f32.mxu0 0.0
        %1702 = vmatmul.mubr.f32.gmra.mrb[0].mxu0 %v1583
        %v1703 = vpop.f32.mrb[0].mxu0
        %v1704 = vadd.f32 %v1508, %v1703
        %v1705 = vpop.f32.mrb[0].mxu0
        %1706 = vmatprep.mubr.f32.mxu0 0.0
        %1707 = vmatmul.mubr.f32.gmra.mrb[0].mxu0 %v1586
        %v1708 = vpop.f32.mrb[0].mxu0
        %v1709 = vadd.f32 %v1513, %v1708
        %v1710 = vpop.f32.mrb[0].mxu0
        %1711 = vmatprep.mubr.f32.mxu0 0.0
        %1712 = vmatmul.mubr.f32.gmra.mrb[0].mxu0 %v1589
        %v1713 = vpop.f32.mrb[0].mxu0
        %v1714 = vadd.f32 %v1518, %v1713
        %v1715 = vpop.f32.mrb[0].mxu0
        %1716 = vmatprep.mubr.f32.mxu0 0.0
        %1717 = vmatmul.mubr.f32.gmra.mrb[0].mxu0 %v1592
        %v1718 = vpop.f32.mrb[0].mxu0
        %v1719 = vadd.f32 %v1523, %v1718
        %v1720 = vpop.f32.mrb[0].mxu0
        %1721 = vmatprep.mubr.f32.mxu0 0.0
        %1722 = vmatmul.mubr.f32.gmra.mrb[0].mxu0 %v1595
        %v1723 = vpop.f32.mrb[0].mxu0
        %v1724 = vadd.f32 %v1528, %v1723
        %v1725 = vpop.f32.mrb[0].mxu0
        %1726 = vmatprep.mubr.f32.mxu0 0.0
        %1727 = vmatmul.mubr.f32.gmra.mrb[0].mxu0 %v1598
        %v1728 = vpop.f32.mrb[0].mxu0
        %v1729 = vadd.f32 %v1533, %v1728
        %v1730 = vpop.f32.mrb[0].mxu0
        %1731 = vmatprep.mubr.f32.mxu0 0.0
        %1732 = vmatmul.mubr.f32.gmra.mrb[0].mxu0 %v1601
        %v1733 = vpop.f32.mrb[0].mxu0
        %v1734 = vadd.f32 %v1538, %v1733
        %v1735 = vpop.f32.mrb[0].mxu0
        %1736 = vmatprep.mubr.f32.mxu0 0.0
        %1737 = vmatmul.mubr.f32.gmra.mrb[0].mxu0 %v1604
        %v1738 = vpop.f32.mrb[0].mxu0
        %v1739 = vadd.f32 %v1543, %v1738
        %v1740 = vpop.f32.mrb[0].mxu0
        %1741 = vmatprep.mubr.f32.mxu0 0.0
        %1742 = vmatmul.mubr.f32.gmra.mrb[0].mxu0 %v1607
        %v1743 = vpop.f32.mrb[0].mxu0
        %v1744 = vadd.f32 %v1548, %v1743
        %v1745 = vpop.f32.mrb[0].mxu0
        %1746 = vmatprep.mubr.f32.mxu0 0.0
        %1747 = vmatmul.mubr.f32.gmra.mrb[0].mxu0 %v1610
        %v1748 = vpop.f32.mrb[0].mxu0
        %v1749 = vadd.f32 %v1553, %v1748
        %v1750 = vpop.f32.mrb[0].mxu0
        %1751 = vmatprep.mubr.f32.mxu0 0.0
        %1752 = vmatmul.mubr.f32.gmra.mrb[0].mxu0 %v1613
        %v1753 = vpop.f32.mrb[0].mxu0
        %v1754 = vadd.f32 %v1558, %v1753
        %v1755 = vpop.f32.mrb[0].mxu0
        %1756 = vmatprep.mubr.f32.mxu0 0.0
        %1757 = vmatmul.mubr.f32.gmra.mrb[0].mxu0 %v1616
        %v1758 = vpop.f32.mrb[0].mxu0
        %v1759 = vadd.f32 %v1563, %v1758
        %v1760 = vpop.f32.mrb[0].mxu0
        %1761 = vmatprep.mubr.f32.mxu0 0.0
        %1762 = vmatmul.mubr.f32.gmra.mrb[0].mxu0 %v1619
        %v1763 = vpop.f32.mrb[0].mxu0
        %v1764 = vadd.f32 %v1568, %v1763
        %v1765 = vpop.f32.mrb[0].mxu0
        %1766 = vmatprep.mubr.f32.mxu0 0.0
        %1767 = vmatmul.mubr.f32.gmra.mrb[0].mxu0 %v1622
        %v1768 = vpop.f32.mrb[0].mxu0
        %v1769 = vadd.f32 %v1573, %v1768
        %v1770 = vpop.f32.mrb[0].mxu0
        %1771 = vdwg.mxu0
        %v1772 = vld [vmem:[#allocation2 + $0x9] sm:$0xff]
        %v1773 = vld [vmem:[#allocation2 + $0x11] sm:$0xff]
        %v1774 = vld [vmem:[#allocation2 + $0x19] sm:$0xff]
        %v1775 = vld [vmem:[#allocation2 + $0x21] sm:$0xff]
        %v1776 = vld [vmem:[#allocation2 + $0x29] sm:$0xff]
        %v1777 = vld [vmem:[#allocation2 + $0x31] sm:$0xff]
        %v1778 = vld [vmem:[#allocation2 + $0x39] sm:$0xff]
        %v1779 = vld [vmem:[#allocation2 + $0x41] sm:$0xff]
        %v1780 = vld [vmem:[#allocation2 + $0x49] sm:$0xff]
        %v1781 = vld [vmem:[#allocation2 + $0x51] sm:$0xff]
        %v1782 = vld [vmem:[#allocation2 + $0x59] sm:$0xff]
        %v1783 = vld [vmem:[#allocation2 + $0x61] sm:$0xff]
        %v1784 = vld [vmem:[#allocation2 + $0x69] sm:$0xff]
        %v1785 = vld [vmem:[#allocation2 + $0x71] sm:$0xff]
        %v1786 = vld [vmem:[#allocation2 + $0x79] sm:$0xff]
        %v1787 = vld [vmem:[#allocation2 + $0x81] sm:$0xff]
        %v1788 = vsel %vm1280, 1, 0
        %v1789 = vsel %vm1281, 1, 0
        %v1790 = vsel %vm1282, 1, 0
        %v1791 = vsel %vm1283, 1, 0
        %v1792 = vsel %vm1284, 1, 0
        %v1793 = vsel %vm1285, 1, 0
        %v1794 = vsel %vm1286, 1, 0
        %v1795 = vsel %vm1287, 1, 0
        %v1796 = vsel %vm1288, 1, 0
        %v1797 = vsel %vm1289, 1, 0
        %v1798 = vsel %vm1290, 1, 0
        %v1799 = vsel %vm1291, 1, 0
        %v1800 = vsel %vm1292, 1, 0
        %v1801 = vsel %vm1293, 1, 0
        %v1802 = vsel %vm1294, 1, 0
        %v1803 = vsel %vm1295, 1, 0
        %vm1804 = vcmp.eq.s32.totalorder %v1788, 1
        %vm1805 = vcmp.eq.s32.totalorder %v1789, 1
        %vm1806 = vcmp.eq.s32.totalorder %v1790, 1
        %vm1807 = vcmp.eq.s32.totalorder %v1791, 1
        %vm1808 = vcmp.eq.s32.totalorder %v1792, 1
        %vm1809 = vcmp.eq.s32.totalorder %v1793, 1
        %vm1810 = vcmp.eq.s32.totalorder %v1794, 1
        %vm1811 = vcmp.eq.s32.totalorder %v1795, 1
        %vm1812 = vcmp.eq.s32.totalorder %v1796, 1
        %vm1813 = vcmp.eq.s32.totalorder %v1797, 1
        %vm1814 = vcmp.eq.s32.totalorder %v1798, 1
        %vm1815 = vcmp.eq.s32.totalorder %v1799, 1
        %vm1816 = vcmp.eq.s32.totalorder %v1800, 1
        %vm1817 = vcmp.eq.s32.totalorder %v1801, 1
        %vm1818 = vcmp.eq.s32.totalorder %v1802, 1
        %vm1819 = vcmp.eq.s32.totalorder %v1803, 1
        %v1820 = vsel %vm1804, %v1772, 0.0
        %v1821 = vsel %vm1805, %v1773, 0.0
        %v1822 = vsel %vm1806, %v1774, 0.0
        %v1823 = vsel %vm1807, %v1775, 0.0
        %v1824 = vsel %vm1808, %v1776, 0.0
        %v1825 = vsel %vm1809, %v1777, 0.0
        %v1826 = vsel %vm1810, %v1778, 0.0
        %v1827 = vsel %vm1811, %v1779, 0.0
        %v1828 = vsel %vm1812, %v1780, 0.0
        %v1829 = vsel %vm1813, %v1781, 0.0
        %v1830 = vsel %vm1814, %v1782, 0.0
        %v1831 = vsel %vm1815, %v1783, 0.0
        %v1832 = vsel %vm1816, %v1784, 0.0
        %v1833 = vsel %vm1817, %v1785, 0.0
        %v1834 = vsel %vm1818, %v1786, 0.0
        %v1835 = vsel %vm1819, %v1787, 0.0
        %s1836 = scalar_lea.vmem %s6, 8
        %v1837 = vld [vmem:[%s1836] sm:$0xf]
        %v1839 = vsel %vm1034, %v1820, 0
        %v1842 = vsel %vm1034, %v1821, 0
        %v1845 = vsel %vm1034, %v1822, 0
        %v1848 = vsel %vm1034, %v1823, 0
        %v1851 = vsel %vm1034, %v1824, 0
        %v1854 = vsel %vm1034, %v1825, 0
        %v1857 = vsel %vm1034, %v1826, 0
        %v1860 = vsel %vm1034, %v1827, 0
        %v1863 = vsel %vm1034, %v1828, 0
        %v1866 = vsel %vm1034, %v1829, 0
        %v1869 = vsel %vm1034, %v1830, 0
        %v1872 = vsel %vm1034, %v1831, 0
        %v1875 = vsel %vm1034, %v1832, 0
        %v1878 = vsel %vm1034, %v1833, 0
        %v1881 = vsel %vm1034, %v1834, 0
        %v1884 = vsel %vm1034, %v1835, 0
        %v1887 = vsel %vm1427, %v1837, 0
        %1889 = vmatprep.subr.mxu0 0.0
        %1890 = vmatpush1.msra.mxu0 %v1887
        %1891 = vmatprep.subr.mxu0 0.0
        %1892 = vmatpush1.msra.mxu0 0.0
        %1893 = vmatprep.subr.mxu0 0.0
        %1894 = vmatpush1.msra.mxu0 0.0
        %1895 = vmatprep.subr.mxu0 0.0
        %1896 = vmatpush1.msra.mxu0 0.0
        %1897 = vmatprep.subr.mxu0 0.0
        %1898 = vmatpush1.msra.mxu0 0.0
        %1899 = vmatprep.subr.mxu0 0.0
        %1900 = vmatpush1.msra.mxu0 0.0
        %1901 = vmatprep.subr.mxu0 0.0
        %1902 = vmatpush1.msra.mxu0 0.0
        %1903 = vmatprep.subr.mxu0 0.0
        %1904 = vmatpush1.msra.mxu0 0.0
        %1905 = vmatprep.subr.mxu0 0.0
        %1906 = vmatpush1.msra.mxu0 0.0
        %1907 = vmatprep.subr.mxu0 0.0
        %1908 = vmatpush1.msra.mxu0 0.0
        %1909 = vmatprep.subr.mxu0 0.0
        %1910 = vmatpush1.msra.mxu0 0.0
        %1911 = vmatprep.subr.mxu0 0.0
        %1912 = vmatpush1.msra.mxu0 0.0
        %1913 = vmatprep.subr.mxu0 0.0
        %1914 = vmatpush1.msra.mxu0 0.0
        %1915 = vmatprep.subr.mxu0 0.0
        %1916 = vmatpush1.msra.mxu0 0.0
        %1917 = vmatprep.subr.mxu0 0.0
        %1918 = vmatpush1.msra.mxu0 0.0
        %1919 = vmatprep.subr.mxu0 0.0
        %1920 = vmatpush1.msra.mxu0 0.0
        %1921 = vmatprep.subr.mxu0 0.0
        %1922 = vmatpush1.msra.mxu0 0.0
        %1923 = vmatprep.subr.mxu0 0.0
        %1924 = vmatpush1.msra.mxu0 0.0
        %1925 = vmatprep.subr.mxu0 0.0
        %1926 = vmatpush1.msra.mxu0 0.0
        %1927 = vmatprep.subr.mxu0 0.0
        %1928 = vmatpush1.msra.mxu0 0.0
        %1929 = vmatprep.subr.mxu0 0.0
        %1930 = vmatpush1.msra.mxu0 0.0
        %1931 = vmatprep.subr.mxu0 0.0
        %1932 = vmatpush1.msra.mxu0 0.0
        %1933 = vmatprep.subr.mxu0 0.0
        %1934 = vmatpush1.msra.mxu0 0.0
        %1935 = vmatprep.subr.mxu0 0.0
        %1936 = vmatpush1.msra.mxu0 0.0
        %1937 = vmatprep.subr.mxu0 0.0
        %1938 = vmatpush1.msra.mxu0 0.0
        %1939 = vmatprep.subr.mxu0 0.0
        %1940 = vmatpush1.msra.mxu0 0.0
        %1941 = vmatprep.subr.mxu0 0.0
        %1942 = vmatpush1.msra.mxu0 0.0
        %1943 = vmatprep.subr.mxu0 0.0
        %1944 = vmatpush1.msra.mxu0 0.0
        %1945 = vmatprep.subr.mxu0 0.0
        %1946 = vmatpush1.msra.mxu0 0.0
        %1947 = vmatprep.subr.mxu0 0.0
        %1948 = vmatpush1.msra.mxu0 0.0
        %1949 = vmatprep.subr.mxu0 0.0
        %1950 = vmatpush1.msra.mxu0 0.0
        %1951 = vmatprep.subr.mxu0 0.0
        %1952 = vmatpush1.msra.mxu0 0.0
        %1953 = vmatprep.mubr.f32.mxu0 0.0
        %1954 = vmatmul.mubr.f32.gmra.mrb[0].mxu0 %v1839
        %v1955 = vpop.f32.mrb[0].mxu0
        %v1956 = vadd.f32 0.0, %v1955
        %v1957 = vpop.f32.mrb[0].mxu0
        %1958 = vmatprep.mubr.f32.mxu0 0.0
        %1959 = vmatmul.mubr.f32.gmra.mrb[0].mxu0 %v1842
        %v1960 = vpop.f32.mrb[0].mxu0
        %v1961 = vadd.f32 0.0, %v1960
        %v1962 = vpop.f32.mrb[0].mxu0
        %1963 = vmatprep.mubr.f32.mxu0 0.0
        %1964 = vmatmul.mubr.f32.gmra.mrb[0].mxu0 %v1845
        %v1965 = vpop.f32.mrb[0].mxu0
        %v1966 = vadd.f32 0.0, %v1965
        %v1967 = vpop.f32.mrb[0].mxu0
        %1968 = vmatprep.mubr.f32.mxu0 0.0
        %1969 = vmatmul.mubr.f32.gmra.mrb[0].mxu0 %v1848
        %v1970 = vpop.f32.mrb[0].mxu0
        %v1971 = vadd.f32 0.0, %v1970
        %v1972 = vpop.f32.mrb[0].mxu0
        %1973 = vmatprep.mubr.f32.mxu0 0.0
        %1974 = vmatmul.mubr.f32.gmra.mrb[0].mxu0 %v1851
        %v1975 = vpop.f32.mrb[0].mxu0
        %v1976 = vadd.f32 0.0, %v1975
        %v1977 = vpop.f32.mrb[0].mxu0
        %1978 = vmatprep.mubr.f32.mxu0 0.0
        %1979 = vmatmul.mubr.f32.gmra.mrb[0].mxu0 %v1854
        %v1980 = vpop.f32.mrb[0].mxu0
        %v1981 = vadd.f32 0.0, %v1980
        %v1982 = vpop.f32.mrb[0].mxu0
        %1983 = vmatprep.mubr.f32.mxu0 0.0
        %1984 = vmatmul.mubr.f32.gmra.mrb[0].mxu0 %v1857
        %v1985 = vpop.f32.mrb[0].mxu0
        %v1986 = vadd.f32 0.0, %v1985
        %v1987 = vpop.f32.mrb[0].mxu0
        %1988 = vmatprep.mubr.f32.mxu0 0.0
        %1989 = vmatmul.mubr.f32.gmra.mrb[0].mxu0 %v1860
        %v1990 = vpop.f32.mrb[0].mxu0
        %v1991 = vadd.f32 0.0, %v1990
        %v1992 = vpop.f32.mrb[0].mxu0
        %1993 = vmatprep.mubr.f32.mxu0 0.0
        %1994 = vmatmul.mubr.f32.gmra.mrb[0].mxu0 %v1863
        %v1995 = vpop.f32.mrb[0].mxu0
        %v1996 = vadd.f32 0.0, %v1995
        %v1997 = vpop.f32.mrb[0].mxu0
        %1998 = vmatprep.mubr.f32.mxu0 0.0
        %1999 = vmatmul.mubr.f32.gmra.mrb[0].mxu0 %v1866
        %v2000 = vpop.f32.mrb[0].mxu0
        %v2001 = vadd.f32 0.0, %v2000
        %v2002 = vpop.f32.mrb[0].mxu0
        %2003 = vmatprep.mubr.f32.mxu0 0.0
        %2004 = vmatmul.mubr.f32.gmra.mrb[0].mxu0 %v1869
        %v2005 = vpop.f32.mrb[0].mxu0
        %v2006 = vadd.f32 0.0, %v2005
        %v2007 = vpop.f32.mrb[0].mxu0
        %2008 = vmatprep.mubr.f32.mxu0 0.0
        %2009 = vmatmul.mubr.f32.gmra.mrb[0].mxu0 %v1872
        %v2010 = vpop.f32.mrb[0].mxu0
        %v2011 = vadd.f32 0.0, %v2010
        %v2012 = vpop.f32.mrb[0].mxu0
        %2013 = vmatprep.mubr.f32.mxu0 0.0
        %2014 = vmatmul.mubr.f32.gmra.mrb[0].mxu0 %v1875
        %v2015 = vpop.f32.mrb[0].mxu0
        %v2016 = vadd.f32 0.0, %v2015
        %v2017 = vpop.f32.mrb[0].mxu0
        %2018 = vmatprep.mubr.f32.mxu0 0.0
        %2019 = vmatmul.mubr.f32.gmra.mrb[0].mxu0 %v1878
        %v2020 = vpop.f32.mrb[0].mxu0
        %v2021 = vadd.f32 0.0, %v2020
        %v2022 = vpop.f32.mrb[0].mxu0
        %2023 = vmatprep.mubr.f32.mxu0 0.0
        %2024 = vmatmul.mubr.f32.gmra.mrb[0].mxu0 %v1881
        %v2025 = vpop.f32.mrb[0].mxu0
        %v2026 = vadd.f32 0.0, %v2025
        %v2027 = vpop.f32.mrb[0].mxu0
        %2028 = vmatprep.mubr.f32.mxu0 0.0
        %2029 = vmatmul.mubr.f32.gmra.mrb[0].mxu0 %v1884
        %v2030 = vpop.f32.mrb[0].mxu0
        %v2031 = vadd.f32 0.0, %v2030
        %v2032 = vpop.f32.mrb[0].mxu0
        %2033 = vdwg.mxu0
        %v2034 = vadd.f32 %v1694, %v1956
        %v2035 = vadd.f32 %v1699, %v1961
        %v2036 = vadd.f32 %v1704, %v1966
        %v2037 = vadd.f32 %v1709, %v1971
        %v2038 = vadd.f32 %v1714, %v1976
        %v2039 = vadd.f32 %v1719, %v1981
        %v2040 = vadd.f32 %v1724, %v1986
        %v2041 = vadd.f32 %v1729, %v1991
        %v2042 = vadd.f32 %v1734, %v1996
        %v2043 = vadd.f32 %v1739, %v2001
        %v2044 = vadd.f32 %v1744, %v2006
        %v2045 = vadd.f32 %v1749, %v2011
        %v2046 = vadd.f32 %v1754, %v2016
        %v2047 = vadd.f32 %v1759, %v2021
        %v2048 = vadd.f32 %v1764, %v2026
        %v2049 = vadd.f32 %v1769, %v2031
        %v2050 = vld [vmem:[#allocation2 + $0x17] sm:$0xff]
        %v2051 = vld [vmem:[#allocation2 + $0x1f] sm:$0xff]
        %v2052 = vld [vmem:[#allocation2 + $0x27] sm:$0xff]
        %v2053 = vld [vmem:[#allocation2 + $0x2f] sm:$0xff]
        %v2054 = vld [vmem:[#allocation2 + $0x37] sm:$0xff]
        %v2055 = vld [vmem:[#allocation2 + $0x3f] sm:$0xff]
        %v2056 = vld [vmem:[#allocation2 + $0x47] sm:$0xff]
        %v2057 = vld [vmem:[#allocation2 + $0x4f] sm:$0xff]
        %v2058 = vld [vmem:[#allocation2 + $0x57] sm:$0xff]
        %v2059 = vld [vmem:[#allocation2 + $0x5f] sm:$0xff]
        %v2060 = vld [vmem:[#allocation2 + $0x67] sm:$0xff]
        %v2061 = vld [vmem:[#allocation2 + $0x6f] sm:$0xff]
        %v2062 = vld [vmem:[#allocation2 + $0x77] sm:$0xff]
        %v2063 = vld [vmem:[#allocation2 + $0x7f] sm:$0xff]
        %v2064 = vld [vmem:[#allocation2 + $0x87] sm:$0xff]
        %v2065 = vld [vmem:[#allocation2 + $0x8f] sm:$0xff]
        %v2066 = vsel %vm1328, %v2050, 0.0
        %v2067 = vsel %vm1329, %v2051, 0.0
        %v2068 = vsel %vm1330, %v2052, 0.0
        %v2069 = vsel %vm1331, %v2053, 0.0
        %v2070 = vsel %vm1332, %v2054, 0.0
        %v2071 = vsel %vm1333, %v2055, 0.0
        %v2072 = vsel %vm1334, %v2056, 0.0
        %v2073 = vsel %vm1335, %v2057, 0.0
        %v2074 = vsel %vm1336, %v2058, 0.0
        %v2075 = vsel %vm1337, %v2059, 0.0
        %v2076 = vsel %vm1338, %v2060, 0.0
        %v2077 = vsel %vm1339, %v2061, 0.0
        %v2078 = vsel %vm1340, %v2062, 0.0
        %v2079 = vsel %vm1341, %v2063, 0.0
        %v2080 = vsel %vm1342, %v2064, 0.0
        %v2081 = vsel %vm1343, %v2065, 0.0
        %s2082 = scalar_lea.vmem %s6, 12
        %v2083 = vld [vmem:[%s2082] sm:$0xf]
        %v2085 = vsel %vm1034, %v2066, 0
        %v2088 = vsel %vm1034, %v2067, 0
        %v2091 = vsel %vm1034, %v2068, 0
        %v2094 = vsel %vm1034, %v2069, 0
        %v2097 = vsel %vm1034, %v2070, 0
        %v2100 = vsel %vm1034, %v2071, 0
        %v2103 = vsel %vm1034, %v2072, 0
        %v2106 = vsel %vm1034, %v2073, 0
        %v2109 = vsel %vm1034, %v2074, 0
        %v2112 = vsel %vm1034, %v2075, 0
        %v2115 = vsel %vm1034, %v2076, 0
        %v2118 = vsel %vm1034, %v2077, 0
        %v2121 = vsel %vm1034, %v2078, 0
        %v2124 = vsel %vm1034, %v2079, 0
        %v2127 = vsel %vm1034, %v2080, 0
        %v2130 = vsel %vm1034, %v2081, 0
        %v2133 = vsel %vm1427, %v2083, 0
        %2135 = vmatprep.subr.mxu0 0.0
        %2136 = vmatpush1.msra.mxu0 %v2133
        %2137 = vmatprep.subr.mxu0 0.0
        %2138 = vmatpush1.msra.mxu0 0.0
        %2139 = vmatprep.subr.mxu0 0.0
        %2140 = vmatpush1.msra.mxu0 0.0
        %2141 = vmatprep.subr.mxu0 0.0
        %2142 = vmatpush1.msra.mxu0 0.0
        %2143 = vmatprep.subr.mxu0 0.0
        %2144 = vmatpush1.msra.mxu0 0.0
        %2145 = vmatprep.subr.mxu0 0.0
        %2146 = vmatpush1.msra.mxu0 0.0
        %2147 = vmatprep.subr.mxu0 0.0
        %2148 = vmatpush1.msra.mxu0 0.0
        %2149 = vmatprep.subr.mxu0 0.0
        %2150 = vmatpush1.msra.mxu0 0.0
        %2151 = vmatprep.subr.mxu0 0.0
        %2152 = vmatpush1.msra.mxu0 0.0
        %2153 = vmatprep.subr.mxu0 0.0
        %2154 = vmatpush1.msra.mxu0 0.0
        %2155 = vmatprep.subr.mxu0 0.0
        %2156 = vmatpush1.msra.mxu0 0.0
        %2157 = vmatprep.subr.mxu0 0.0
        %2158 = vmatpush1.msra.mxu0 0.0
        %2159 = vmatprep.subr.mxu0 0.0
        %2160 = vmatpush1.msra.mxu0 0.0
        %2161 = vmatprep.subr.mxu0 0.0
        %2162 = vmatpush1.msra.mxu0 0.0
        %2163 = vmatprep.subr.mxu0 0.0
        %2164 = vmatpush1.msra.mxu0 0.0
        %2165 = vmatprep.subr.mxu0 0.0
        %2166 = vmatpush1.msra.mxu0 0.0
        %2167 = vmatprep.subr.mxu0 0.0
        %2168 = vmatpush1.msra.mxu0 0.0
        %2169 = vmatprep.subr.mxu0 0.0
        %2170 = vmatpush1.msra.mxu0 0.0
        %2171 = vmatprep.subr.mxu0 0.0
        %2172 = vmatpush1.msra.mxu0 0.0
        %2173 = vmatprep.subr.mxu0 0.0
        %2174 = vmatpush1.msra.mxu0 0.0
        %2175 = vmatprep.subr.mxu0 0.0
        %2176 = vmatpush1.msra.mxu0 0.0
        %2177 = vmatprep.subr.mxu0 0.0
        %2178 = vmatpush1.msra.mxu0 0.0
        %2179 = vmatprep.subr.mxu0 0.0
        %2180 = vmatpush1.msra.mxu0 0.0
        %2181 = vmatprep.subr.mxu0 0.0
        %2182 = vmatpush1.msra.mxu0 0.0
        %2183 = vmatprep.subr.mxu0 0.0
        %2184 = vmatpush1.msra.mxu0 0.0
        %2185 = vmatprep.subr.mxu0 0.0
        %2186 = vmatpush1.msra.mxu0 0.0
        %2187 = vmatprep.subr.mxu0 0.0
        %2188 = vmatpush1.msra.mxu0 0.0
        %2189 = vmatprep.subr.mxu0 0.0
        %2190 = vmatpush1.msra.mxu0 0.0
        %2191 = vmatprep.subr.mxu0 0.0
        %2192 = vmatpush1.msra.mxu0 0.0
        %2193 = vmatprep.subr.mxu0 0.0
        %2194 = vmatpush1.msra.mxu0 0.0
        %2195 = vmatprep.subr.mxu0 0.0
        %2196 = vmatpush1.msra.mxu0 0.0
        %2197 = vmatprep.subr.mxu0 0.0
        %2198 = vmatpush1.msra.mxu0 0.0
        %2199 = vmatprep.mubr.f32.mxu0 0.0
        %2200 = vmatmul.mubr.f32.gmra.mrb[0].mxu0 %v2085
        %v2201 = vpop.f32.mrb[0].mxu0
        %v2202 = vadd.f32 0.0, %v2201
        %v2203 = vpop.f32.mrb[0].mxu0
        %2204 = vmatprep.mubr.f32.mxu0 0.0
        %2205 = vmatmul.mubr.f32.gmra.mrb[0].mxu0 %v2088
        %v2206 = vpop.f32.mrb[0].mxu0
        %v2207 = vadd.f32 0.0, %v2206
        %v2208 = vpop.f32.mrb[0].mxu0
        %2209 = vmatprep.mubr.f32.mxu0 0.0
        %2210 = vmatmul.mubr.f32.gmra.mrb[0].mxu0 %v2091
        %v2211 = vpop.f32.mrb[0].mxu0
        %v2212 = vadd.f32 0.0, %v2211
        %v2213 = vpop.f32.mrb[0].mxu0
        %2214 = vmatprep.mubr.f32.mxu0 0.0
        %2215 = vmatmul.mubr.f32.gmra.mrb[0].mxu0 %v2094
        %v2216 = vpop.f32.mrb[0].mxu0
        %v2217 = vadd.f32 0.0, %v2216
        %v2218 = vpop.f32.mrb[0].mxu0
        %2219 = vmatprep.mubr.f32.mxu0 0.0
        %2220 = vmatmul.mubr.f32.gmra.mrb[0].mxu0 %v2097
        %v2221 = vpop.f32.mrb[0].mxu0
        %v2222 = vadd.f32 0.0, %v2221
        %v2223 = vpop.f32.mrb[0].mxu0
        %2224 = vmatprep.mubr.f32.mxu0 0.0
        %2225 = vmatmul.mubr.f32.gmra.mrb[0].mxu0 %v2100
        %v2226 = vpop.f32.mrb[0].mxu0
        %v2227 = vadd.f32 0.0, %v2226
        %v2228 = vpop.f32.mrb[0].mxu0
        %2229 = vmatprep.mubr.f32.mxu0 0.0
        %2230 = vmatmul.mubr.f32.gmra.mrb[0].mxu0 %v2103
        %v2231 = vpop.f32.mrb[0].mxu0
        %v2232 = vadd.f32 0.0, %v2231
        %v2233 = vpop.f32.mrb[0].mxu0
        %2234 = vmatprep.mubr.f32.mxu0 0.0
        %2235 = vmatmul.mubr.f32.gmra.mrb[0].mxu0 %v2106
        %v2236 = vpop.f32.mrb[0].mxu0
        %v2237 = vadd.f32 0.0, %v2236
        %v2238 = vpop.f32.mrb[0].mxu0
        %2239 = vmatprep.mubr.f32.mxu0 0.0
        %2240 = vmatmul.mubr.f32.gmra.mrb[0].mxu0 %v2109
        %v2241 = vpop.f32.mrb[0].mxu0
        %v2242 = vadd.f32 0.0, %v2241
        %v2243 = vpop.f32.mrb[0].mxu0
        %2244 = vmatprep.mubr.f32.mxu0 0.0
        %2245 = vmatmul.mubr.f32.gmra.mrb[0].mxu0 %v2112
        %v2246 = vpop.f32.mrb[0].mxu0
        %v2247 = vadd.f32 0.0, %v2246
        %v2248 = vpop.f32.mrb[0].mxu0
        %2249 = vmatprep.mubr.f32.mxu0 0.0
        %2250 = vmatmul.mubr.f32.gmra.mrb[0].mxu0 %v2115
        %v2251 = vpop.f32.mrb[0].mxu0
        %v2252 = vadd.f32 0.0, %v2251
        %v2253 = vpop.f32.mrb[0].mxu0
        %2254 = vmatprep.mubr.f32.mxu0 0.0
        %2255 = vmatmul.mubr.f32.gmra.mrb[0].mxu0 %v2118
        %v2256 = vpop.f32.mrb[0].mxu0
        %v2257 = vadd.f32 0.0, %v2256
        %v2258 = vpop.f32.mrb[0].mxu0
        %2259 = vmatprep.mubr.f32.mxu0 0.0
        %2260 = vmatmul.mubr.f32.gmra.mrb[0].mxu0 %v2121
        %v2261 = vpop.f32.mrb[0].mxu0
        %v2262 = vadd.f32 0.0, %v2261
        %v2263 = vpop.f32.mrb[0].mxu0
        %2264 = vmatprep.mubr.f32.mxu0 0.0
        %2265 = vmatmul.mubr.f32.gmra.mrb[0].mxu0 %v2124
        %v2266 = vpop.f32.mrb[0].mxu0
        %v2267 = vadd.f32 0.0, %v2266
        %v2268 = vpop.f32.mrb[0].mxu0
        %2269 = vmatprep.mubr.f32.mxu0 0.0
        %2270 = vmatmul.mubr.f32.gmra.mrb[0].mxu0 %v2127
        %v2271 = vpop.f32.mrb[0].mxu0
        %v2272 = vadd.f32 0.0, %v2271
        %v2273 = vpop.f32.mrb[0].mxu0
        %2274 = vmatprep.mubr.f32.mxu0 0.0
        %2275 = vmatmul.mubr.f32.gmra.mrb[0].mxu0 %v2130
        %v2276 = vpop.f32.mrb[0].mxu0
        %v2277 = vadd.f32 0.0, %v2276
        %v2278 = vpop.f32.mrb[0].mxu0
        %2279 = vdwg.mxu0
        %v2280 = vadd.f32 %v2034, %v2202
        %v2281 = vadd.f32 %v2035, %v2207
        %v2282 = vadd.f32 %v2036, %v2212
        %v2283 = vadd.f32 %v2037, %v2217
        %v2284 = vadd.f32 %v2038, %v2222
        %v2285 = vadd.f32 %v2039, %v2227
        %v2286 = vadd.f32 %v2040, %v2232
        %v2287 = vadd.f32 %v2041, %v2237
        %v2288 = vadd.f32 %v2042, %v2242
        %v2289 = vadd.f32 %v2043, %v2247
        %v2290 = vadd.f32 %v2044, %v2252
        %v2291 = vadd.f32 %v2045, %v2257
        %v2292 = vadd.f32 %v2046, %v2262
        %v2293 = vadd.f32 %v2047, %v2267
        %v2294 = vadd.f32 %v2048, %v2272
        %v2295 = vadd.f32 %v2049, %v2277
        %v2296 = vld [vmem:[#allocation2 + $0x18] sm:$0xff]
        %v2297 = vld [vmem:[#allocation2 + $0x20] sm:$0xff]
        %v2298 = vld [vmem:[#allocation2 + $0x28] sm:$0xff]
        %v2299 = vld [vmem:[#allocation2 + $0x30] sm:$0xff]
        %v2300 = vld [vmem:[#allocation2 + $0x38] sm:$0xff]
        %v2301 = vld [vmem:[#allocation2 + $0x40] sm:$0xff]
        %v2302 = vld [vmem:[#allocation2 + $0x48] sm:$0xff]
        %v2303 = vld [vmem:[#allocation2 + $0x50] sm:$0xff]
        %v2304 = vld [vmem:[#allocation2 + $0x58] sm:$0xff]
        %v2305 = vld [vmem:[#allocation2 + $0x60] sm:$0xff]
        %v2306 = vld [vmem:[#allocation2 + $0x68] sm:$0xff]
        %v2307 = vld [vmem:[#allocation2 + $0x70] sm:$0xff]
        %v2308 = vld [vmem:[#allocation2 + $0x78] sm:$0xff]
        %v2309 = vld [vmem:[#allocation2 + $0x80] sm:$0xff]
        %v2310 = vld [vmem:[#allocation2 + $0x88] sm:$0xff]
        %v2311 = vld [vmem:[#allocation2 + $0x90] sm:$0xff]
        %s2312 = scalar_lea.vmem %s6, 16
        %v2313 = vld [vmem:[%s2312] sm:$0xf]
        %v2315 = vsel %vm1034, %v2296, 0
        %v2318 = vsel %vm1034, %v2297, 0
        %v2321 = vsel %vm1034, %v2298, 0
        %v2324 = vsel %vm1034, %v2299, 0
        %v2327 = vsel %vm1034, %v2300, 0
        %v2330 = vsel %vm1034, %v2301, 0
        %v2333 = vsel %vm1034, %v2302, 0
        %v2336 = vsel %vm1034, %v2303, 0
        %v2339 = vsel %vm1034, %v2304, 0
        %v2342 = vsel %vm1034, %v2305, 0
        %v2345 = vsel %vm1034, %v2306, 0
        %v2348 = vsel %vm1034, %v2307, 0
        %v2351 = vsel %vm1034, %v2308, 0
        %v2354 = vsel %vm1034, %v2309, 0
        %v2357 = vsel %vm1034, %v2310, 0
        %v2360 = vsel %vm1034, %v2311, 0
        %v2363 = vsel %vm1427, %v2313, 0
        %2365 = vmatprep.subr.mxu0 0.0
        %2366 = vmatpush1.msra.mxu0 %v2363
        %2367 = vmatprep.subr.mxu0 0.0
        %2368 = vmatpush1.msra.mxu0 0.0
        %2369 = vmatprep.subr.mxu0 0.0
        %2370 = vmatpush1.msra.mxu0 0.0
        %2371 = vmatprep.subr.mxu0 0.0
        %2372 = vmatpush1.msra.mxu0 0.0
        %2373 = vmatprep.subr.mxu0 0.0
        %2374 = vmatpush1.msra.mxu0 0.0
        %2375 = vmatprep.subr.mxu0 0.0
        %2376 = vmatpush1.msra.mxu0 0.0
        %2377 = vmatprep.subr.mxu0 0.0
        %2378 = vmatpush1.msra.mxu0 0.0
        %2379 = vmatprep.subr.mxu0 0.0
        %2380 = vmatpush1.msra.mxu0 0.0
        %2381 = vmatprep.subr.mxu0 0.0
        %2382 = vmatpush1.msra.mxu0 0.0
        %2383 = vmatprep.subr.mxu0 0.0
        %2384 = vmatpush1.msra.mxu0 0.0
        %2385 = vmatprep.subr.mxu0 0.0
        %2386 = vmatpush1.msra.mxu0 0.0
        %2387 = vmatprep.subr.mxu0 0.0
        %2388 = vmatpush1.msra.mxu0 0.0
        %2389 = vmatprep.subr.mxu0 0.0
        %2390 = vmatpush1.msra.mxu0 0.0
        %2391 = vmatprep.subr.mxu0 0.0
        %2392 = vmatpush1.msra.mxu0 0.0
        %2393 = vmatprep.subr.mxu0 0.0
        %2394 = vmatpush1.msra.mxu0 0.0
        %2395 = vmatprep.subr.mxu0 0.0
        %2396 = vmatpush1.msra.mxu0 0.0
        %2397 = vmatprep.subr.mxu0 0.0
        %2398 = vmatpush1.msra.mxu0 0.0
        %2399 = vmatprep.subr.mxu0 0.0
        %2400 = vmatpush1.msra.mxu0 0.0
        %2401 = vmatprep.subr.mxu0 0.0
        %2402 = vmatpush1.msra.mxu0 0.0
        %2403 = vmatprep.subr.mxu0 0.0
        %2404 = vmatpush1.msra.mxu0 0.0
        %2405 = vmatprep.subr.mxu0 0.0
        %2406 = vmatpush1.msra.mxu0 0.0
        %2407 = vmatprep.subr.mxu0 0.0
        %2408 = vmatpush1.msra.mxu0 0.0
        %2409 = vmatprep.subr.mxu0 0.0
        %2410 = vmatpush1.msra.mxu0 0.0
        %2411 = vmatprep.subr.mxu0 0.0
        %2412 = vmatpush1.msra.mxu0 0.0
        %2413 = vmatprep.subr.mxu0 0.0
        %2414 = vmatpush1.msra.mxu0 0.0
        %2415 = vmatprep.subr.mxu0 0.0
        %2416 = vmatpush1.msra.mxu0 0.0
        %2417 = vmatprep.subr.mxu0 0.0
        %2418 = vmatpush1.msra.mxu0 0.0
        %2419 = vmatprep.subr.mxu0 0.0
        %2420 = vmatpush1.msra.mxu0 0.0
        %2421 = vmatprep.subr.mxu0 0.0
        %2422 = vmatpush1.msra.mxu0 0.0
        %2423 = vmatprep.subr.mxu0 0.0
        %2424 = vmatpush1.msra.mxu0 0.0
        %2425 = vmatprep.subr.mxu0 0.0
        %2426 = vmatpush1.msra.mxu0 0.0
        %2427 = vmatprep.subr.mxu0 0.0
        %2428 = vmatpush1.msra.mxu0 0.0
        %2429 = vmatprep.mubr.f32.mxu0 0.0
        %2430 = vmatmul.mubr.f32.gmra.mrb[0].mxu0 %v2315
        %v2431 = vpop.f32.mrb[0].mxu0
        %v2432 = vadd.f32 0.0, %v2431
        %v2433 = vpop.f32.mrb[0].mxu0
        %2434 = vmatprep.mubr.f32.mxu0 0.0
        %2435 = vmatmul.mubr.f32.gmra.mrb[0].mxu0 %v2318
        %v2436 = vpop.f32.mrb[0].mxu0
        %v2437 = vadd.f32 0.0, %v2436
        %v2438 = vpop.f32.mrb[0].mxu0
        %2439 = vmatprep.mubr.f32.mxu0 0.0
        %2440 = vmatmul.mubr.f32.gmra.mrb[0].mxu0 %v2321
        %v2441 = vpop.f32.mrb[0].mxu0
        %v2442 = vadd.f32 0.0, %v2441
        %v2443 = vpop.f32.mrb[0].mxu0
        %2444 = vmatprep.mubr.f32.mxu0 0.0
        %2445 = vmatmul.mubr.f32.gmra.mrb[0].mxu0 %v2324
        %v2446 = vpop.f32.mrb[0].mxu0
        %v2447 = vadd.f32 0.0, %v2446
        %v2448 = vpop.f32.mrb[0].mxu0
        %2449 = vmatprep.mubr.f32.mxu0 0.0
        %2450 = vmatmul.mubr.f32.gmra.mrb[0].mxu0 %v2327
        %v2451 = vpop.f32.mrb[0].mxu0
        %v2452 = vadd.f32 0.0, %v2451
        %v2453 = vpop.f32.mrb[0].mxu0
        %2454 = vmatprep.mubr.f32.mxu0 0.0
        %2455 = vmatmul.mubr.f32.gmra.mrb[0].mxu0 %v2330
        %v2456 = vpop.f32.mrb[0].mxu0
        %v2457 = vadd.f32 0.0, %v2456
        %v2458 = vpop.f32.mrb[0].mxu0
        %2459 = vmatprep.mubr.f32.mxu0 0.0
        %2460 = vmatmul.mubr.f32.gmra.mrb[0].mxu0 %v2333
        %v2461 = vpop.f32.mrb[0].mxu0
        %v2462 = vadd.f32 0.0, %v2461
        %v2463 = vpop.f32.mrb[0].mxu0
        %2464 = vmatprep.mubr.f32.mxu0 0.0
        %2465 = vmatmul.mubr.f32.gmra.mrb[0].mxu0 %v2336
        %v2466 = vpop.f32.mrb[0].mxu0
        %v2467 = vadd.f32 0.0, %v2466
        %v2468 = vpop.f32.mrb[0].mxu0
        %2469 = vmatprep.mubr.f32.mxu0 0.0
        %2470 = vmatmul.mubr.f32.gmra.mrb[0].mxu0 %v2339
        %v2471 = vpop.f32.mrb[0].mxu0
        %v2472 = vadd.f32 0.0, %v2471
        %v2473 = vpop.f32.mrb[0].mxu0
        %2474 = vmatprep.mubr.f32.mxu0 0.0
        %2475 = vmatmul.mubr.f32.gmra.mrb[0].mxu0 %v2342
        %v2476 = vpop.f32.mrb[0].mxu0
        %v2477 = vadd.f32 0.0, %v2476
        %v2478 = vpop.f32.mrb[0].mxu0
        %2479 = vmatprep.mubr.f32.mxu0 0.0
        %2480 = vmatmul.mubr.f32.gmra.mrb[0].mxu0 %v2345
        %v2481 = vpop.f32.mrb[0].mxu0
        %v2482 = vadd.f32 0.0, %v2481
        %v2483 = vpop.f32.mrb[0].mxu0
        %2484 = vmatprep.mubr.f32.mxu0 0.0
        %2485 = vmatmul.mubr.f32.gmra.mrb[0].mxu0 %v2348
        %v2486 = vpop.f32.mrb[0].mxu0
        %v2487 = vadd.f32 0.0, %v2486
        %v2488 = vpop.f32.mrb[0].mxu0
        %2489 = vmatprep.mubr.f32.mxu0 0.0
        %2490 = vmatmul.mubr.f32.gmra.mrb[0].mxu0 %v2351
        %v2491 = vpop.f32.mrb[0].mxu0
        %v2492 = vadd.f32 0.0, %v2491
        %v2493 = vpop.f32.mrb[0].mxu0
        %2494 = vmatprep.mubr.f32.mxu0 0.0
        %2495 = vmatmul.mubr.f32.gmra.mrb[0].mxu0 %v2354
        %v2496 = vpop.f32.mrb[0].mxu0
        %v2497 = vadd.f32 0.0, %v2496
        %v2498 = vpop.f32.mrb[0].mxu0
        %2499 = vmatprep.mubr.f32.mxu0 0.0
        %2500 = vmatmul.mubr.f32.gmra.mrb[0].mxu0 %v2357
        %v2501 = vpop.f32.mrb[0].mxu0
        %v2502 = vadd.f32 0.0, %v2501
        %v2503 = vpop.f32.mrb[0].mxu0
        %2504 = vmatprep.mubr.f32.mxu0 0.0
        %2505 = vmatmul.mubr.f32.gmra.mrb[0].mxu0 %v2360
        %v2506 = vpop.f32.mrb[0].mxu0
        %v2507 = vadd.f32 0.0, %v2506
        %v2508 = vpop.f32.mrb[0].mxu0
        %2509 = vdwg.mxu0
        %v2510 = vadd.f32 %v2280, %v2432
        %v2511 = vadd.f32 %v2281, %v2437
        %v2512 = vadd.f32 %v2282, %v2442
        %v2513 = vadd.f32 %v2283, %v2447
        %v2514 = vadd.f32 %v2284, %v2452
        %v2515 = vadd.f32 %v2285, %v2457
        %v2516 = vadd.f32 %v2286, %v2462
        %v2517 = vadd.f32 %v2287, %v2467
        %v2518 = vadd.f32 %v2288, %v2472
        %v2519 = vadd.f32 %v2289, %v2477
        %v2520 = vadd.f32 %v2290, %v2482
        %v2521 = vadd.f32 %v2291, %v2487
        %v2522 = vadd.f32 %v2292, %v2492
        %v2523 = vadd.f32 %v2293, %v2497
        %v2524 = vadd.f32 %v2294, %v2502
        %v2525 = vadd.f32 %v2295, %v2507
        %v2526 = vld [vmem:[#allocation2 + $0x19] sm:$0xff]
        %v2527 = vld [vmem:[#allocation2 + $0x21] sm:$0xff]
        %v2528 = vld [vmem:[#allocation2 + $0x29] sm:$0xff]
        %v2529 = vld [vmem:[#allocation2 + $0x31] sm:$0xff]
        %v2530 = vld [vmem:[#allocation2 + $0x39] sm:$0xff]
        %v2531 = vld [vmem:[#allocation2 + $0x41] sm:$0xff]
        %v2532 = vld [vmem:[#allocation2 + $0x49] sm:$0xff]
        %v2533 = vld [vmem:[#allocation2 + $0x51] sm:$0xff]
        %v2534 = vld [vmem:[#allocation2 + $0x59] sm:$0xff]
        %v2535 = vld [vmem:[#allocation2 + $0x61] sm:$0xff]
        %v2536 = vld [vmem:[#allocation2 + $0x69] sm:$0xff]
        %v2537 = vld [vmem:[#allocation2 + $0x71] sm:$0xff]
        %v2538 = vld [vmem:[#allocation2 + $0x79] sm:$0xff]
        %v2539 = vld [vmem:[#allocation2 + $0x81] sm:$0xff]
        %v2540 = vld [vmem:[#allocation2 + $0x89] sm:$0xff]
        %v2541 = vld [vmem:[#allocation2 + $0x91] sm:$0xff]
        %v2542 = vsel %vm1804, %v2526, 0.0
        %v2543 = vsel %vm1805, %v2527, 0.0
        %v2544 = vsel %vm1806, %v2528, 0.0
        %v2545 = vsel %vm1807, %v2529, 0.0
        %v2546 = vsel %vm1808, %v2530, 0.0
        %v2547 = vsel %vm1809, %v2531, 0.0
        %v2548 = vsel %vm1810, %v2532, 0.0
        %v2549 = vsel %vm1811, %v2533, 0.0
        %v2550 = vsel %vm1812, %v2534, 0.0
        %v2551 = vsel %vm1813, %v2535, 0.0
        %v2552 = vsel %vm1814, %v2536, 0.0
        %v2553 = vsel %vm1815, %v2537, 0.0
        %v2554 = vsel %vm1816, %v2538, 0.0
        %v2555 = vsel %vm1817, %v2539, 0.0
        %v2556 = vsel %vm1818, %v2540, 0.0
        %v2557 = vsel %vm1819, %v2541, 0.0
        %s2558 = scalar_lea.vmem %s6, 20
        %v2559 = vld [vmem:[%s2558] sm:$0xf]
        %v2561 = vsel %vm1034, %v2542, 0
        %v2564 = vsel %vm1034, %v2543, 0
        %v2567 = vsel %vm1034, %v2544, 0
        %v2570 = vsel %vm1034, %v2545, 0
        %v2573 = vsel %vm1034, %v2546, 0
        %v2576 = vsel %vm1034, %v2547, 0
        %v2579 = vsel %vm1034, %v2548, 0
        %v2582 = vsel %vm1034, %v2549, 0
        %v2585 = vsel %vm1034, %v2550, 0
        %v2588 = vsel %vm1034, %v2551, 0
        %v2591 = vsel %vm1034, %v2552, 0
        %v2594 = vsel %vm1034, %v2553, 0
        %v2597 = vsel %vm1034, %v2554, 0
        %v2600 = vsel %vm1034, %v2555, 0
        %v2603 = vsel %vm1034, %v2556, 0
        %v2606 = vsel %vm1034, %v2557, 0
        %v2609 = vsel %vm1427, %v2559, 0
        %2611 = vmatprep.subr.mxu0 0.0
        %2612 = vmatpush1.msra.mxu0 %v2609
        %2613 = vmatprep.subr.mxu0 0.0
        %2614 = vmatpush1.msra.mxu0 0.0
        %2615 = vmatprep.subr.mxu0 0.0
        %2616 = vmatpush1.msra.mxu0 0.0
        %2617 = vmatprep.subr.mxu0 0.0
        %2618 = vmatpush1.msra.mxu0 0.0
        %2619 = vmatprep.subr.mxu0 0.0
        %2620 = vmatpush1.msra.mxu0 0.0
        %2621 = vmatprep.subr.mxu0 0.0
        %2622 = vmatpush1.msra.mxu0 0.0
        %2623 = vmatprep.subr.mxu0 0.0
        %2624 = vmatpush1.msra.mxu0 0.0
        %2625 = vmatprep.subr.mxu0 0.0
        %2626 = vmatpush1.msra.mxu0 0.0
        %2627 = vmatprep.subr.mxu0 0.0
        %2628 = vmatpush1.msra.mxu0 0.0
        %2629 = vmatprep.subr.mxu0 0.0
        %2630 = vmatpush1.msra.mxu0 0.0
        %2631 = vmatprep.subr.mxu0 0.0
        %2632 = vmatpush1.msra.mxu0 0.0
        %2633 = vmatprep.subr.mxu0 0.0
        %2634 = vmatpush1.msra.mxu0 0.0
        %2635 = vmatprep.subr.mxu0 0.0
        %2636 = vmatpush1.msra.mxu0 0.0
        %2637 = vmatprep.subr.mxu0 0.0
        %2638 = vmatpush1.msra.mxu0 0.0
        %2639 = vmatprep.subr.mxu0 0.0
        %2640 = vmatpush1.msra.mxu0 0.0
        %2641 = vmatprep.subr.mxu0 0.0
        %2642 = vmatpush1.msra.mxu0 0.0
        %2643 = vmatprep.subr.mxu0 0.0
        %2644 = vmatpush1.msra.mxu0 0.0
        %2645 = vmatprep.subr.mxu0 0.0
        %2646 = vmatpush1.msra.mxu0 0.0
        %2647 = vmatprep.subr.mxu0 0.0
        %2648 = vmatpush1.msra.mxu0 0.0
        %2649 = vmatprep.subr.mxu0 0.0
        %2650 = vmatpush1.msra.mxu0 0.0
        %2651 = vmatprep.subr.mxu0 0.0
        %2652 = vmatpush1.msra.mxu0 0.0
        %2653 = vmatprep.subr.mxu0 0.0
        %2654 = vmatpush1.msra.mxu0 0.0
        %2655 = vmatprep.subr.mxu0 0.0
        %2656 = vmatpush1.msra.mxu0 0.0
        %2657 = vmatprep.subr.mxu0 0.0
        %2658 = vmatpush1.msra.mxu0 0.0
        %2659 = vmatprep.subr.mxu0 0.0
        %2660 = vmatpush1.msra.mxu0 0.0
        %2661 = vmatprep.subr.mxu0 0.0
        %2662 = vmatpush1.msra.mxu0 0.0
        %2663 = vmatprep.subr.mxu0 0.0
        %2664 = vmatpush1.msra.mxu0 0.0
        %2665 = vmatprep.subr.mxu0 0.0
        %2666 = vmatpush1.msra.mxu0 0.0
        %2667 = vmatprep.subr.mxu0 0.0
        %2668 = vmatpush1.msra.mxu0 0.0
        %2669 = vmatprep.subr.mxu0 0.0
        %2670 = vmatpush1.msra.mxu0 0.0
        %2671 = vmatprep.subr.mxu0 0.0
        %2672 = vmatpush1.msra.mxu0 0.0
        %2673 = vmatprep.subr.mxu0 0.0
        %2674 = vmatpush1.msra.mxu0 0.0
        %2675 = vmatprep.mubr.f32.mxu0 0.0
        %2676 = vmatmul.mubr.f32.gmra.mrb[0].mxu0 %v2561
        %v2677 = vpop.f32.mrb[0].mxu0
        %v2678 = vadd.f32 0.0, %v2677
        %v2679 = vpop.f32.mrb[0].mxu0
        %2680 = vmatprep.mubr.f32.mxu0 0.0
        %2681 = vmatmul.mubr.f32.gmra.mrb[0].mxu0 %v2564
        %v2682 = vpop.f32.mrb[0].mxu0
        %v2683 = vadd.f32 0.0, %v2682
        %v2684 = vpop.f32.mrb[0].mxu0
        %2685 = vmatprep.mubr.f32.mxu0 0.0
        %2686 = vmatmul.mubr.f32.gmra.mrb[0].mxu0 %v2567
        %v2687 = vpop.f32.mrb[0].mxu0
        %v2688 = vadd.f32 0.0, %v2687
        %v2689 = vpop.f32.mrb[0].mxu0
        %2690 = vmatprep.mubr.f32.mxu0 0.0
        %2691 = vmatmul.mubr.f32.gmra.mrb[0].mxu0 %v2570
        %v2692 = vpop.f32.mrb[0].mxu0
        %v2693 = vadd.f32 0.0, %v2692
        %v2694 = vpop.f32.mrb[0].mxu0
        %2695 = vmatprep.mubr.f32.mxu0 0.0
        %2696 = vmatmul.mubr.f32.gmra.mrb[0].mxu0 %v2573
        %v2697 = vpop.f32.mrb[0].mxu0
        %v2698 = vadd.f32 0.0, %v2697
        %v2699 = vpop.f32.mrb[0].mxu0
        %2700 = vmatprep.mubr.f32.mxu0 0.0
        %2701 = vmatmul.mubr.f32.gmra.mrb[0].mxu0 %v2576
        %v2702 = vpop.f32.mrb[0].mxu0
        %v2703 = vadd.f32 0.0, %v2702
        %v2704 = vpop.f32.mrb[0].mxu0
        %2705 = vmatprep.mubr.f32.mxu0 0.0
        %2706 = vmatmul.mubr.f32.gmra.mrb[0].mxu0 %v2579
        %v2707 = vpop.f32.mrb[0].mxu0
        %v2708 = vadd.f32 0.0, %v2707
        %v2709 = vpop.f32.mrb[0].mxu0
        %2710 = vmatprep.mubr.f32.mxu0 0.0
        %2711 = vmatmul.mubr.f32.gmra.mrb[0].mxu0 %v2582
        %v2712 = vpop.f32.mrb[0].mxu0
        %v2713 = vadd.f32 0.0, %v2712
        %v2714 = vpop.f32.mrb[0].mxu0
        %2715 = vmatprep.mubr.f32.mxu0 0.0
        %2716 = vmatmul.mubr.f32.gmra.mrb[0].mxu0 %v2585
        %v2717 = vpop.f32.mrb[0].mxu0
        %v2718 = vadd.f32 0.0, %v2717
        %v2719 = vpop.f32.mrb[0].mxu0
        %2720 = vmatprep.mubr.f32.mxu0 0.0
        %2721 = vmatmul.mubr.f32.gmra.mrb[0].mxu0 %v2588
        %v2722 = vpop.f32.mrb[0].mxu0
        %v2723 = vadd.f32 0.0, %v2722
        %v2724 = vpop.f32.mrb[0].mxu0
        %2725 = vmatprep.mubr.f32.mxu0 0.0
        %2726 = vmatmul.mubr.f32.gmra.mrb[0].mxu0 %v2591
        %v2727 = vpop.f32.mrb[0].mxu0
        %v2728 = vadd.f32 0.0, %v2727
        %v2729 = vpop.f32.mrb[0].mxu0
        %2730 = vmatprep.mubr.f32.mxu0 0.0
        %2731 = vmatmul.mubr.f32.gmra.mrb[0].mxu0 %v2594
        %v2732 = vpop.f32.mrb[0].mxu0
        %v2733 = vadd.f32 0.0, %v2732
        %v2734 = vpop.f32.mrb[0].mxu0
        %2735 = vmatprep.mubr.f32.mxu0 0.0
        %2736 = vmatmul.mubr.f32.gmra.mrb[0].mxu0 %v2597
        %v2737 = vpop.f32.mrb[0].mxu0
        %v2738 = vadd.f32 0.0, %v2737
        %v2739 = vpop.f32.mrb[0].mxu0
        %2740 = vmatprep.mubr.f32.mxu0 0.0
        %2741 = vmatmul.mubr.f32.gmra.mrb[0].mxu0 %v2600
        %v2742 = vpop.f32.mrb[0].mxu0
        %v2743 = vadd.f32 0.0, %v2742
        %v2744 = vpop.f32.mrb[0].mxu0
        %2745 = vmatprep.mubr.f32.mxu0 0.0
        %2746 = vmatmul.mubr.f32.gmra.mrb[0].mxu0 %v2603
        %v2747 = vpop.f32.mrb[0].mxu0
        %v2748 = vadd.f32 0.0, %v2747
        %v2749 = vpop.f32.mrb[0].mxu0
        %2750 = vmatprep.mubr.f32.mxu0 0.0
        %2751 = vmatmul.mubr.f32.gmra.mrb[0].mxu0 %v2606
        %v2752 = vpop.f32.mrb[0].mxu0
        %v2753 = vadd.f32 0.0, %v2752
        %v2754 = vpop.f32.mrb[0].mxu0
        %2755 = vdwg.mxu0
        %v2756 = vadd.f32 %v2510, %v2678
        %v2757 = vadd.f32 %v2511, %v2683
        %v2758 = vadd.f32 %v2512, %v2688
        %v2759 = vadd.f32 %v2513, %v2693
        %v2760 = vadd.f32 %v2514, %v2698
        %v2761 = vadd.f32 %v2515, %v2703
        %v2762 = vadd.f32 %v2516, %v2708
        %v2763 = vadd.f32 %v2517, %v2713
        %v2764 = vadd.f32 %v2518, %v2718
        %v2765 = vadd.f32 %v2519, %v2723
        %v2766 = vadd.f32 %v2520, %v2728
        %v2767 = vadd.f32 %v2521, %v2733
        %v2768 = vadd.f32 %v2522, %v2738
        %v2769 = vadd.f32 %v2523, %v2743
        %v2770 = vadd.f32 %v2524, %v2748
        %v2771 = vadd.f32 %v2525, %v2753
        %v2772 = vld [vmem:[#allocation2 + $0x27] sm:$0xff]
        %v2773 = vld [vmem:[#allocation2 + $0x2f] sm:$0xff]
        %v2774 = vld [vmem:[#allocation2 + $0x37] sm:$0xff]
        %v2775 = vld [vmem:[#allocation2 + $0x3f] sm:$0xff]
        %v2776 = vld [vmem:[#allocation2 + $0x47] sm:$0xff]
        %v2777 = vld [vmem:[#allocation2 + $0x4f] sm:$0xff]
        %v2778 = vld [vmem:[#allocation2 + $0x57] sm:$0xff]
        %v2779 = vld [vmem:[#allocation2 + $0x5f] sm:$0xff]
        %v2780 = vld [vmem:[#allocation2 + $0x67] sm:$0xff]
        %v2781 = vld [vmem:[#allocation2 + $0x6f] sm:$0xff]
        %v2782 = vld [vmem:[#allocation2 + $0x77] sm:$0xff]
        %v2783 = vld [vmem:[#allocation2 + $0x7f] sm:$0xff]
        %v2784 = vld [vmem:[#allocation2 + $0x87] sm:$0xff]
        %v2785 = vld [vmem:[#allocation2 + $0x8f] sm:$0xff]
        %v2786 = vld [vmem:[#allocation2 + $0x97] sm:$0xff]
        %v2787 = vld [vmem:[#allocation2 + $0x9f] sm:$0xff]
        %v2788 = vsel %vm1328, %v2772, 0.0
        %v2789 = vsel %vm1329, %v2773, 0.0
        %v2790 = vsel %vm1330, %v2774, 0.0
        %v2791 = vsel %vm1331, %v2775, 0.0
        %v2792 = vsel %vm1332, %v2776, 0.0
        %v2793 = vsel %vm1333, %v2777, 0.0
        %v2794 = vsel %vm1334, %v2778, 0.0
        %v2795 = vsel %vm1335, %v2779, 0.0
        %v2796 = vsel %vm1336, %v2780, 0.0
        %v2797 = vsel %vm1337, %v2781, 0.0
        %v2798 = vsel %vm1338, %v2782, 0.0
        %v2799 = vsel %vm1339, %v2783, 0.0
        %v2800 = vsel %vm1340, %v2784, 0.0
        %v2801 = vsel %vm1341, %v2785, 0.0
        %v2802 = vsel %vm1342, %v2786, 0.0
        %v2803 = vsel %vm1343, %v2787, 0.0
        %s2804 = scalar_lea.vmem %s6, 24
        %v2805 = vld [vmem:[%s2804] sm:$0xf]
        %v2807 = vsel %vm1034, %v2788, 0
        %v2810 = vsel %vm1034, %v2789, 0
        %v2813 = vsel %vm1034, %v2790, 0
        %v2816 = vsel %vm1034, %v2791, 0
        %v2819 = vsel %vm1034, %v2792, 0
        %v2822 = vsel %vm1034, %v2793, 0
        %v2825 = vsel %vm1034, %v2794, 0
        %v2828 = vsel %vm1034, %v2795, 0
        %v2831 = vsel %vm1034, %v2796, 0
        %v2834 = vsel %vm1034, %v2797, 0
        %v2837 = vsel %vm1034, %v2798, 0
        %v2840 = vsel %vm1034, %v2799, 0
        %v2843 = vsel %vm1034, %v2800, 0
        %v2846 = vsel %vm1034, %v2801, 0
        %v2849 = vsel %vm1034, %v2802, 0
        %v2852 = vsel %vm1034, %v2803, 0
        %v2855 = vsel %vm1427, %v2805, 0
        %2857 = vmatprep.subr.mxu0 0.0
        %2858 = vmatpush1.msra.mxu0 %v2855
        %2859 = vmatprep.subr.mxu0 0.0
        %2860 = vmatpush1.msra.mxu0 0.0
        %2861 = vmatprep.subr.mxu0 0.0
        %2862 = vmatpush1.msra.mxu0 0.0
        %2863 = vmatprep.subr.mxu0 0.0
        %2864 = vmatpush1.msra.mxu0 0.0
        %2865 = vmatprep.subr.mxu0 0.0
        %2866 = vmatpush1.msra.mxu0 0.0
        %2867 = vmatprep.subr.mxu0 0.0
        %2868 = vmatpush1.msra.mxu0 0.0
        %2869 = vmatprep.subr.mxu0 0.0
        %2870 = vmatpush1.msra.mxu0 0.0
        %2871 = vmatprep.subr.mxu0 0.0
        %2872 = vmatpush1.msra.mxu0 0.0
        %2873 = vmatprep.subr.mxu0 0.0
        %2874 = vmatpush1.msra.mxu0 0.0
        %2875 = vmatprep.subr.mxu0 0.0
        %2876 = vmatpush1.msra.mxu0 0.0
        %2877 = vmatprep.subr.mxu0 0.0
        %2878 = vmatpush1.msra.mxu0 0.0
        %2879 = vmatprep.subr.mxu0 0.0
        %2880 = vmatpush1.msra.mxu0 0.0
        %2881 = vmatprep.subr.mxu0 0.0
        %2882 = vmatpush1.msra.mxu0 0.0
        %2883 = vmatprep.subr.mxu0 0.0
        %2884 = vmatpush1.msra.mxu0 0.0
        %2885 = vmatprep.subr.mxu0 0.0
        %2886 = vmatpush1.msra.mxu0 0.0
        %2887 = vmatprep.subr.mxu0 0.0
        %2888 = vmatpush1.msra.mxu0 0.0
        %2889 = vmatprep.subr.mxu0 0.0
        %2890 = vmatpush1.msra.mxu0 0.0
        %2891 = vmatprep.subr.mxu0 0.0
        %2892 = vmatpush1.msra.mxu0 0.0
        %2893 = vmatprep.subr.mxu0 0.0
        %2894 = vmatpush1.msra.mxu0 0.0
        %2895 = vmatprep.subr.mxu0 0.0
        %2896 = vmatpush1.msra.mxu0 0.0
        %2897 = vmatprep.subr.mxu0 0.0
        %2898 = vmatpush1.msra.mxu0 0.0
        %2899 = vmatprep.subr.mxu0 0.0
        %2900 = vmatpush1.msra.mxu0 0.0
        %2901 = vmatprep.subr.mxu0 0.0
        %2902 = vmatpush1.msra.mxu0 0.0
        %2903 = vmatprep.subr.mxu0 0.0
        %2904 = vmatpush1.msra.mxu0 0.0
        %2905 = vmatprep.subr.mxu0 0.0
        %2906 = vmatpush1.msra.mxu0 0.0
        %2907 = vmatprep.subr.mxu0 0.0
        %2908 = vmatpush1.msra.mxu0 0.0
        %2909 = vmatprep.subr.mxu0 0.0
        %2910 = vmatpush1.msra.mxu0 0.0
        %2911 = vmatprep.subr.mxu0 0.0
        %2912 = vmatpush1.msra.mxu0 0.0
        %2913 = vmatprep.subr.mxu0 0.0
        %2914 = vmatpush1.msra.mxu0 0.0
        %2915 = vmatprep.subr.mxu0 0.0
        %2916 = vmatpush1.msra.mxu0 0.0
        %2917 = vmatprep.subr.mxu0 0.0
        %2918 = vmatpush1.msra.mxu0 0.0
        %2919 = vmatprep.subr.mxu0 0.0
        %2920 = vmatpush1.msra.mxu0 0.0
        %2921 = vmatprep.mubr.f32.mxu0 0.0
        %2922 = vmatmul.mubr.f32.gmra.mrb[0].mxu0 %v2807
        %v2923 = vpop.f32.mrb[0].mxu0
        %v2924 = vadd.f32 0.0, %v2923
        %v2925 = vpop.f32.mrb[0].mxu0
        %2926 = vmatprep.mubr.f32.mxu0 0.0
        %2927 = vmatmul.mubr.f32.gmra.mrb[0].mxu0 %v2810
        %v2928 = vpop.f32.mrb[0].mxu0
        %v2929 = vadd.f32 0.0, %v2928
        %v2930 = vpop.f32.mrb[0].mxu0
        %2931 = vmatprep.mubr.f32.mxu0 0.0
        %2932 = vmatmul.mubr.f32.gmra.mrb[0].mxu0 %v2813
        %v2933 = vpop.f32.mrb[0].mxu0
        %v2934 = vadd.f32 0.0, %v2933
        %v2935 = vpop.f32.mrb[0].mxu0
        %2936 = vmatprep.mubr.f32.mxu0 0.0
        %2937 = vmatmul.mubr.f32.gmra.mrb[0].mxu0 %v2816
        %v2938 = vpop.f32.mrb[0].mxu0
        %v2939 = vadd.f32 0.0, %v2938
        %v2940 = vpop.f32.mrb[0].mxu0
        %2941 = vmatprep.mubr.f32.mxu0 0.0
        %2942 = vmatmul.mubr.f32.gmra.mrb[0].mxu0 %v2819
        %v2943 = vpop.f32.mrb[0].mxu0
        %v2944 = vadd.f32 0.0, %v2943
        %v2945 = vpop.f32.mrb[0].mxu0
        %2946 = vmatprep.mubr.f32.mxu0 0.0
        %2947 = vmatmul.mubr.f32.gmra.mrb[0].mxu0 %v2822
        %v2948 = vpop.f32.mrb[0].mxu0
        %v2949 = vadd.f32 0.0, %v2948
        %v2950 = vpop.f32.mrb[0].mxu0
        %2951 = vmatprep.mubr.f32.mxu0 0.0
        %2952 = vmatmul.mubr.f32.gmra.mrb[0].mxu0 %v2825
        %v2953 = vpop.f32.mrb[0].mxu0
        %v2954 = vadd.f32 0.0, %v2953
        %v2955 = vpop.f32.mrb[0].mxu0
        %2956 = vmatprep.mubr.f32.mxu0 0.0
        %2957 = vmatmul.mubr.f32.gmra.mrb[0].mxu0 %v2828
        %v2958 = vpop.f32.mrb[0].mxu0
        %v2959 = vadd.f32 0.0, %v2958
        %v2960 = vpop.f32.mrb[0].mxu0
        %2961 = vmatprep.mubr.f32.mxu0 0.0
        %2962 = vmatmul.mubr.f32.gmra.mrb[0].mxu0 %v2831
        %v2963 = vpop.f32.mrb[0].mxu0
        %v2964 = vadd.f32 0.0, %v2963
        %v2965 = vpop.f32.mrb[0].mxu0
        %2966 = vmatprep.mubr.f32.mxu0 0.0
        %2967 = vmatmul.mubr.f32.gmra.mrb[0].mxu0 %v2834
        %v2968 = vpop.f32.mrb[0].mxu0
        %v2969 = vadd.f32 0.0, %v2968
        %v2970 = vpop.f32.mrb[0].mxu0
        %2971 = vmatprep.mubr.f32.mxu0 0.0
        %2972 = vmatmul.mubr.f32.gmra.mrb[0].mxu0 %v2837
        %v2973 = vpop.f32.mrb[0].mxu0
        %v2974 = vadd.f32 0.0, %v2973
        %v2975 = vpop.f32.mrb[0].mxu0
        %2976 = vmatprep.mubr.f32.mxu0 0.0
        %2977 = vmatmul.mubr.f32.gmra.mrb[0].mxu0 %v2840
        %v2978 = vpop.f32.mrb[0].mxu0
        %v2979 = vadd.f32 0.0, %v2978
        %v2980 = vpop.f32.mrb[0].mxu0
        %2981 = vmatprep.mubr.f32.mxu0 0.0
        %2982 = vmatmul.mubr.f32.gmra.mrb[0].mxu0 %v2843
        %v2983 = vpop.f32.mrb[0].mxu0
        %v2984 = vadd.f32 0.0, %v2983
        %v2985 = vpop.f32.mrb[0].mxu0
        %2986 = vmatprep.mubr.f32.mxu0 0.0
        %2987 = vmatmul.mubr.f32.gmra.mrb[0].mxu0 %v2846
        %v2988 = vpop.f32.mrb[0].mxu0
        %v2989 = vadd.f32 0.0, %v2988
        %v2990 = vpop.f32.mrb[0].mxu0
        %2991 = vmatprep.mubr.f32.mxu0 0.0
        %2992 = vmatmul.mubr.f32.gmra.mrb[0].mxu0 %v2849
        %v2993 = vpop.f32.mrb[0].mxu0
        %v2994 = vadd.f32 0.0, %v2993
        %v2995 = vpop.f32.mrb[0].mxu0
        %2996 = vmatprep.mubr.f32.mxu0 0.0
        %2997 = vmatmul.mubr.f32.gmra.mrb[0].mxu0 %v2852
        %v2998 = vpop.f32.mrb[0].mxu0
        %v2999 = vadd.f32 0.0, %v2998
        %v3000 = vpop.f32.mrb[0].mxu0
        %3001 = vdwg.mxu0
        %v3002 = vadd.f32 %v2756, %v2924
        %v3003 = vadd.f32 %v2757, %v2929
        %v3004 = vadd.f32 %v2758, %v2934
        %v3005 = vadd.f32 %v2759, %v2939
        %v3006 = vadd.f32 %v2760, %v2944
        %v3007 = vadd.f32 %v2761, %v2949
        %v3008 = vadd.f32 %v2762, %v2954
        %v3009 = vadd.f32 %v2763, %v2959
        %v3010 = vadd.f32 %v2764, %v2964
        %v3011 = vadd.f32 %v2765, %v2969
        %v3012 = vadd.f32 %v2766, %v2974
        %v3013 = vadd.f32 %v2767, %v2979
        %v3014 = vadd.f32 %v2768, %v2984
        %v3015 = vadd.f32 %v2769, %v2989
        %v3016 = vadd.f32 %v2770, %v2994
        %v3017 = vadd.f32 %v2771, %v2999
        %v3018 = vld [vmem:[#allocation2 + $0x28] sm:$0xff]
        %v3019 = vld [vmem:[#allocation2 + $0x30] sm:$0xff]
        %v3020 = vld [vmem:[#allocation2 + $0x38] sm:$0xff]
        %v3021 = vld [vmem:[#allocation2 + $0x40] sm:$0xff]
        %v3022 = vld [vmem:[#allocation2 + $0x48] sm:$0xff]
        %v3023 = vld [vmem:[#allocation2 + $0x50] sm:$0xff]
        %v3024 = vld [vmem:[#allocation2 + $0x58] sm:$0xff]
        %v3025 = vld [vmem:[#allocation2 + $0x60] sm:$0xff]
        %v3026 = vld [vmem:[#allocation2 + $0x68] sm:$0xff]
        %v3027 = vld [vmem:[#allocation2 + $0x70] sm:$0xff]
        %v3028 = vld [vmem:[#allocation2 + $0x78] sm:$0xff]
        %v3029 = vld [vmem:[#allocation2 + $0x80] sm:$0xff]
        %v3030 = vld [vmem:[#allocation2 + $0x88] sm:$0xff]
        %v3031 = vld [vmem:[#allocation2 + $0x90] sm:$0xff]
        %v3032 = vld [vmem:[#allocation2 + $0x98] sm:$0xff]
        %v3033 = vld [vmem:[#allocation2 + $0xa0] sm:$0xff]
        %s3034 = scalar_lea.vmem %s6, 28
        %v3035 = vld [vmem:[%s3034] sm:$0xf]
        %v3037 = vsel %vm1034, %v3018, 0
        %v3040 = vsel %vm1034, %v3019, 0
        %v3043 = vsel %vm1034, %v3020, 0
        %v3046 = vsel %vm1034, %v3021, 0
        %v3049 = vsel %vm1034, %v3022, 0
        %v3052 = vsel %vm1034, %v3023, 0
        %v3055 = vsel %vm1034, %v3024, 0
        %v3058 = vsel %vm1034, %v3025, 0
        %v3061 = vsel %vm1034, %v3026, 0
        %v3064 = vsel %vm1034, %v3027, 0
        %v3067 = vsel %vm1034, %v3028, 0
        %v3070 = vsel %vm1034, %v3029, 0
        %v3073 = vsel %vm1034, %v3030, 0
        %v3076 = vsel %vm1034, %v3031, 0
        %v3079 = vsel %vm1034, %v3032, 0
        %v3082 = vsel %vm1034, %v3033, 0
        %v3085 = vsel %vm1427, %v3035, 0
        %3087 = vmatprep.subr.mxu0 0.0
        %3088 = vmatpush1.msra.mxu0 %v3085
        %3089 = vmatprep.subr.mxu0 0.0
        %3090 = vmatpush1.msra.mxu0 0.0
        %3091 = vmatprep.subr.mxu0 0.0
        %3092 = vmatpush1.msra.mxu0 0.0
        %3093 = vmatprep.subr.mxu0 0.0
        %3094 = vmatpush1.msra.mxu0 0.0
        %3095 = vmatprep.subr.mxu0 0.0
        %3096 = vmatpush1.msra.mxu0 0.0
        %3097 = vmatprep.subr.mxu0 0.0
        %3098 = vmatpush1.msra.mxu0 0.0
        %3099 = vmatprep.subr.mxu0 0.0
        %3100 = vmatpush1.msra.mxu0 0.0
        %3101 = vmatprep.subr.mxu0 0.0
        %3102 = vmatpush1.msra.mxu0 0.0
        %3103 = vmatprep.subr.mxu0 0.0
        %3104 = vmatpush1.msra.mxu0 0.0
        %3105 = vmatprep.subr.mxu0 0.0
        %3106 = vmatpush1.msra.mxu0 0.0
        %3107 = vmatprep.subr.mxu0 0.0
        %3108 = vmatpush1.msra.mxu0 0.0
        %3109 = vmatprep.subr.mxu0 0.0
        %3110 = vmatpush1.msra.mxu0 0.0
        %3111 = vmatprep.subr.mxu0 0.0
        %3112 = vmatpush1.msra.mxu0 0.0
        %3113 = vmatprep.subr.mxu0 0.0
        %3114 = vmatpush1.msra.mxu0 0.0
        %3115 = vmatprep.subr.mxu0 0.0
        %3116 = vmatpush1.msra.mxu0 0.0
        %3117 = vmatprep.subr.mxu0 0.0
        %3118 = vmatpush1.msra.mxu0 0.0
        %3119 = vmatprep.subr.mxu0 0.0
        %3120 = vmatpush1.msra.mxu0 0.0
        %3121 = vmatprep.subr.mxu0 0.0
        %3122 = vmatpush1.msra.mxu0 0.0
        %3123 = vmatprep.subr.mxu0 0.0
        %3124 = vmatpush1.msra.mxu0 0.0
        %3125 = vmatprep.subr.mxu0 0.0
        %3126 = vmatpush1.msra.mxu0 0.0
        %3127 = vmatprep.subr.mxu0 0.0
        %3128 = vmatpush1.msra.mxu0 0.0
        %3129 = vmatprep.subr.mxu0 0.0
        %3130 = vmatpush1.msra.mxu0 0.0
        %3131 = vmatprep.subr.mxu0 0.0
        %3132 = vmatpush1.msra.mxu0 0.0
        %3133 = vmatprep.subr.mxu0 0.0
        %3134 = vmatpush1.msra.mxu0 0.0
        %3135 = vmatprep.subr.mxu0 0.0
        %3136 = vmatpush1.msra.mxu0 0.0
        %3137 = vmatprep.subr.mxu0 0.0
        %3138 = vmatpush1.msra.mxu0 0.0
        %3139 = vmatprep.subr.mxu0 0.0
        %3140 = vmatpush1.msra.mxu0 0.0
        %3141 = vmatprep.subr.mxu0 0.0
        %3142 = vmatpush1.msra.mxu0 0.0
        %3143 = vmatprep.subr.mxu0 0.0
        %3144 = vmatpush1.msra.mxu0 0.0
        %3145 = vmatprep.subr.mxu0 0.0
        %3146 = vmatpush1.msra.mxu0 0.0
        %3147 = vmatprep.subr.mxu0 0.0
        %3148 = vmatpush1.msra.mxu0 0.0
        %3149 = vmatprep.subr.mxu0 0.0
        %3150 = vmatpush1.msra.mxu0 0.0
        %3151 = vmatprep.mubr.f32.mxu0 0.0
        %3152 = vmatmul.mubr.f32.gmra.mrb[0].mxu0 %v3037
        %v3153 = vpop.f32.mrb[0].mxu0
        %v3154 = vadd.f32 0.0, %v3153
        %v3155 = vpop.f32.mrb[0].mxu0
        %3156 = vmatprep.mubr.f32.mxu0 0.0
        %3157 = vmatmul.mubr.f32.gmra.mrb[0].mxu0 %v3040
        %v3158 = vpop.f32.mrb[0].mxu0
        %v3159 = vadd.f32 0.0, %v3158
        %v3160 = vpop.f32.mrb[0].mxu0
        %3161 = vmatprep.mubr.f32.mxu0 0.0
        %3162 = vmatmul.mubr.f32.gmra.mrb[0].mxu0 %v3043
        %v3163 = vpop.f32.mrb[0].mxu0
        %v3164 = vadd.f32 0.0, %v3163
        %v3165 = vpop.f32.mrb[0].mxu0
        %3166 = vmatprep.mubr.f32.mxu0 0.0
        %3167 = vmatmul.mubr.f32.gmra.mrb[0].mxu0 %v3046
        %v3168 = vpop.f32.mrb[0].mxu0
        %v3169 = vadd.f32 0.0, %v3168
        %v3170 = vpop.f32.mrb[0].mxu0
        %3171 = vmatprep.mubr.f32.mxu0 0.0
        %3172 = vmatmul.mubr.f32.gmra.mrb[0].mxu0 %v3049
        %v3173 = vpop.f32.mrb[0].mxu0
        %v3174 = vadd.f32 0.0, %v3173
        %v3175 = vpop.f32.mrb[0].mxu0
        %3176 = vmatprep.mubr.f32.mxu0 0.0
        %3177 = vmatmul.mubr.f32.gmra.mrb[0].mxu0 %v3052
        %v3178 = vpop.f32.mrb[0].mxu0
        %v3179 = vadd.f32 0.0, %v3178
        %v3180 = vpop.f32.mrb[0].mxu0
        %3181 = vmatprep.mubr.f32.mxu0 0.0
        %3182 = vmatmul.mubr.f32.gmra.mrb[0].mxu0 %v3055
        %v3183 = vpop.f32.mrb[0].mxu0
        %v3184 = vadd.f32 0.0, %v3183
        %v3185 = vpop.f32.mrb[0].mxu0
        %3186 = vmatprep.mubr.f32.mxu0 0.0
        %3187 = vmatmul.mubr.f32.gmra.mrb[0].mxu0 %v3058
        %v3188 = vpop.f32.mrb[0].mxu0
        %v3189 = vadd.f32 0.0, %v3188
        %v3190 = vpop.f32.mrb[0].mxu0
        %3191 = vmatprep.mubr.f32.mxu0 0.0
        %3192 = vmatmul.mubr.f32.gmra.mrb[0].mxu0 %v3061
        %v3193 = vpop.f32.mrb[0].mxu0
        %v3194 = vadd.f32 0.0, %v3193
        %v3195 = vpop.f32.mrb[0].mxu0
        %3196 = vmatprep.mubr.f32.mxu0 0.0
        %3197 = vmatmul.mubr.f32.gmra.mrb[0].mxu0 %v3064
        %v3198 = vpop.f32.mrb[0].mxu0
        %v3199 = vadd.f32 0.0, %v3198
        %v3200 = vpop.f32.mrb[0].mxu0
        %3201 = vmatprep.mubr.f32.mxu0 0.0
        %3202 = vmatmul.mubr.f32.gmra.mrb[0].mxu0 %v3067
        %v3203 = vpop.f32.mrb[0].mxu0
        %v3204 = vadd.f32 0.0, %v3203
        %v3205 = vpop.f32.mrb[0].mxu0
        %3206 = vmatprep.mubr.f32.mxu0 0.0
        %3207 = vmatmul.mubr.f32.gmra.mrb[0].mxu0 %v3070
        %v3208 = vpop.f32.mrb[0].mxu0
        %v3209 = vadd.f32 0.0, %v3208
        %v3210 = vpop.f32.mrb[0].mxu0
        %3211 = vmatprep.mubr.f32.mxu0 0.0
        %3212 = vmatmul.mubr.f32.gmra.mrb[0].mxu0 %v3073
        %v3213 = vpop.f32.mrb[0].mxu0
        %v3214 = vadd.f32 0.0, %v3213
        %v3215 = vpop.f32.mrb[0].mxu0
        %3216 = vmatprep.mubr.f32.mxu0 0.0
        %3217 = vmatmul.mubr.f32.gmra.mrb[0].mxu0 %v3076
        %v3218 = vpop.f32.mrb[0].mxu0
        %v3219 = vadd.f32 0.0, %v3218
        %v3220 = vpop.f32.mrb[0].mxu0
        %3221 = vmatprep.mubr.f32.mxu0 0.0
        %3222 = vmatmul.mubr.f32.gmra.mrb[0].mxu0 %v3079
        %v3223 = vpop.f32.mrb[0].mxu0
        %v3224 = vadd.f32 0.0, %v3223
        %v3225 = vpop.f32.mrb[0].mxu0
        %3226 = vmatprep.mubr.f32.mxu0 0.0
        %3227 = vmatmul.mubr.f32.gmra.mrb[0].mxu0 %v3082
        %v3228 = vpop.f32.mrb[0].mxu0
        %v3229 = vadd.f32 0.0, %v3228
        %v3230 = vpop.f32.mrb[0].mxu0
        %3231 = vdwg.mxu0
        %v3232 = vadd.f32 %v3002, %v3154
        %v3233 = vadd.f32 %v3003, %v3159
        %v3234 = vadd.f32 %v3004, %v3164
        %v3235 = vadd.f32 %v3005, %v3169
        %v3236 = vadd.f32 %v3006, %v3174
        %v3237 = vadd.f32 %v3007, %v3179
        %v3238 = vadd.f32 %v3008, %v3184
        %v3239 = vadd.f32 %v3009, %v3189
        %v3240 = vadd.f32 %v3010, %v3194
        %v3241 = vadd.f32 %v3011, %v3199
        %v3242 = vadd.f32 %v3012, %v3204
        %v3243 = vadd.f32 %v3013, %v3209
        %v3244 = vadd.f32 %v3014, %v3214
        %v3245 = vadd.f32 %v3015, %v3219
        %v3246 = vadd.f32 %v3016, %v3224
        %v3247 = vadd.f32 %v3017, %v3229
        %v3248 = vld [vmem:[#allocation2 + $0x29] sm:$0xff]
        %v3249 = vld [vmem:[#allocation2 + $0x31] sm:$0xff]
        %v3250 = vld [vmem:[#allocation2 + $0x39] sm:$0xff]
        %v3251 = vld [vmem:[#allocation2 + $0x41] sm:$0xff]
        %v3252 = vld [vmem:[#allocation2 + $0x49] sm:$0xff]
        %v3253 = vld [vmem:[#allocation2 + $0x51] sm:$0xff]
        %v3254 = vld [vmem:[#allocation2 + $0x59] sm:$0xff]
        %v3255 = vld [vmem:[#allocation2 + $0x61] sm:$0xff]
        %v3256 = vld [vmem:[#allocation2 + $0x69] sm:$0xff]
        %v3257 = vld [vmem:[#allocation2 + $0x71] sm:$0xff]
        %v3258 = vld [vmem:[#allocation2 + $0x79] sm:$0xff]
        %v3259 = vld [vmem:[#allocation2 + $0x81] sm:$0xff]
        %v3260 = vld [vmem:[#allocation2 + $0x89] sm:$0xff]
        %v3261 = vld [vmem:[#allocation2 + $0x91] sm:$0xff]
        %v3262 = vld [vmem:[#allocation2 + $0x99] sm:$0xff]
        %v3263 = vld [vmem:[#allocation2 + $0xa1] sm:$0xff]
        %v3264 = vsel %vm1804, %v3248, 0.0
        %v3265 = vsel %vm1805, %v3249, 0.0
        %v3266 = vsel %vm1806, %v3250, 0.0
        %v3267 = vsel %vm1807, %v3251, 0.0
        %v3268 = vsel %vm1808, %v3252, 0.0
        %v3269 = vsel %vm1809, %v3253, 0.0
        %v3270 = vsel %vm1810, %v3254, 0.0
        %v3271 = vsel %vm1811, %v3255, 0.0
        %v3272 = vsel %vm1812, %v3256, 0.0
        %v3273 = vsel %vm1813, %v3257, 0.0
        %v3274 = vsel %vm1814, %v3258, 0.0
        %v3275 = vsel %vm1815, %v3259, 0.0
        %v3276 = vsel %vm1816, %v3260, 0.0
        %v3277 = vsel %vm1817, %v3261, 0.0
        %v3278 = vsel %vm1818, %v3262, 0.0
        %v3279 = vsel %vm1819, %v3263, 0.0
        %s3280 = scalar_lea.vmem %s6, 32
        %v3281 = vld [vmem:[%s3280] sm:$0xf]
        %v3283 = vsel %vm1034, %v3264, 0
        %v3286 = vsel %vm1034, %v3265, 0
        %v3289 = vsel %vm1034, %v3266, 0
        %v3292 = vsel %vm1034, %v3267, 0
        %v3295 = vsel %vm1034, %v3268, 0
        %v3298 = vsel %vm1034, %v3269, 0
        %v3301 = vsel %vm1034, %v3270, 0
        %v3304 = vsel %vm1034, %v3271, 0
        %v3307 = vsel %vm1034, %v3272, 0
        %v3310 = vsel %vm1034, %v3273, 0
        %v3313 = vsel %vm1034, %v3274, 0
        %v3316 = vsel %vm1034, %v3275, 0
        %v3319 = vsel %vm1034, %v3276, 0
        %v3322 = vsel %vm1034, %v3277, 0
        %v3325 = vsel %vm1034, %v3278, 0
        %v3328 = vsel %vm1034, %v3279, 0
        %v3331 = vsel %vm1427, %v3281, 0
        %3333 = vmatprep.subr.mxu0 0.0
        %3334 = vmatpush1.msra.mxu0 %v3331
        %3335 = vmatprep.subr.mxu0 0.0
        %3336 = vmatpush1.msra.mxu0 0.0
        %3337 = vmatprep.subr.mxu0 0.0
        %3338 = vmatpush1.msra.mxu0 0.0
        %3339 = vmatprep.subr.mxu0 0.0
        %3340 = vmatpush1.msra.mxu0 0.0
        %3341 = vmatprep.subr.mxu0 0.0
        %3342 = vmatpush1.msra.mxu0 0.0
        %3343 = vmatprep.subr.mxu0 0.0
        %3344 = vmatpush1.msra.mxu0 0.0
        %3345 = vmatprep.subr.mxu0 0.0
        %3346 = vmatpush1.msra.mxu0 0.0
        %3347 = vmatprep.subr.mxu0 0.0
        %3348 = vmatpush1.msra.mxu0 0.0
        %3349 = vmatprep.subr.mxu0 0.0
        %3350 = vmatpush1.msra.mxu0 0.0
        %3351 = vmatprep.subr.mxu0 0.0
        %3352 = vmatpush1.msra.mxu0 0.0
        %3353 = vmatprep.subr.mxu0 0.0
        %3354 = vmatpush1.msra.mxu0 0.0
        %3355 = vmatprep.subr.mxu0 0.0
        %3356 = vmatpush1.msra.mxu0 0.0
        %3357 = vmatprep.subr.mxu0 0.0
        %3358 = vmatpush1.msra.mxu0 0.0
        %3359 = vmatprep.subr.mxu0 0.0
        %3360 = vmatpush1.msra.mxu0 0.0
        %3361 = vmatprep.subr.mxu0 0.0
        %3362 = vmatpush1.msra.mxu0 0.0
        %3363 = vmatprep.subr.mxu0 0.0
        %3364 = vmatpush1.msra.mxu0 0.0
        %3365 = vmatprep.subr.mxu0 0.0
        %3366 = vmatpush1.msra.mxu0 0.0
        %3367 = vmatprep.subr.mxu0 0.0
        %3368 = vmatpush1.msra.mxu0 0.0
        %3369 = vmatprep.subr.mxu0 0.0
        %3370 = vmatpush1.msra.mxu0 0.0
        %3371 = vmatprep.subr.mxu0 0.0
        %3372 = vmatpush1.msra.mxu0 0.0
        %3373 = vmatprep.subr.mxu0 0.0
        %3374 = vmatpush1.msra.mxu0 0.0
        %3375 = vmatprep.subr.mxu0 0.0
        %3376 = vmatpush1.msra.mxu0 0.0
        %3377 = vmatprep.subr.mxu0 0.0
        %3378 = vmatpush1.msra.mxu0 0.0
        %3379 = vmatprep.subr.mxu0 0.0
        %3380 = vmatpush1.msra.mxu0 0.0
        %3381 = vmatprep.subr.mxu0 0.0
        %3382 = vmatpush1.msra.mxu0 0.0
        %3383 = vmatprep.subr.mxu0 0.0
        %3384 = vmatpush1.msra.mxu0 0.0
        %3385 = vmatprep.subr.mxu0 0.0
        %3386 = vmatpush1.msra.mxu0 0.0
        %3387 = vmatprep.subr.mxu0 0.0
        %3388 = vmatpush1.msra.mxu0 0.0
        %3389 = vmatprep.subr.mxu0 0.0
        %3390 = vmatpush1.msra.mxu0 0.0
        %3391 = vmatprep.subr.mxu0 0.0
        %3392 = vmatpush1.msra.mxu0 0.0
        %3393 = vmatprep.subr.mxu0 0.0
        %3394 = vmatpush1.msra.mxu0 0.0
        %3395 = vmatprep.subr.mxu0 0.0
        %3396 = vmatpush1.msra.mxu0 0.0
        %3397 = vmatprep.mubr.f32.mxu0 0.0
        %3398 = vmatmul.mubr.f32.gmra.mrb[0].mxu0 %v3283
        %v3399 = vpop.f32.mrb[0].mxu0
        %v3400 = vadd.f32 0.0, %v3399
        %v3401 = vpop.f32.mrb[0].mxu0
        %3402 = vmatprep.mubr.f32.mxu0 0.0
        %3403 = vmatmul.mubr.f32.gmra.mrb[0].mxu0 %v3286
        %v3404 = vpop.f32.mrb[0].mxu0
        %v3405 = vadd.f32 0.0, %v3404
        %v3406 = vpop.f32.mrb[0].mxu0
        %3407 = vmatprep.mubr.f32.mxu0 0.0
        %3408 = vmatmul.mubr.f32.gmra.mrb[0].mxu0 %v3289
        %v3409 = vpop.f32.mrb[0].mxu0
        %v3410 = vadd.f32 0.0, %v3409
        %v3411 = vpop.f32.mrb[0].mxu0
        %3412 = vmatprep.mubr.f32.mxu0 0.0
        %3413 = vmatmul.mubr.f32.gmra.mrb[0].mxu0 %v3292
        %v3414 = vpop.f32.mrb[0].mxu0
        %v3415 = vadd.f32 0.0, %v3414
        %v3416 = vpop.f32.mrb[0].mxu0
        %3417 = vmatprep.mubr.f32.mxu0 0.0
        %3418 = vmatmul.mubr.f32.gmra.mrb[0].mxu0 %v3295
        %v3419 = vpop.f32.mrb[0].mxu0
        %v3420 = vadd.f32 0.0, %v3419
        %v3421 = vpop.f32.mrb[0].mxu0
        %3422 = vmatprep.mubr.f32.mxu0 0.0
        %3423 = vmatmul.mubr.f32.gmra.mrb[0].mxu0 %v3298
        %v3424 = vpop.f32.mrb[0].mxu0
        %v3425 = vadd.f32 0.0, %v3424
        %v3426 = vpop.f32.mrb[0].mxu0
        %3427 = vmatprep.mubr.f32.mxu0 0.0
        %3428 = vmatmul.mubr.f32.gmra.mrb[0].mxu0 %v3301
        %v3429 = vpop.f32.mrb[0].mxu0
        %v3430 = vadd.f32 0.0, %v3429
        %v3431 = vpop.f32.mrb[0].mxu0
        %3432 = vmatprep.mubr.f32.mxu0 0.0
        %3433 = vmatmul.mubr.f32.gmra.mrb[0].mxu0 %v3304
        %v3434 = vpop.f32.mrb[0].mxu0
        %v3435 = vadd.f32 0.0, %v3434
        %v3436 = vpop.f32.mrb[0].mxu0
        %3437 = vmatprep.mubr.f32.mxu0 0.0
        %3438 = vmatmul.mubr.f32.gmra.mrb[0].mxu0 %v3307
        %v3439 = vpop.f32.mrb[0].mxu0
        %v3440 = vadd.f32 0.0, %v3439
        %v3441 = vpop.f32.mrb[0].mxu0
        %3442 = vmatprep.mubr.f32.mxu0 0.0
        %3443 = vmatmul.mubr.f32.gmra.mrb[0].mxu0 %v3310
        %v3444 = vpop.f32.mrb[0].mxu0
        %v3445 = vadd.f32 0.0, %v3444
        %v3446 = vpop.f32.mrb[0].mxu0
        %3447 = vmatprep.mubr.f32.mxu0 0.0
        %3448 = vmatmul.mubr.f32.gmra.mrb[0].mxu0 %v3313
        %v3449 = vpop.f32.mrb[0].mxu0
        %v3450 = vadd.f32 0.0, %v3449
        %v3451 = vpop.f32.mrb[0].mxu0
        %3452 = vmatprep.mubr.f32.mxu0 0.0
        %3453 = vmatmul.mubr.f32.gmra.mrb[0].mxu0 %v3316
        %v3454 = vpop.f32.mrb[0].mxu0
        %v3455 = vadd.f32 0.0, %v3454
        %v3456 = vpop.f32.mrb[0].mxu0
        %3457 = vmatprep.mubr.f32.mxu0 0.0
        %3458 = vmatmul.mubr.f32.gmra.mrb[0].mxu0 %v3319
        %v3459 = vpop.f32.mrb[0].mxu0
        %v3460 = vadd.f32 0.0, %v3459
        %v3461 = vpop.f32.mrb[0].mxu0
        %3462 = vmatprep.mubr.f32.mxu0 0.0
        %3463 = vmatmul.mubr.f32.gmra.mrb[0].mxu0 %v3322
        %v3464 = vpop.f32.mrb[0].mxu0
        %v3465 = vadd.f32 0.0, %v3464
        %v3466 = vpop.f32.mrb[0].mxu0
        %3467 = vmatprep.mubr.f32.mxu0 0.0
        %3468 = vmatmul.mubr.f32.gmra.mrb[0].mxu0 %v3325
        %v3469 = vpop.f32.mrb[0].mxu0
        %v3470 = vadd.f32 0.0, %v3469
        %v3471 = vpop.f32.mrb[0].mxu0
        %3472 = vmatprep.mubr.f32.mxu0 0.0
        %3473 = vmatmul.mubr.f32.gmra.mrb[0].mxu0 %v3328
        %v3474 = vpop.f32.mrb[0].mxu0
        %v3475 = vadd.f32 0.0, %v3474
        %v3476 = vpop.f32.mrb[0].mxu0
        %3477 = vdwg.mxu0
        %v3478 = vadd.f32 %v3232, %v3400
        %v3479 = vadd.f32 %v3233, %v3405
        %v3480 = vadd.f32 %v3234, %v3410
        %v3481 = vadd.f32 %v3235, %v3415
        %v3482 = vadd.f32 %v3236, %v3420
        %v3483 = vadd.f32 %v3237, %v3425
        %v3484 = vadd.f32 %v3238, %v3430
        %v3485 = vadd.f32 %v3239, %v3435
        %v3486 = vadd.f32 %v3240, %v3440
        %v3487 = vadd.f32 %v3241, %v3445
        %v3488 = vadd.f32 %v3242, %v3450
        %v3489 = vadd.f32 %v3243, %v3455
        %v3490 = vadd.f32 %v3244, %v3460
        %v3491 = vadd.f32 %v3245, %v3465
        %v3492 = vadd.f32 %v3246, %v3470
        %v3493 = vadd.f32 %v3247, %v3475
        %v3494 = vld [vmem:[%s7] sm:$0x1]
        %v3496 = vlaneseq
        %v3497 = vshrl.u32 %v3496, 7
        %v3498 = vsub.s32 0, %v3497
        %v3499 = vrot.slane %v3494, %v3498
        %v3501 = vmul.f32 %v3478, %v3499
        %v3502 = vmul.f32 %v3479, %v3499
        %v3503 = vmul.f32 %v3480, %v3499
        %v3504 = vmul.f32 %v3481, %v3499
        %v3505 = vmul.f32 %v3482, %v3499
        %v3506 = vmul.f32 %v3483, %v3499
        %v3507 = vmul.f32 %v3484, %v3499
        %v3508 = vmul.f32 %v3485, %v3499
        %v3509 = vmul.f32 %v3486, %v3499
        %v3510 = vmul.f32 %v3487, %v3499
        %v3511 = vmul.f32 %v3488, %v3499
        %v3512 = vmul.f32 %v3489, %v3499
        %v3513 = vmul.f32 %v3490, %v3499
        %v3514 = vmul.f32 %v3491, %v3499
        %v3515 = vmul.f32 %v3492, %v3499
        %v3516 = vmul.f32 %v3493, %v3499
        %v3517 = vld [vmem:[%s8] sm:$0x1]
        %v3519 = vlaneseq
        %v3520 = vshrl.u32 %v3519, 7
        %v3521 = vsub.s32 0, %v3520
        %v3522 = vrot.slane %v3517, %v3521
        %v3524 = vadd.f32 %v3501, %v3522
        %v3525 = vadd.f32 %v3502, %v3522
        %v3526 = vadd.f32 %v3503, %v3522
        %v3527 = vadd.f32 %v3504, %v3522
        %v3528 = vadd.f32 %v3505, %v3522
        %v3529 = vadd.f32 %v3506, %v3522
        %v3530 = vadd.f32 %v3507, %v3522
        %v3531 = vadd.f32 %v3508, %v3522
        %v3532 = vadd.f32 %v3509, %v3522
        %v3533 = vadd.f32 %v3510, %v3522
        %v3534 = vadd.f32 %v3511, %v3522
        %v3535 = vadd.f32 %v3512, %v3522
        %v3536 = vadd.f32 %v3513, %v3522
        %v3537 = vadd.f32 %v3514, %v3522
        %v3538 = vadd.f32 %v3515, %v3522
        %v3539 = vadd.f32 %v3516, %v3522
        %v3540 = vmax.f32 %v3524, 0.0
        %v3541 = vmax.f32 %v3525, 0.0
        %v3542 = vmax.f32 %v3526, 0.0
        %v3543 = vmax.f32 %v3527, 0.0
        %v3544 = vmax.f32 %v3528, 0.0
        %v3545 = vmax.f32 %v3529, 0.0
        %v3546 = vmax.f32 %v3530, 0.0
        %v3547 = vmax.f32 %v3531, 0.0
        %v3548 = vmax.f32 %v3532, 0.0
        %v3549 = vmax.f32 %v3533, 0.0
        %v3550 = vmax.f32 %v3534, 0.0
        %v3551 = vmax.f32 %v3535, 0.0
        %v3552 = vmax.f32 %v3536, 0.0
        %v3553 = vmax.f32 %v3537, 0.0
        %v3554 = vmax.f32 %v3538, 0.0
        %v3555 = vmax.f32 %v3539, 0.0
        %v3556 = vld [vmem:[%s9] sm:$0xf]
        %v3558 = vsel %vm1034, %v3540, 0
        %v3561 = vsel %vm1034, %v3541, 0
        %v3564 = vsel %vm1034, %v3542, 0
        %v3567 = vsel %vm1034, %v3543, 0
        %v3570 = vsel %vm1034, %v3544, 0
        %v3573 = vsel %vm1034, %v3545, 0
        %v3576 = vsel %vm1034, %v3546, 0
        %v3579 = vsel %vm1034, %v3547, 0
        %v3582 = vsel %vm1034, %v3548, 0
        %v3585 = vsel %vm1034, %v3549, 0
        %v3588 = vsel %vm1034, %v3550, 0
        %v3591 = vsel %vm1034, %v3551, 0
        %v3594 = vsel %vm1034, %v3552, 0
        %v3597 = vsel %vm1034, %v3553, 0
        %v3600 = vsel %vm1034, %v3554, 0
        %v3603 = vsel %vm1034, %v3555, 0
        %v3606 = vsel %vm1427, %v3556, 0
        %3608 = vmatprep.subr.mxu0 0.0
        %3609 = vmatpush1.msra.mxu0 %v3606
        %3610 = vmatprep.subr.mxu0 0.0
        %3611 = vmatpush1.msra.mxu0 0.0
        %3612 = vmatprep.subr.mxu0 0.0
        %3613 = vmatpush1.msra.mxu0 0.0
        %3614 = vmatprep.subr.mxu0 0.0
        %3615 = vmatpush1.msra.mxu0 0.0
        %3616 = vmatprep.subr.mxu0 0.0
        %3617 = vmatpush1.msra.mxu0 0.0
        %3618 = vmatprep.subr.mxu0 0.0
        %3619 = vmatpush1.msra.mxu0 0.0
        %3620 = vmatprep.subr.mxu0 0.0
        %3621 = vmatpush1.msra.mxu0 0.0
        %3622 = vmatprep.subr.mxu0 0.0
        %3623 = vmatpush1.msra.mxu0 0.0
        %3624 = vmatprep.subr.mxu0 0.0
        %3625 = vmatpush1.msra.mxu0 0.0
        %3626 = vmatprep.subr.mxu0 0.0
        %3627 = vmatpush1.msra.mxu0 0.0
        %3628 = vmatprep.subr.mxu0 0.0
        %3629 = vmatpush1.msra.mxu0 0.0
        %3630 = vmatprep.subr.mxu0 0.0
        %3631 = vmatpush1.msra.mxu0 0.0
        %3632 = vmatprep.subr.mxu0 0.0
        %3633 = vmatpush1.msra.mxu0 0.0
        %3634 = vmatprep.subr.mxu0 0.0
        %3635 = vmatpush1.msra.mxu0 0.0
        %3636 = vmatprep.subr.mxu0 0.0
        %3637 = vmatpush1.msra.mxu0 0.0
        %3638 = vmatprep.subr.mxu0 0.0
        %3639 = vmatpush1.msra.mxu0 0.0
        %3640 = vmatprep.subr.mxu0 0.0
        %3641 = vmatpush1.msra.mxu0 0.0
        %3642 = vmatprep.subr.mxu0 0.0
        %3643 = vmatpush1.msra.mxu0 0.0
        %3644 = vmatprep.subr.mxu0 0.0
        %3645 = vmatpush1.msra.mxu0 0.0
        %3646 = vmatprep.subr.mxu0 0.0
        %3647 = vmatpush1.msra.mxu0 0.0
        %3648 = vmatprep.subr.mxu0 0.0
        %3649 = vmatpush1.msra.mxu0 0.0
        %3650 = vmatprep.subr.mxu0 0.0
        %3651 = vmatpush1.msra.mxu0 0.0
        %3652 = vmatprep.subr.mxu0 0.0
        %3653 = vmatpush1.msra.mxu0 0.0
        %3654 = vmatprep.subr.mxu0 0.0
        %3655 = vmatpush1.msra.mxu0 0.0
        %3656 = vmatprep.subr.mxu0 0.0
        %3657 = vmatpush1.msra.mxu0 0.0
        %3658 = vmatprep.subr.mxu0 0.0
        %3659 = vmatpush1.msra.mxu0 0.0
        %3660 = vmatprep.subr.mxu0 0.0
        %3661 = vmatpush1.msra.mxu0 0.0
        %3662 = vmatprep.subr.mxu0 0.0
        %3663 = vmatpush1.msra.mxu0 0.0
        %3664 = vmatprep.subr.mxu0 0.0
        %3665 = vmatpush1.msra.mxu0 0.0
        %3666 = vmatprep.subr.mxu0 0.0
        %3667 = vmatpush1.msra.mxu0 0.0
        %3668 = vmatprep.subr.mxu0 0.0
        %3669 = vmatpush1.msra.mxu0 0.0
        %3670 = vmatprep.subr.mxu0 0.0
        %3671 = vmatpush1.msra.mxu0 0.0
        %3672 = vmatprep.mubr.f32.mxu0 0.0
        %3673 = vmatmul.mubr.f32.gmra.mrb[0].mxu0 %v3558
        %v3674 = vpop.f32.mrb[0].mxu0
        %v3675 = vadd.f32 0.0, %v3674
        %v3676 = vpop.f32.mrb[0].mxu0
        %3677 = vmatprep.mubr.f32.mxu0 0.0
        %3678 = vmatmul.mubr.f32.gmra.mrb[0].mxu0 %v3561
        %v3679 = vpop.f32.mrb[0].mxu0
        %v3680 = vadd.f32 0.0, %v3679
        %v3681 = vpop.f32.mrb[0].mxu0
        %3682 = vmatprep.mubr.f32.mxu0 0.0
        %3683 = vmatmul.mubr.f32.gmra.mrb[0].mxu0 %v3564
        %v3684 = vpop.f32.mrb[0].mxu0
        %v3685 = vadd.f32 0.0, %v3684
        %v3686 = vpop.f32.mrb[0].mxu0
        %3687 = vmatprep.mubr.f32.mxu0 0.0
        %3688 = vmatmul.mubr.f32.gmra.mrb[0].mxu0 %v3567
        %v3689 = vpop.f32.mrb[0].mxu0
        %v3690 = vadd.f32 0.0, %v3689
        %v3691 = vpop.f32.mrb[0].mxu0
        %3692 = vmatprep.mubr.f32.mxu0 0.0
        %3693 = vmatmul.mubr.f32.gmra.mrb[0].mxu0 %v3570
        %v3694 = vpop.f32.mrb[0].mxu0
        %v3695 = vadd.f32 0.0, %v3694
        %v3696 = vpop.f32.mrb[0].mxu0
        %3697 = vmatprep.mubr.f32.mxu0 0.0
        %3698 = vmatmul.mubr.f32.gmra.mrb[0].mxu0 %v3573
        %v3699 = vpop.f32.mrb[0].mxu0
        %v3700 = vadd.f32 0.0, %v3699
        %v3701 = vpop.f32.mrb[0].mxu0
        %3702 = vmatprep.mubr.f32.mxu0 0.0
        %3703 = vmatmul.mubr.f32.gmra.mrb[0].mxu0 %v3576
        %v3704 = vpop.f32.mrb[0].mxu0
        %v3705 = vadd.f32 0.0, %v3704
        %v3706 = vpop.f32.mrb[0].mxu0
        %3707 = vmatprep.mubr.f32.mxu0 0.0
        %3708 = vmatmul.mubr.f32.gmra.mrb[0].mxu0 %v3579
        %v3709 = vpop.f32.mrb[0].mxu0
        %v3710 = vadd.f32 0.0, %v3709
        %v3711 = vpop.f32.mrb[0].mxu0
        %3712 = vmatprep.mubr.f32.mxu0 0.0
        %3713 = vmatmul.mubr.f32.gmra.mrb[0].mxu0 %v3582
        %v3714 = vpop.f32.mrb[0].mxu0
        %v3715 = vadd.f32 0.0, %v3714
        %v3716 = vpop.f32.mrb[0].mxu0
        %3717 = vmatprep.mubr.f32.mxu0 0.0
        %3718 = vmatmul.mubr.f32.gmra.mrb[0].mxu0 %v3585
        %v3719 = vpop.f32.mrb[0].mxu0
        %v3720 = vadd.f32 0.0, %v3719
        %v3721 = vpop.f32.mrb[0].mxu0
        %3722 = vmatprep.mubr.f32.mxu0 0.0
        %3723 = vmatmul.mubr.f32.gmra.mrb[0].mxu0 %v3588
        %v3724 = vpop.f32.mrb[0].mxu0
        %v3725 = vadd.f32 0.0, %v3724
        %v3726 = vpop.f32.mrb[0].mxu0
        %3727 = vmatprep.mubr.f32.mxu0 0.0
        %3728 = vmatmul.mubr.f32.gmra.mrb[0].mxu0 %v3591
        %v3729 = vpop.f32.mrb[0].mxu0
        %v3730 = vadd.f32 0.0, %v3729
        %v3731 = vpop.f32.mrb[0].mxu0
        %3732 = vmatprep.mubr.f32.mxu0 0.0
        %3733 = vmatmul.mubr.f32.gmra.mrb[0].mxu0 %v3594
        %v3734 = vpop.f32.mrb[0].mxu0
        %v3735 = vadd.f32 0.0, %v3734
        %v3736 = vpop.f32.mrb[0].mxu0
        %3737 = vmatprep.mubr.f32.mxu0 0.0
        %3738 = vmatmul.mubr.f32.gmra.mrb[0].mxu0 %v3597
        %v3739 = vpop.f32.mrb[0].mxu0
        %v3740 = vadd.f32 0.0, %v3739
        %v3741 = vpop.f32.mrb[0].mxu0
        %3742 = vmatprep.mubr.f32.mxu0 0.0
        %3743 = vmatmul.mubr.f32.gmra.mrb[0].mxu0 %v3600
        %v3744 = vpop.f32.mrb[0].mxu0
        %v3745 = vadd.f32 0.0, %v3744
        %v3746 = vpop.f32.mrb[0].mxu0
        %3747 = vmatprep.mubr.f32.mxu0 0.0
        %3748 = vmatmul.mubr.f32.gmra.mrb[0].mxu0 %v3603
        %v3749 = vpop.f32.mrb[0].mxu0
        %v3750 = vadd.f32 0.0, %v3749
        %v3751 = vpop.f32.mrb[0].mxu0
        %3752 = vdwg.mxu0
        %v3753 = vld [vmem:[%s10] sm:$0x1]
        %v3755 = vlaneseq
        %v3756 = vshrl.u32 %v3755, 7
        %v3757 = vsub.s32 0, %v3756
        %v3758 = vrot.slane %v3753, %v3757
        %v3760 = vmul.f32 %v3675, %v3758
        %v3761 = vmul.f32 %v3680, %v3758
        %v3762 = vmul.f32 %v3685, %v3758
        %v3763 = vmul.f32 %v3690, %v3758
        %v3764 = vmul.f32 %v3695, %v3758
        %v3765 = vmul.f32 %v3700, %v3758
        %v3766 = vmul.f32 %v3705, %v3758
        %v3767 = vmul.f32 %v3710, %v3758
        %v3768 = vmul.f32 %v3715, %v3758
        %v3769 = vmul.f32 %v3720, %v3758
        %v3770 = vmul.f32 %v3725, %v3758
        %v3771 = vmul.f32 %v3730, %v3758
        %v3772 = vmul.f32 %v3735, %v3758
        %v3773 = vmul.f32 %v3740, %v3758
        %v3774 = vmul.f32 %v3745, %v3758
        %v3775 = vmul.f32 %v3750, %v3758
        %v3776 = vld [vmem:[%s11] sm:$0x1]
        %v3778 = vlaneseq
        %v3779 = vshrl.u32 %v3778, 7
        %v3780 = vsub.s32 0, %v3779
        %v3781 = vrot.slane %v3776, %v3780
        %v3783 = vadd.f32 %v3760, %v3781
        %v3784 = vadd.f32 %v3761, %v3781
        %v3785 = vadd.f32 %v3762, %v3781
        %v3786 = vadd.f32 %v3763, %v3781
        %v3787 = vadd.f32 %v3764, %v3781
        %v3788 = vadd.f32 %v3765, %v3781
        %v3789 = vadd.f32 %v3766, %v3781
        %v3790 = vadd.f32 %v3767, %v3781
        %v3791 = vadd.f32 %v3768, %v3781
        %v3792 = vadd.f32 %v3769, %v3781
        %v3793 = vadd.f32 %v3770, %v3781
        %v3794 = vadd.f32 %v3771, %v3781
        %v3795 = vadd.f32 %v3772, %v3781
        %v3796 = vadd.f32 %v3773, %v3781
        %v3797 = vadd.f32 %v3774, %v3781
        %v3798 = vadd.f32 %v3775, %v3781
        %v3799 = vadd.f32 %v3783, %v570
        %v3800 = vadd.f32 %v3784, %v571
        %v3801 = vadd.f32 %v3785, %v572
        %v3802 = vadd.f32 %v3786, %v573
        %v3803 = vadd.f32 %v3787, %v574
        %v3804 = vadd.f32 %v3788, %v575
        %v3805 = vadd.f32 %v3789, %v576
        %v3806 = vadd.f32 %v3790, %v577
        %v3807 = vadd.f32 %v3791, %v578
        %v3808 = vadd.f32 %v3792, %v579
        %v3809 = vadd.f32 %v3793, %v580
        %v3810 = vadd.f32 %v3794, %v581
        %v3811 = vadd.f32 %v3795, %v582
        %v3812 = vadd.f32 %v3796, %v583
        %v3813 = vadd.f32 %v3797, %v584
        %v3814 = vadd.f32 %v3798, %v585
        %v3815 = vmax.f32 %v3799, 0.0
        %v3816 = vmax.f32 %v3800, 0.0
        %v3817 = vmax.f32 %v3801, 0.0
        %v3818 = vmax.f32 %v3802, 0.0
        %v3819 = vmax.f32 %v3803, 0.0
        %v3820 = vmax.f32 %v3804, 0.0
        %v3821 = vmax.f32 %v3805, 0.0
        %v3822 = vmax.f32 %v3806, 0.0
        %v3823 = vmax.f32 %v3807, 0.0
        %v3824 = vmax.f32 %v3808, 0.0
        %v3825 = vmax.f32 %v3809, 0.0
        %v3826 = vmax.f32 %v3810, 0.0
        %v3827 = vmax.f32 %v3811, 0.0
        %v3828 = vmax.f32 %v3812, 0.0
        %v3829 = vmax.f32 %v3813, 0.0
        %v3830 = vmax.f32 %v3814, 0.0
        %3831 = vst.msk [vmem:[%s559] sm:$0xff] %vm588, %v3815
        %3832 = vst.msk [vmem:[%s559 + $0x8] sm:$0xff] %vm588, %v3816
        %3833 = vst.msk [vmem:[%s559 + $0x10] sm:$0xff] %vm588, %v3817
        %3834 = vst.msk [vmem:[%s559 + $0x18] sm:$0xff] %vm588, %v3818
        %3835 = vst.msk [vmem:[%s559 + $0x20] sm:$0xff] %vm588, %v3819
        %3836 = vst.msk [vmem:[%s559 + $0x28] sm:$0xff] %vm588, %v3820
        %3837 = vst.msk [vmem:[%s559 + $0x30] sm:$0xff] %vm588, %v3821
        %3838 = vst.msk [vmem:[%s559 + $0x38] sm:$0xff] %vm588, %v3822
        %3839 = vst.msk [vmem:[%s559 + $0x40] sm:$0xff] %vm588, %v3823
        %3840 = vst.msk [vmem:[%s559 + $0x48] sm:$0xff] %vm588, %v3824
        %3841 = vst.msk [vmem:[%s559 + $0x50] sm:$0xff] %vm588, %v3825
        %3842 = vst.msk [vmem:[%s559 + $0x58] sm:$0xff] %vm588, %v3826
        %3843 = vst.msk [vmem:[%s559 + $0x60] sm:$0xff] %vm588, %v3827
        %3844 = vst.msk [vmem:[%s559 + $0x68] sm:$0xff] %vm588, %v3828
        %3845 = vst.msk [vmem:[%s559 + $0x70] sm:$0xff] %vm588, %v3829
        %3846 = vst.msk [vmem:[%s559 + $0x78] sm:$0xff] %vm588, %v3830
        %s3847 = sand.u32 %s343, 1
        %s3848 = scalar_lea.sflag [#allocation5], %s3847
        %s3849 = sand.u32 %s343, 1
        %s3850 = smul.addr %s3849, 128
        %s3851 = scalar_lea.vmem [#allocation9], %s3850
        // Predicated region
        $region81: #{tpu_custom_call.1} parent=67 // pred_check
          %p3852 = pneg %p353
        $region82: #{tpu_custom_call.1} parent=67 // pred_check_branch
          %3854 = sbr.rel (%p3852) target = $region84
        $region83: #{tpu_custom_call.1} parent=67 // pred_region
          %s3855 = smul.u32 8, %s37
          %s3857 = ssub.s32 2048, 2048
          %3858 = vsyncadd %s3848, %s3857
          %s3859 = smul.addr %s3855, 2
          %s3860 = smul.addr %s36, 32
          %s3861 = sadd.s32 %s3859, %s3860
          %s3862 = smul.addr %s3861, 128
          %s3863 = scalar_lea.hbm %s12, %s3862
          %s3864 = sshll.u32 %s3851, 4
          %s3865 = int_to_ptr.vmem [resolvable:$true] %s3864
          %3870 = dma.vmem_to_hbm [thread:$0]  %s3865, 2048, %s3863, %s3848, 128, 128, 8
        $region84: #{tpu_custom_call.1} parent=67 // pred_fallthru
          _
      $region68: #{tpu_custom_call.1} parent=5 // pred_fallthru
        _
      %p3871 = scmp.le.s32.totalorder 2, %s27
      // Predicated region
      $region85: #{tpu_custom_call.1} parent=5 // pred_check
        %p3872 = pneg %p3871
      $region86: #{tpu_custom_call.1} parent=5 // pred_check_branch
        %3874 = sbr.rel (%p3872) target = $region88
      $region87: #{tpu_custom_call.1} parent=5 // pred_region
        %s3875 = ssub.s32 %s27, 2
        // Predicated region
        $region89: #{tpu_custom_call.1} parent=87 // pred_check
          %p3876 = pneg %p359
        $region90: #{tpu_custom_call.1} parent=87 // pred_check_branch
          %3878 = sbr.rel (%p3876) target = $region92
        $region91: #{tpu_custom_call.1} parent=87 // pred_region
          %s3879 = sand.u32 %s344, 1
          %s3880 = scalar_lea.sflag [#allocation5], %s3879
          %s3881 = sand.u32 %s344, 1
          %s3882 = smul.addr %s3881, 128
          %s3883 = scalar_lea.vmem [#allocation9], %s3882
          %3884 = dma.done %s3880, 2048
        $region92: #{tpu_custom_call.1} parent=87 // pred_fallthru
          _
      $region88: #{tpu_custom_call.1} parent=5 // pred_fallthru
        _
    $region6: #{tpu_custom_call.1} parent=1 // loop_footer
      %s31 = sadd.s32 1, %s27
    $region7: #{tpu_custom_call.1} parent=1 // loop_footer_branch
      %26 = sbr.rel target = $region3
    $region8: #{tpu_custom_call.1} parent=1 // loop_exit
      _
    %3885 = vsyncpa [#allocation4], 1
    %s3886 = scalar_lea.sflag [#allocation4], 1
    %3887 = vsyncpa %s3886, 1
    %3888 = vsyncpa [#allocation7], 1
    %s3889 = scalar_lea.sflag [#allocation7], 1
    %3890 = vsyncpa %s3889, 1
    %3891 = vsyncpa [#allocation5], 1
    %s3892 = scalar_lea.sflag [#allocation5], 1
    %3893 = vsyncpa %s3892, 1

</llo_original>
